<compile_context>
chip_gen: v7x
topology: tpu7x:2x2x1
jax: 0.10.0
libtpu: 0.0.40
codegen_flags: <defaults>
</compile_context>

<pallas_src>
import functools

import jax
import jax.numpy as jnp
from jax.experimental import pallas as pl
from jax.experimental.pallas import tpu as pltpu

BN_EPS = 1e-5
LANE = 128


def _round_up(x, m):
    return (x + m - 1) // m * m


def _full_spec(shape):
    nd = len(shape)
    return pl.BlockSpec(shape, lambda i, _nd=nd: (0,) * _nd)


# ---------------------------------------------------------------------------
# Fused Pallas kernel
# ---------------------------------------------------------------------------

def _bn_rows(y, m, relu6):
    """Training-mode BatchNorm over the row axis of a (M, C) tile.

    Single-pass batch statistics via sum / sum-of-squares (one walk of y for
    stats, one for normalisation). gamma=1, beta=0, eps=1e-5.
    """
    inv_m = 1.0 / m
    mean = jnp.sum(y, axis=0, keepdims=True) * inv_m
    ex2 = jnp.sum(y * y, axis=0, keepdims=True) * inv_m
    var = jnp.maximum(ex2 - mean * mean, 0.0)
    out = (y - mean) * jax.lax.rsqrt(var + BN_EPS)
    if relu6:
        out = jnp.clip(out, 0.0, 6.0)
    return out


def _fused_ir_kernel(*refs, n, h, w, hp_dim, col0, has_expand, use_res):
    # refs: x, [wexp], wdw, wproj, out, hpad_scratch
    if has_expand:
        x_ref, wexp_ref, wdw_ref, wproj_ref, out_ref, hpad_ref = refs
    else:
        x_ref, wdw_ref, wproj_ref, out_ref, hpad_ref = refs

    m = n * h * w
    x = x_ref[...]                                         # (M, Cp) f32

    # ---- stage 1: 1x1 expansion conv (MXU, bf16 in / f32 acc) + BN + ReLU6 ----
    if has_expand:
        y1 = jnp.dot(x.astype(jnp.bfloat16), wexp_ref[...],
                     preferred_element_type=jnp.float32)   # (M, Hp)
        h1 = _bn_rows(y1, m, relu6=True)
    else:
        h1 = x                                             # Cp == Hp in this case

    # ---- stage 2: depthwise 3x3 conv (stride 1, pad 1) + BN + ReLU6 ----------
    # Halo handled entirely in VMEM: zero the scratch and store the interior at
    # a sublane-aligned column offset (col0 % 8 == 0) -> aligned vector store.
    hpad_ref[...] = jnp.zeros_like(hpad_ref)
    # reshape is tile-aligned (w % 8 == 0, hp_dim % 128 == 0) -> no VMEM copy
    hpad_ref[:, 1:h + 1, col0:col0 + w, :] = h1.reshape(n, h, w, hp_dim)

    acc = jnp.zeros((n, h, w, hp_dim), jnp.float32)
    for kh in range(3):
        # offset on a non-tiled axis -> pure addressing, aligned load
        rows = hpad_ref[:, kh:kh + h, :, :]                # (n, h, w_halo, Hp)
        for kw in range(3):
            tap = rows[:, :, col0 - 1 + kw:col0 - 1 + kw + w, :]
            acc = acc + tap * wdw_ref[kh * 3 + kw, :]      # f32 VPU path
    h2 = _bn_rows(acc.reshape(m, hp_dim), m, relu6=True)   # aligned reshape

    # ---- stage 3: 1x1 projection conv + BN (+ residual) ----------------------
    y3 = jnp.dot(h2.astype(jnp.bfloat16), wproj_ref[...],
                 preferred_element_type=jnp.float32)       # (M, Op)
    o = _bn_rows(y3, m, relu6=False)
    if use_res:
        o = o + x                                          # residual in f32
    out_ref[...] = o                                       # lane-dense store


# ---------------------------------------------------------------------------
# Bayesian reparameterization + KL (small tensors: plain-JAX glue)
# ---------------------------------------------------------------------------

def _sample_and_kl(mu, rho, key, prior_mu=0.0, prior_sigma=1.0):
    sigma = jnp.log1p(jnp.exp(rho))                        # softplus
    eps = jax.random.normal(key, mu.shape, mu.dtype)
    weight = mu + sigma * eps
    kl = jnp.sum(jnp.log(prior_sigma) - jnp.log(sigma)
                 + (sigma ** 2 + (mu - prior_mu) ** 2) / (2.0 * prior_sigma ** 2)
                 - 0.5)
    return weight, kl


def init_params(key, inp, oup, expand_ratio,
                posterior_mu_init=0.0, posterior_rho_init=-3.0):
    hidden = int(round(inp * expand_ratio))
    ks = jax.random.split(key, 6)
    params = {}
    if expand_ratio != 1:
        params["exp_mu"] = posterior_mu_init + 0.1 * jax.random.normal(
            ks[0], (hidden, inp, 1, 1), jnp.float32)
        params["exp_rho"] = posterior_rho_init + 0.1 * jax.random.normal(
            ks[1], (hidden, inp, 1, 1), jnp.float32)
    else:
        hidden = inp
    params["dw_mu"] = posterior_mu_init + 0.1 * jax.random.normal(
        ks[2], (hidden, 1, 3, 3), jnp.float32)
    params["dw_rho"] = posterior_rho_init + 0.1 * jax.random.normal(
        ks[3], (hidden, 1, 3, 3), jnp.float32)
    params["proj_mu"] = posterior_mu_init + 0.1 * jax.random.normal(
        ks[4], (oup, hidden, 1, 1), jnp.float32)
    params["proj_rho"] = posterior_rho_init + 0.1 * jax.random.normal(
        ks[5], (oup, hidden, 1, 1), jnp.float32)
    return params


# ---------------------------------------------------------------------------
# Forward (matches InvertedResidual_uni.forward; returns (out, kl_sum))
# ---------------------------------------------------------------------------

def inverted_residual_uni(x_nchw, params, eps_key, *, inp, oup, stride,
                          expand_ratio, prior_mean=0.0, prior_variance=1.0):
    assert stride in (1, 2)
    # TODO(synk): stride=2 depthwise downsampling path not implemented.
    assert stride == 1, "only stride=1 implemented in the fused Pallas kernel"
    use_res = (stride == 1 and inp == oup)
    has_expand = (expand_ratio != 1)
    hidden = int(round(inp * expand_ratio)) if has_expand else inp

    n, c, h, w = x_nchw.shape
    assert c == inp
    m = n * h * w

    # lane-dense channel padding (multiples of the 128-lane width)
    cp = _round_up(inp, LANE)
    hp_dim = _round_up(hidden, LANE)
    op = _round_up(oup, LANE)
    if use_res:
        assert cp == op

    x_nhwc = jnp.transpose(x_nchw, (0, 2, 3, 1)).astype(jnp.float32)
    x2d = jnp.pad(x_nhwc.reshape(m, inp), ((0, 0), (0, cp - inp)))

    k_exp, k_dw, k_proj = jax.random.split(eps_key, 3)
    kl_sum = jnp.float32(0.0)

    inputs = [x2d]
    in_specs = [_full_spec((m, cp))]

    if has_expand:
        w_exp, kl = _sample_and_kl(params["exp_mu"], params["exp_rho"], k_exp,
                                   prior_mean, prior_variance)
        kl_sum = kl_sum + kl
        wexp2d = jnp.pad(w_exp[:, :, 0, 0].T,                       # (inp, hidden)
                         ((0, cp - inp), (0, hp_dim - hidden))).astype(jnp.bfloat16)
        inputs.append(wexp2d)
        in_specs.append(_full_spec((cp, hp_dim)))

    w_dw, kl = _sample_and_kl(params["dw_mu"], params["dw_rho"], k_dw,
                              prior_mean, prior_variance)
    kl_sum = kl_sum + kl
    # (hidden, 1, 3, 3) -> (3, 3, hidden) -> (9, hidden) ; keep f32 (VPU path)
    wdw9 = jnp.transpose(w_dw[:, 0, :, :], (1, 2, 0)).reshape(9, hidden)
    wdw9 = jnp.pad(wdw9, ((0, 0), (0, hp_dim - hidden)))
    inputs.append(wdw9)
    in_specs.append(_full_spec((9, hp_dim)))

    w_pr, kl = _sample_and_kl(params["proj_mu"], params["proj_rho"], k_proj,
                              prior_mean, prior_variance)
    kl_sum = kl_sum + kl
    wpr2d = jnp.pad(w_pr[:, :, 0, 0].T,                             # (hidden, oup)
                    ((0, hp_dim - hidden), (0, op - oup))).astype(jnp.bfloat16)
    inputs.append(wpr2d)
    in_specs.append(_full_spec((hp_dim, op)))

    # VMEM halo scratch: interior starts at sublane-aligned column col0 so the
    # interior store is a fully aligned vector store.
    col0 = 8
    w_halo = col0 + _round_up(w + 1, 8)

    kernel = functools.partial(
        _fused_ir_kernel, n=n, h=h, w=w, hp_dim=hp_dim, col0=col0,
        has_expand=has_expand, use_res=use_res)

    flops = 18 * m * hp_dim + 2 * m * hp_dim * op
    bytes_accessed = 4 * m * cp + 4 * 9 * hp_dim + 2 * hp_dim * op + 4 * m * op
    if has_expand:
        flops += 2 * m * cp * hp_dim
        bytes_accessed += 2 * cp * hp_dim

    out2d = pl.pallas_call(
        kernel,
        out_shape=jax.ShapeDtypeStruct((m, op), jnp.float32),
        grid=(1,),
        in_specs=in_specs,
        out_specs=_full_spec((m, op)),
        scratch_shapes=[pltpu.VMEM((n, h + 2, w_halo, hp_dim), jnp.float32)],
        compiler_params=pltpu.CompilerParams(
            dimension_semantics=("arbitrary",),
            vmem_limit_bytes=32 * 1024 * 1024),
        cost_estimate=pl.CostEstimate(flops=flops,
                                      transcendentals=3 * hp_dim,
                                      bytes_accessed=bytes_accessed),
    )(*inputs)

    out = jnp.transpose(out2d.reshape(n, h, w, op)[:, :, :, :oup], (0, 3, 1, 2))
    return out, kl_sum


# ---------------------------------------------------------------------------

if __name__ == "__main__":
    key = jax.random.PRNGKey(0)
    pk, xk, ek = jax.random.split(key, 3)

    N, C, H, W = 2, 8, 16, 16
    inp, oup, stride, expand_ratio = 8, 8, 1, 4

    x = jax.random.normal(xk, (N, C, H, W), jnp.float32)
    params = init_params(pk, inp, oup, expand_ratio)

    fwd = jax.jit(functools.partial(inverted_residual_uni, inp=inp, oup=oup,
                                    stride=stride, expand_ratio=expand_ratio))
    out, kl = fwd(x, params, ek)
    jax.block_until_ready((out, kl))

    assert out.shape == (N, oup, H, W)
    assert bool(jnp.all(jnp.isfinite(out))) and bool(jnp.isfinite(kl))
    print("KERNEL_OK")
</pallas_src>

<mosaic_0001>
module attributes {stable_mosaic.version = 11 : i64} {
  func.func @_fused_ir_kernel(%arg0: i32, %arg1: memref<512x128xf32, #tpu.memory_space<vmem>>, %arg2: memref<128x128xbf16, #tpu.memory_space<vmem>>, %arg3: memref<9x128xf32, #tpu.memory_space<vmem>>, %arg4: memref<128x128xbf16, #tpu.memory_space<vmem>>, %arg5: memref<512x128xf32, #tpu.memory_space<vmem>>, %arg6: memref<2x18x32x128xf32, #tpu.memory_space<vmem>>) attributes {dimension_semantics = [#tpu.dimension_semantics<arbitrary>], iteration_bounds = array<i64: 1>, scalar_prefetch = 0 : i64, scratch_operands = 1 : i64, tpu.core_type = #tpu.core_type<tc>, window_params = [{pipeline_mode = #tpu.pipeline_mode<synchronous>, transform_indices = @transform_0, window_bounds = array<i64: 512, 128>}, {pipeline_mode = #tpu.pipeline_mode<synchronous>, transform_indices = @transform_1, window_bounds = array<i64: 128, 128>}, {pipeline_mode = #tpu.pipeline_mode<synchronous>, transform_indices = @transform_2, window_bounds = array<i64: 9, 128>}, {pipeline_mode = #tpu.pipeline_mode<synchronous>, transform_indices = @transform_3, window_bounds = array<i64: 128, 128>}, {pipeline_mode = #tpu.pipeline_mode<synchronous>, transform_indices = @transform_4, window_bounds = array<i64: 512, 128>}]} {
    %c0 = arith.constant 0 : index
    %c0_0 = arith.constant 0 : index
    %0 = vector.load %arg1[%c0, %c0_0] : memref<512x128xf32, #tpu.memory_space<vmem>>, vector<512x128xf32>
    %1 = arith.truncf %0 : vector<512x128xf32> to vector<512x128xbf16>
    %c0_1 = arith.constant 0 : index
    %c0_2 = arith.constant 0 : index
    %2 = vector.load %arg2[%c0_1, %c0_2] : memref<128x128xbf16, #tpu.memory_space<vmem>>, vector<128x128xbf16>
    %cst = arith.constant dense<0.000000e+00> : vector<512x128xf32>
    %3 = tpu.matmul %1, %2, %cst {dimension_numbers = #tpu.dot_dimension_numbers<[1], [0], [0], [1], [0, 0, 1, 1], [], []>} : vector<512x128xbf16>, vector<128x128xbf16>, vector<512x128xf32> -> vector<512x128xf32>
    %cst_3 = arith.constant dense<0.000000e+00> : vector<128xf32>
    %4 = vector.multi_reduction <add>, %3, %cst_3 [0] : vector<512x128xf32> to vector<128xf32>
    %5 = vector.shape_cast %4 : vector<128xf32> to vector<1x128xf32>
    %cst_4 = arith.constant 0.001953125 : f32
    %6 = vector.broadcast %cst_4 : f32 to vector<1x128xf32>
    %7 = arith.mulf %5, %6 : vector<1x128xf32>
    %8 = arith.mulf %3, %3 : vector<512x128xf32>
    %cst_5 = arith.constant dense<0.000000e+00> : vector<128xf32>
    %9 = vector.multi_reduction <add>, %8, %cst_5 [0] : vector<512x128xf32> to vector<128xf32>
    %10 = vector.shape_cast %9 : vector<128xf32> to vector<1x128xf32>
    %cst_6 = arith.constant 0.001953125 : f32
    %11 = vector.broadcast %cst_6 : f32 to vector<1x128xf32>
    %12 = arith.mulf %10, %11 : vector<1x128xf32>
    %13 = arith.mulf %7, %7 : vector<1x128xf32>
    %14 = arith.subf %12, %13 : vector<1x128xf32>
    %cst_7 = arith.constant 0.000000e+00 : f32
    %15 = vector.broadcast %cst_7 : f32 to vector<1x128xf32>
    %16 = arith.maximumf %14, %15 : vector<1x128xf32>
    %17 = vector.broadcast %7 : vector<1x128xf32> to vector<512x128xf32>
    %18 = arith.subf %3, %17 : vector<512x128xf32>
    %cst_8 = arith.constant 9.99999974E-6 : f32
    %19 = vector.broadcast %cst_8 : f32 to vector<1x128xf32>
    %20 = arith.addf %16, %19 : vector<1x128xf32>
    %21 = math.rsqrt %20 : vector<1x128xf32>
    %22 = vector.broadcast %21 : vector<1x128xf32> to vector<512x128xf32>
    %23 = arith.mulf %18, %22 : vector<512x128xf32>
    %cst_9 = arith.constant 0.000000e+00 : f32
    %cst_10 = arith.constant 6.000000e+00 : f32
    %24 = vector.broadcast %cst_9 : f32 to vector<512x128xf32>
    %25 = arith.maximumf %24, %23 : vector<512x128xf32>
    %26 = vector.broadcast %cst_10 : f32 to vector<512x128xf32>
    %27 = arith.minimumf %26, %25 : vector<512x128xf32>
    %cst_11 = arith.constant 0.000000e+00 : f32
    %28 = vector.broadcast %cst_11 : f32 to vector<2x18x32x128xf32>
    %c0_12 = arith.constant 0 : index
    %c0_13 = arith.constant 0 : index
    %c0_14 = arith.constant 0 : index
    %c0_15 = arith.constant 0 : index
    %29 = vector.load %arg6[%c0_12, %c0_13, %c0_14, %c0_15] : memref<2x18x32x128xf32, #tpu.memory_space<vmem>>, vector<2x18x32x128xf32>
    tpu.vector_store %arg6[%c0_12, %c0_13, %c0_14, %c0_15], %28 {strides = array<i32>} : memref<2x18x32x128xf32, #tpu.memory_space<vmem>>, vector<2x18x32x128xf32>,
    %30 = vector.shape_cast %27 : vector<512x128xf32> to vector<2x16x16x128xf32>
    %c0_16 = arith.constant 0 : index
    %c1 = arith.constant 1 : index
    %c8 = arith.constant 8 : index
    %c0_17 = arith.constant 0 : index
    %31 = vector.load %arg6[%c0_16, %c1, %c8, %c0_17] : memref<2x18x32x128xf32, #tpu.memory_space<vmem>>, vector<2x16x16x128xf32>
    tpu.vector_store %arg6[%c0_16, %c1, %c8, %c0_17], %30 {strides = array<i32>} : memref<2x18x32x128xf32, #tpu.memory_space<vmem>>, vector<2x16x16x128xf32>,
    %cst_18 = arith.constant 0.000000e+00 : f32
    %32 = vector.broadcast %cst_18 : f32 to vector<2x16x16x128xf32>
    %c0_19 = arith.constant 0 : index
    %c0_20 = arith.constant 0 : index
    %c0_21 = arith.constant 0 : index
    %c0_22 = arith.constant 0 : index
    %33 = vector.load %arg6[%c0_19, %c0_20, %c0_21, %c0_22] : memref<2x18x32x128xf32, #tpu.memory_space<vmem>>, vector<2x16x32x128xf32>
    %34 = vector.extract_strided_slice %33 {offsets = [0, 0, 7, 0], sizes = [2, 16, 16, 128], strides = [1, 1, 1, 1]} : vector<2x16x32x128xf32> to vector<2x16x16x128xf32>
    %c0_23 = arith.constant 0 : index
    %c0_24 = arith.constant 0 : index
    %35 = vector.load %arg3[%c0_23, %c0_24] : memref<9x128xf32, #tpu.memory_space<vmem>>, vector<1x128xf32>
    %36 = vector.shape_cast %35 : vector<1x128xf32> to vector<128xf32>
    %37 = vector.shape_cast %36 : vector<128xf32> to vector<1x1x1x128xf32>
    %38 = vector.broadcast %37 : vector<1x1x1x128xf32> to vector<2x16x16x128xf32>
    %39 = arith.mulf %34, %38 : vector<2x16x16x128xf32>
    %40 = arith.addf %32, %39 : vector<2x16x16x128xf32>
    %41 = vector.extract_strided_slice %33 {offsets = [0, 0, 8, 0], sizes = [2, 16, 16, 128], strides = [1, 1, 1, 1]} : vector<2x16x32x128xf32> to vector<2x16x16x128xf32>
    %c1_25 = arith.constant 1 : index
    %c0_26 = arith.constant 0 : index
    %42 = vector.load %arg3[%c1_25, %c0_26] : memref<9x128xf32, #tpu.memory_space<vmem>>, vector<1x128xf32>
    %43 = vector.shape_cast %42 : vector<1x128xf32> to vector<128xf32>
    %44 = vector.shape_cast %43 : vector<128xf32> to vector<1x1x1x128xf32>
    %45 = vector.broadcast %44 : vector<1x1x1x128xf32> to vector<2x16x16x128xf32>
    %46 = arith.mulf %41, %45 : vector<2x16x16x128xf32>
    %47 = arith.addf %40, %46 : vector<2x16x16x128xf32>
    %48 = vector.extract_strided_slice %33 {offsets = [0, 0, 9, 0], sizes = [2, 16, 16, 128], strides = [1, 1, 1, 1]} : vector<2x16x32x128xf32> to vector<2x16x16x128xf32>
    %c2 = arith.constant 2 : index
    %c0_27 = arith.constant 0 : index
    %49 = vector.load %arg3[%c2, %c0_27] : memref<9x128xf32, #tpu.memory_space<vmem>>, vector<1x128xf32>
    %50 = vector.shape_cast %49 : vector<1x128xf32> to vector<128xf32>
    %51 = vector.shape_cast %50 : vector<128xf32> to vector<1x1x1x128xf32>
    %52 = vector.broadcast %51 : vector<1x1x1x128xf32> to vector<2x16x16x128xf32>
    %53 = arith.mulf %48, %52 : vector<2x16x16x128xf32>
    %54 = arith.addf %47, %53 : vector<2x16x16x128xf32>
    %c0_28 = arith.constant 0 : index
    %c1_29 = arith.constant 1 : index
    %c0_30 = arith.constant 0 : index
    %c0_31 = arith.constant 0 : index
    %55 = vector.load %arg6[%c0_28, %c1_29, %c0_30, %c0_31] : memref<2x18x32x128xf32, #tpu.memory_space<vmem>>, vector<2x16x32x128xf32>
    %56 = vector.extract_strided_slice %55 {offsets = [0, 0, 7, 0], sizes = [2, 16, 16, 128], strides = [1, 1, 1, 1]} : vector<2x16x32x128xf32> to vector<2x16x16x128xf32>
    %c3 = arith.constant 3 : index
    %c0_32 = arith.constant 0 : index
    %57 = vector.load %arg3[%c3, %c0_32] : memref<9x128xf32, #tpu.memory_space<vmem>>, vector<1x128xf32>
    %58 = vector.shape_cast %57 : vector<1x128xf32> to vector<128xf32>
    %59 = vector.shape_cast %58 : vector<128xf32> to vector<1x1x1x128xf32>
    %60 = vector.broadcast %59 : vector<1x1x1x128xf32> to vector<2x16x16x128xf32>
    %61 = arith.mulf %56, %60 : vector<2x16x16x128xf32>
    %62 = arith.addf %54, %61 : vector<2x16x16x128xf32>
    %63 = vector.extract_strided_slice %55 {offsets = [0, 0, 8, 0], sizes = [2, 16, 16, 128], strides = [1, 1, 1, 1]} : vector<2x16x32x128xf32> to vector<2x16x16x128xf32>
    %c4 = arith.constant 4 : index
    %c0_33 = arith.constant 0 : index
    %64 = vector.load %arg3[%c4, %c0_33] : memref<9x128xf32, #tpu.memory_space<vmem>>, vector<1x128xf32>
    %65 = vector.shape_cast %64 : vector<1x128xf32> to vector<128xf32>
    %66 = vector.shape_cast %65 : vector<128xf32> to vector<1x1x1x128xf32>
    %67 = vector.broadcast %66 : vector<1x1x1x128xf32> to vector<2x16x16x128xf32>
    %68 = arith.mulf %63, %67 : vector<2x16x16x128xf32>
    %69 = arith.addf %62, %68 : vector<2x16x16x128xf32>
    %70 = vector.extract_strided_slice %55 {offsets = [0, 0, 9, 0], sizes = [2, 16, 16, 128], strides = [1, 1, 1, 1]} : vector<2x16x32x128xf32> to vector<2x16x16x128xf32>
    %c5 = arith.constant 5 : index
    %c0_34 = arith.constant 0 : index
    %71 = vector.load %arg3[%c5, %c0_34] : memref<9x128xf32, #tpu.memory_space<vmem>>, vector<1x128xf32>
    %72 = vector.shape_cast %71 : vector<1x128xf32> to vector<128xf32>
    %73 = vector.shape_cast %72 : vector<128xf32> to vector<1x1x1x128xf32>
    %74 = vector.broadcast %73 : vector<1x1x1x128xf32> to vector<2x16x16x128xf32>
    %75 = arith.mulf %70, %74 : vector<2x16x16x128xf32>
    %76 = arith.addf %69, %75 : vector<2x16x16x128xf32>
    %c0_35 = arith.constant 0 : index
    %c2_36 = arith.constant 2 : index
    %c0_37 = arith.constant 0 : index
    %c0_38 = arith.constant 0 : index
    %77 = vector.load %arg6[%c0_35, %c2_36, %c0_37, %c0_38] : memref<2x18x32x128xf32, #tpu.memory_space<vmem>>, vector<2x16x32x128xf32>
    %78 = vector.extract_strided_slice %77 {offsets = [0, 0, 7, 0], sizes = [2, 16, 16, 128], strides = [1, 1, 1, 1]} : vector<2x16x32x128xf32> to vector<2x16x16x128xf32>
    %c6 = arith.constant 6 : index
    %c0_39 = arith.constant 0 : index
    %79 = vector.load %arg3[%c6, %c0_39] : memref<9x128xf32, #tpu.memory_space<vmem>>, vector<1x128xf32>
    %80 = vector.shape_cast %79 : vector<1x128xf32> to vector<128xf32>
    %81 = vector.shape_cast %80 : vector<128xf32> to vector<1x1x1x128xf32>
    %82 = vector.broadcast %81 : vector<1x1x1x128xf32> to vector<2x16x16x128xf32>
    %83 = arith.mulf %78, %82 : vector<2x16x16x128xf32>
    %84 = arith.addf %76, %83 : vector<2x16x16x128xf32>
    %85 = vector.extract_strided_slice %77 {offsets = [0, 0, 8, 0], sizes = [2, 16, 16, 128], strides = [1, 1, 1, 1]} : vector<2x16x32x128xf32> to vector<2x16x16x128xf32>
    %c7 = arith.constant 7 : index
    %c0_40 = arith.constant 0 : index
    %86 = vector.load %arg3[%c7, %c0_40] : memref<9x128xf32, #tpu.memory_space<vmem>>, vector<1x128xf32>
    %87 = vector.shape_cast %86 : vector<1x128xf32> to vector<128xf32>
    %88 = vector.shape_cast %87 : vector<128xf32> to vector<1x1x1x128xf32>
    %89 = vector.broadcast %88 : vector<1x1x1x128xf32> to vector<2x16x16x128xf32>
    %90 = arith.mulf %85, %89 : vector<2x16x16x128xf32>
    %91 = arith.addf %84, %90 : vector<2x16x16x128xf32>
    %92 = vector.extract_strided_slice %77 {offsets = [0, 0, 9, 0], sizes = [2, 16, 16, 128], strides = [1, 1, 1, 1]} : vector<2x16x32x128xf32> to vector<2x16x16x128xf32>
    %c8_41 = arith.constant 8 : index
    %c0_42 = arith.constant 0 : index
    %93 = vector.load %arg3[%c8_41, %c0_42] : memref<9x128xf32, #tpu.memory_space<vmem>>, vector<1x128xf32>
    %94 = vector.shape_cast %93 : vector<1x128xf32> to vector<128xf32>
    %95 = vector.shape_cast %94 : vector<128xf32> to vector<1x1x1x128xf32>
    %96 = vector.broadcast %95 : vector<1x1x1x128xf32> to vector<2x16x16x128xf32>
    %97 = arith.mulf %92, %96 : vector<2x16x16x128xf32>
    %98 = arith.addf %91, %97 : vector<2x16x16x128xf32>
    %99 = vector.shape_cast %98 : vector<2x16x16x128xf32> to vector<512x128xf32>
    %cst_43 = arith.constant dense<0.000000e+00> : vector<128xf32>
    %100 = vector.multi_reduction <add>, %99, %cst_43 [0] : vector<512x128xf32> to vector<128xf32>
    %101 = vector.shape_cast %100 : vector<128xf32> to vector<1x128xf32>
    %cst_44 = arith.constant 0.001953125 : f32
    %102 = vector.broadcast %cst_44 : f32 to vector<1x128xf32>
    %103 = arith.mulf %101, %102 : vector<1x128xf32>
    %104 = arith.mulf %99, %99 : vector<512x128xf32>
    %cst_45 = arith.constant dense<0.000000e+00> : vector<128xf32>
    %105 = vector.multi_reduction <add>, %104, %cst_45 [0] : vector<512x128xf32> to vector<128xf32>
    %106 = vector.shape_cast %105 : vector<128xf32> to vector<1x128xf32>
    %cst_46 = arith.constant 0.001953125 : f32
    %107 = vector.broadcast %cst_46 : f32 to vector<1x128xf32>
    %108 = arith.mulf %106, %107 : vector<1x128xf32>
    %109 = arith.mulf %103, %103 : vector<1x128xf32>
    %110 = arith.subf %108, %109 : vector<1x128xf32>
    %cst_47 = arith.constant 0.000000e+00 : f32
    %111 = vector.broadcast %cst_47 : f32 to vector<1x128xf32>
    %112 = arith.maximumf %110, %111 : vector<1x128xf32>
    %113 = vector.broadcast %103 : vector<1x128xf32> to vector<512x128xf32>
    %114 = arith.subf %99, %113 : vector<512x128xf32>
    %cst_48 = arith.constant 9.99999974E-6 : f32
    %115 = vector.broadcast %cst_48 : f32 to vector<1x128xf32>
    %116 = arith.addf %112, %115 : vector<1x128xf32>
    %117 = math.rsqrt %116 : vector<1x128xf32>
    %118 = vector.broadcast %117 : vector<1x128xf32> to vector<512x128xf32>
    %119 = arith.mulf %114, %118 : vector<512x128xf32>
    %cst_49 = arith.constant 0.000000e+00 : f32
    %cst_50 = arith.constant 6.000000e+00 : f32
    %120 = vector.broadcast %cst_49 : f32 to vector<512x128xf32>
    %121 = arith.maximumf %120, %119 : vector<512x128xf32>
    %122 = vector.broadcast %cst_50 : f32 to vector<512x128xf32>
    %123 = arith.minimumf %122, %121 : vector<512x128xf32>
    %124 = arith.truncf %123 : vector<512x128xf32> to vector<512x128xbf16>
    %c0_51 = arith.constant 0 : index
    %c0_52 = arith.constant 0 : index
    %125 = vector.load %arg4[%c0_51, %c0_52] : memref<128x128xbf16, #tpu.memory_space<vmem>>, vector<128x128xbf16>
    %cst_53 = arith.constant dense<0.000000e+00> : vector<512x128xf32>
    %126 = tpu.matmul %124, %125, %cst_53 {dimension_numbers = #tpu.dot_dimension_numbers<[1], [0], [0], [1], [0, 0, 1, 1], [], []>} : vector<512x128xbf16>, vector<128x128xbf16>, vector<512x128xf32> -> vector<512x128xf32>
    %cst_54 = arith.constant dense<0.000000e+00> : vector<128xf32>
    %127 = vector.multi_reduction <add>, %126, %cst_54 [0] : vector<512x128xf32> to vector<128xf32>
    %128 = vector.shape_cast %127 : vector<128xf32> to vector<1x128xf32>
    %cst_55 = arith.constant 0.001953125 : f32
    %129 = vector.broadcast %cst_55 : f32 to vector<1x128xf32>
    %130 = arith.mulf %128, %129 : vector<1x128xf32>
    %131 = arith.mulf %126, %126 : vector<512x128xf32>
    %cst_56 = arith.constant dense<0.000000e+00> : vector<128xf32>
    %132 = vector.multi_reduction <add>, %131, %cst_56 [0] : vector<512x128xf32> to vector<128xf32>
    %133 = vector.shape_cast %132 : vector<128xf32> to vector<1x128xf32>
    %cst_57 = arith.constant 0.001953125 : f32
    %134 = vector.broadcast %cst_57 : f32 to vector<1x128xf32>
    %135 = arith.mulf %133, %134 : vector<1x128xf32>
    %136 = arith.mulf %130, %130 : vector<1x128xf32>
    %137 = arith.subf %135, %136 : vector<1x128xf32>
    %cst_58 = arith.constant 0.000000e+00 : f32
    %138 = vector.broadcast %cst_58 : f32 to vector<1x128xf32>
    %139 = arith.maximumf %137, %138 : vector<1x128xf32>
    %140 = vector.broadcast %130 : vector<1x128xf32> to vector<512x128xf32>
    %141 = arith.subf %126, %140 : vector<512x128xf32>
    %cst_59 = arith.constant 9.99999974E-6 : f32
    %142 = vector.broadcast %cst_59 : f32 to vector<1x128xf32>
    %143 = arith.addf %139, %142 : vector<1x128xf32>
    %144 = math.rsqrt %143 : vector<1x128xf32>
    %145 = vector.broadcast %144 : vector<1x128xf32> to vector<512x128xf32>
    %146 = arith.mulf %141, %145 : vector<512x128xf32>
    %147 = arith.addf %146, %0 : vector<512x128xf32>
    %c0_60 = arith.constant 0 : index
    %c0_61 = arith.constant 0 : index
    %148 = vector.load %arg5[%c0_60, %c0_61] : memref<512x128xf32, #tpu.memory_space<vmem>>, vector<512x128xf32>
    tpu.vector_store %arg5[%c0_60, %c0_61], %147 {strides = array<i32>} : memref<512x128xf32, #tpu.memory_space<vmem>>, vector<512x128xf32>,
    return
  }
  func.func @transform_0(%arg0: i32) -> (i32, i32) {
    %c0_i32 = arith.constant 0 : i32
    %c0_i32_0 = arith.constant 0 : i32
    %c0_i32_1 = arith.constant 0 : i32
    return %c0_i32, %c0_i32_0 : i32, i32
  }
  func.func @transform_1(%arg0: i32) -> (i32, i32) {
    %c0_i32 = arith.constant 0 : i32
    %c0_i32_0 = arith.constant 0 : i32
    %c0_i32_1 = arith.constant 0 : i32
    return %c0_i32, %c0_i32_0 : i32, i32
  }
  func.func @transform_2(%arg0: i32) -> (i32, i32) {
    %c0_i32 = arith.constant 0 : i32
    %c0_i32_0 = arith.constant 0 : i32
    %c0_i32_1 = arith.constant 0 : i32
    return %c0_i32, %c0_i32_0 : i32, i32
  }
  func.func @transform_3(%arg0: i32) -> (i32, i32) {
    %c0_i32 = arith.constant 0 : i32
    %c0_i32_0 = arith.constant 0 : i32
    %c0_i32_1 = arith.constant 0 : i32
    return %c0_i32, %c0_i32_0 : i32, i32
  }
  func.func @transform_4(%arg0: i32) -> (i32, i32) {
    %c0_i32 = arith.constant 0 : i32
    %c0_i32_0 = arith.constant 0 : i32
    %c0_i32_1 = arith.constant 0 : i32
    return %c0_i32, %c0_i32_0 : i32, i32
  }
}

</mosaic_0001>

<llo_original>
// kernel: inverted_residual_uni.3
$region0: #{inverted_residual_uni.3}
  #allocation0 [shape = 'u32[]', space=smem, size = 0x4, offset = 0x4, fixed_abs, tag = 'smem constant byte address 0x4 - core index']
  #allocation1 [shape = 'u32[144,128]{1,0:T(1,128)}', space=vmem, size = 0x12000, scoped, tag = 'internal scratch']
  #allocation2 [shape = 'f32[2,18,32,128]{3,2,1,0:T(8,128)}', space=vmem, size = 0x90000, scoped, tag = 'scratch operand']
  %s0 = inlined_call_operand.vmem [shape: f32[512,128], index: 0, kind: input, shape index: {}]
  %s1 = inlined_call_operand.vmem [shape: bf16[128,128], index: 1, kind: input, shape index: {}]
  %s2 = inlined_call_operand.vmem [shape: f32[9,128], index: 2, kind: input, shape index: {}]
  %s3 = inlined_call_operand.vmem [shape: bf16[128,128], index: 3, kind: input, shape index: {}]
  %s4 = inlined_call_operand.vmem [shape: f32[512,128], index: 4, kind: output, shape index: {}]
  %s5 = sld [smem:[#allocation0]]
  $region26: #{inverted_residual_uni.3} parent=0
    _
  %s7 = ssub.s32 1, %s5
  %s8 = scalar_select 0, %s7, %s5
  // Predicated region
  $region2: #{inverted_residual_uni.3} parent=0 // pred_check
    _
  $region3: #{inverted_residual_uni.3} parent=0 // pred_check_branch
    %10 = sbr.rel (0) target = $region5
  $region4: #{inverted_residual_uni.3} parent=0 // pred_region
    _
  $region5: #{inverted_residual_uni.3} parent=0 // pred_fallthru
    _
  // Predicated region
  $region6: #{inverted_residual_uni.3} parent=0 // pred_check
    _
  $region7: #{inverted_residual_uni.3} parent=0 // pred_check_branch
    %12 = sbr.rel (0) target = $region9
  $region8: #{inverted_residual_uni.3} parent=0 // pred_region
    _
  $region9: #{inverted_residual_uni.3} parent=0 // pred_fallthru
    _
  // Predicated region
  $region10: #{inverted_residual_uni.3} parent=0 // pred_check
    _
  $region11: #{inverted_residual_uni.3} parent=0 // pred_check_branch
    %14 = sbr.rel (0) target = $region13
  $region12: #{inverted_residual_uni.3} parent=0 // pred_region
    _
  $region13: #{inverted_residual_uni.3} parent=0 // pred_fallthru
    _
  // Predicated region
  $region14: #{inverted_residual_uni.3} parent=0 // pred_check
    _
  $region15: #{inverted_residual_uni.3} parent=0 // pred_check_branch
    %16 = sbr.rel (0) target = $region17
  $region16: #{inverted_residual_uni.3} parent=0 // pred_region
    _
  $region17: #{inverted_residual_uni.3} parent=0 // pred_fallthru
    _
  %v18 = vld [vmem:[%s0] sm:$0xff]
  %v19 = vld [vmem:[%s0 + $0x8] sm:$0xff]
  %v20 = vld [vmem:[%s0 + $0x10] sm:$0xff]
  %v21 = vld [vmem:[%s0 + $0x18] sm:$0xff]
  %v22 = vld [vmem:[%s0 + $0x20] sm:$0xff]
  %v23 = vld [vmem:[%s0 + $0x28] sm:$0xff]
  %v24 = vld [vmem:[%s0 + $0x30] sm:$0xff]
  %v25 = vld [vmem:[%s0 + $0x38] sm:$0xff]
  %v26 = vld [vmem:[%s0 + $0x40] sm:$0xff]
  %v27 = vld [vmem:[%s0 + $0x48] sm:$0xff]
  %v28 = vld [vmem:[%s0 + $0x50] sm:$0xff]
  %v29 = vld [vmem:[%s0 + $0x58] sm:$0xff]
  %v30 = vld [vmem:[%s0 + $0x60] sm:$0xff]
  %v31 = vld [vmem:[%s0 + $0x68] sm:$0xff]
  %v32 = vld [vmem:[%s0 + $0x70] sm:$0xff]
  %v33 = vld [vmem:[%s0 + $0x78] sm:$0xff]
  %v34 = vld [vmem:[%s0 + $0x80] sm:$0xff]
  %v35 = vld [vmem:[%s0 + $0x88] sm:$0xff]
  %v36 = vld [vmem:[%s0 + $0x90] sm:$0xff]
  %v37 = vld [vmem:[%s0 + $0x98] sm:$0xff]
  %v38 = vld [vmem:[%s0 + $0xa0] sm:$0xff]
  %v39 = vld [vmem:[%s0 + $0xa8] sm:$0xff]
  %v40 = vld [vmem:[%s0 + $0xb0] sm:$0xff]
  %v41 = vld [vmem:[%s0 + $0xb8] sm:$0xff]
  %v42 = vld [vmem:[%s0 + $0xc0] sm:$0xff]
  %v43 = vld [vmem:[%s0 + $0xc8] sm:$0xff]
  %v44 = vld [vmem:[%s0 + $0xd0] sm:$0xff]
  %v45 = vld [vmem:[%s0 + $0xd8] sm:$0xff]
  %v46 = vld [vmem:[%s0 + $0xe0] sm:$0xff]
  %v47 = vld [vmem:[%s0 + $0xe8] sm:$0xff]
  %v48 = vld [vmem:[%s0 + $0xf0] sm:$0xff]
  %v49 = vld [vmem:[%s0 + $0xf8] sm:$0xff]
  %v50 = vld [vmem:[%s0 + $0x100] sm:$0xff]
  %v51 = vld [vmem:[%s0 + $0x108] sm:$0xff]
  %v52 = vld [vmem:[%s0 + $0x110] sm:$0xff]
  %v53 = vld [vmem:[%s0 + $0x118] sm:$0xff]
  %v54 = vld [vmem:[%s0 + $0x120] sm:$0xff]
  %v55 = vld [vmem:[%s0 + $0x128] sm:$0xff]
  %v56 = vld [vmem:[%s0 + $0x130] sm:$0xff]
  %v57 = vld [vmem:[%s0 + $0x138] sm:$0xff]
  %v58 = vld [vmem:[%s0 + $0x140] sm:$0xff]
  %v59 = vld [vmem:[%s0 + $0x148] sm:$0xff]
  %v60 = vld [vmem:[%s0 + $0x150] sm:$0xff]
  %v61 = vld [vmem:[%s0 + $0x158] sm:$0xff]
  %v62 = vld [vmem:[%s0 + $0x160] sm:$0xff]
  %v63 = vld [vmem:[%s0 + $0x168] sm:$0xff]
  %v64 = vld [vmem:[%s0 + $0x170] sm:$0xff]
  %v65 = vld [vmem:[%s0 + $0x178] sm:$0xff]
  %v66 = vld [vmem:[%s0 + $0x180] sm:$0xff]
  %v67 = vld [vmem:[%s0 + $0x188] sm:$0xff]
  %v68 = vld [vmem:[%s0 + $0x190] sm:$0xff]
  %v69 = vld [vmem:[%s0 + $0x198] sm:$0xff]
  %v70 = vld [vmem:[%s0 + $0x1a0] sm:$0xff]
  %v71 = vld [vmem:[%s0 + $0x1a8] sm:$0xff]
  %v72 = vld [vmem:[%s0 + $0x1b0] sm:$0xff]
  %v73 = vld [vmem:[%s0 + $0x1b8] sm:$0xff]
  %v74 = vld [vmem:[%s0 + $0x1c0] sm:$0xff]
  %v75 = vld [vmem:[%s0 + $0x1c8] sm:$0xff]
  %v76 = vld [vmem:[%s0 + $0x1d0] sm:$0xff]
  %v77 = vld [vmem:[%s0 + $0x1d8] sm:$0xff]
  %v78 = vld [vmem:[%s0 + $0x1e0] sm:$0xff]
  %v79 = vld [vmem:[%s0 + $0x1e8] sm:$0xff]
  %v80 = vld [vmem:[%s0 + $0x1f0] sm:$0xff]
  %v81 = vld [vmem:[%s0 + $0x1f8] sm:$0xff]
  %v82 = vpack.c.bf16 %v19, %v18
  %v83 = vpack.c.bf16 %v21, %v20
  %v84 = vpack.c.bf16 %v23, %v22
  %v85 = vpack.c.bf16 %v25, %v24
  %v86 = vpack.c.bf16 %v27, %v26
  %v87 = vpack.c.bf16 %v29, %v28
  %v88 = vpack.c.bf16 %v31, %v30
  %v89 = vpack.c.bf16 %v33, %v32
  %v90 = vpack.c.bf16 %v35, %v34
  %v91 = vpack.c.bf16 %v37, %v36
  %v92 = vpack.c.bf16 %v39, %v38
  %v93 = vpack.c.bf16 %v41, %v40
  %v94 = vpack.c.bf16 %v43, %v42
  %v95 = vpack.c.bf16 %v45, %v44
  %v96 = vpack.c.bf16 %v47, %v46
  %v97 = vpack.c.bf16 %v49, %v48
  %v98 = vpack.c.bf16 %v51, %v50
  %v99 = vpack.c.bf16 %v53, %v52
  %v100 = vpack.c.bf16 %v55, %v54
  %v101 = vpack.c.bf16 %v57, %v56
  %v102 = vpack.c.bf16 %v59, %v58
  %v103 = vpack.c.bf16 %v61, %v60
  %v104 = vpack.c.bf16 %v63, %v62
  %v105 = vpack.c.bf16 %v65, %v64
  %v106 = vpack.c.bf16 %v67, %v66
  %v107 = vpack.c.bf16 %v69, %v68
  %v108 = vpack.c.bf16 %v71, %v70
  %v109 = vpack.c.bf16 %v73, %v72
  %v110 = vpack.c.bf16 %v75, %v74
  %v111 = vpack.c.bf16 %v77, %v76
  %v112 = vpack.c.bf16 %v79, %v78
  %v113 = vpack.c.bf16 %v81, %v80
  %v114 = vld [vmem:[%s1] sm:$0xf]
  %v115 = vld [vmem:[%s1 + $0x4] sm:$0xf]
  %v116 = vld [vmem:[%s1 + $0x8] sm:$0xf]
  %v117 = vld [vmem:[%s1 + $0xc] sm:$0xf]
  %v118 = vld [vmem:[%s1 + $0x10] sm:$0xf]
  %v119 = vld [vmem:[%s1 + $0x14] sm:$0xf]
  %v120 = vld [vmem:[%s1 + $0x18] sm:$0xf]
  %v121 = vld [vmem:[%s1 + $0x1c] sm:$0xf]
  %v122 = vld [vmem:[%s1 + $0x20] sm:$0xf]
  %v123 = vld [vmem:[%s1 + $0x24] sm:$0xf]
  %v124 = vld [vmem:[%s1 + $0x28] sm:$0xf]
  %v125 = vld [vmem:[%s1 + $0x2c] sm:$0xf]
  %v126 = vld [vmem:[%s1 + $0x30] sm:$0xf]
  %v127 = vld [vmem:[%s1 + $0x34] sm:$0xf]
  %v128 = vld [vmem:[%s1 + $0x38] sm:$0xf]
  %v129 = vld [vmem:[%s1 + $0x3c] sm:$0xf]
  %v146 = vunpack.c.l.b16 %v114
  %v147 = vunpack.c.l.b16 %v115
  %v148 = vunpack.c.l.b16 %v116
  %v149 = vunpack.c.l.b16 %v117
  %v150 = vunpack.c.l.b16 %v118
  %v151 = vunpack.c.l.b16 %v119
  %v152 = vunpack.c.l.b16 %v120
  %v153 = vunpack.c.l.b16 %v121
  %v154 = vunpack.c.l.b16 %v122
  %v155 = vunpack.c.l.b16 %v123
  %v156 = vunpack.c.l.b16 %v124
  %v157 = vunpack.c.l.b16 %v125
  %v158 = vunpack.c.l.b16 %v126
  %v159 = vunpack.c.l.b16 %v127
  %v160 = vunpack.c.l.b16 %v128
  %v161 = vunpack.c.l.b16 %v129
  %v162 = vpack.c.b16 %v147, %v146
  %v163 = vpack.c.b16 %v149, %v148
  %v164 = vpack.c.b16 %v151, %v150
  %v165 = vpack.c.b16 %v153, %v152
  %v166 = vpack.c.b16 %v155, %v154
  %v167 = vpack.c.b16 %v157, %v156
  %v168 = vpack.c.b16 %v159, %v158
  %v169 = vpack.c.b16 %v161, %v160
  %178 = vmatprep.subr.bf16.mxu0 0
  %179 = vmatpush1.bf16.msra.mxu0 %v162
  %180 = vmatprep.subr.bf16.mxu0 0
  %181 = vmatpush1.bf16.msra.mxu0 %v163
  %182 = vmatprep.subr.bf16.mxu0 0
  %183 = vmatpush1.bf16.msra.mxu0 %v164
  %184 = vmatprep.subr.bf16.mxu0 0
  %185 = vmatpush1.bf16.msra.mxu0 %v165
  %186 = vmatprep.subr.bf16.mxu0 0
  %187 = vmatpush1.bf16.msra.mxu0 %v166
  %188 = vmatprep.subr.bf16.mxu0 0
  %189 = vmatpush1.bf16.msra.mxu0 %v167
  %190 = vmatprep.subr.bf16.mxu0 0
  %191 = vmatpush1.bf16.msra.mxu0 %v168
  %192 = vmatprep.subr.bf16.mxu0 0
  %193 = vmatpush1.bf16.msra.mxu0 %v169
  %194 = vmatprep.subr.bf16.mxu0 0
  %195 = vmatpush1.bf16.msra.mxu0 0
  %196 = vmatprep.subr.bf16.mxu0 0
  %197 = vmatpush1.bf16.msra.mxu0 0
  %198 = vmatprep.subr.bf16.mxu0 0
  %199 = vmatpush1.bf16.msra.mxu0 0
  %200 = vmatprep.subr.bf16.mxu0 0
  %201 = vmatpush1.bf16.msra.mxu0 0
  %202 = vmatprep.subr.bf16.mxu0 0
  %203 = vmatpush1.bf16.msra.mxu0 0
  %204 = vmatprep.subr.bf16.mxu0 0
  %205 = vmatpush1.bf16.msra.mxu0 0
  %206 = vmatprep.subr.bf16.mxu0 0
  %207 = vmatpush1.bf16.msra.mxu0 0
  %208 = vmatprep.subr.bf16.mxu0 0
  %209 = vmatpush1.bf16.msra.mxu0 0
  %210 = vmatprep.mubr.bf16.mxu0 0
  %211 = vmatmul.mubr.bf16.gmra.mrb[0].mxu0 %v82
  %v212 = vpop.f32.mrb[0].mxu0
  %v213 = vadd.f32 0.0, %v212
  %v214 = vpop.f32.mrb[0].mxu0
  %v215 = vpop.f32.mrb[0].mxu0
  %v216 = vadd.f32 0.0, %v215
  %v217 = vpop.f32.mrb[0].mxu0
  %218 = vmatprep.mubr.bf16.mxu0 0
  %219 = vmatmul.mubr.bf16.gmra.mrb[0].mxu0 %v83
  %v220 = vpop.f32.mrb[0].mxu0
  %v221 = vadd.f32 0.0, %v220
  %v222 = vpop.f32.mrb[0].mxu0
  %v223 = vpop.f32.mrb[0].mxu0
  %v224 = vadd.f32 0.0, %v223
  %v225 = vpop.f32.mrb[0].mxu0
  %226 = vmatprep.mubr.bf16.mxu0 0
  %227 = vmatmul.mubr.bf16.gmra.mrb[0].mxu0 %v84
  %v228 = vpop.f32.mrb[0].mxu0
  %v229 = vadd.f32 0.0, %v228
  %v230 = vpop.f32.mrb[0].mxu0
  %v231 = vpop.f32.mrb[0].mxu0
  %v232 = vadd.f32 0.0, %v231
  %v233 = vpop.f32.mrb[0].mxu0
  %234 = vmatprep.mubr.bf16.mxu0 0
  %235 = vmatmul.mubr.bf16.gmra.mrb[0].mxu0 %v85
  %v236 = vpop.f32.mrb[0].mxu0
  %v237 = vadd.f32 0.0, %v236
  %v238 = vpop.f32.mrb[0].mxu0
  %v239 = vpop.f32.mrb[0].mxu0
  %v240 = vadd.f32 0.0, %v239
  %v241 = vpop.f32.mrb[0].mxu0
  %242 = vmatprep.mubr.bf16.mxu0 0
  %243 = vmatmul.mubr.bf16.gmra.mrb[0].mxu0 %v86
  %v244 = vpop.f32.mrb[0].mxu0
  %v245 = vadd.f32 0.0, %v244
  %v246 = vpop.f32.mrb[0].mxu0
  %v247 = vpop.f32.mrb[0].mxu0
  %v248 = vadd.f32 0.0, %v247
  %v249 = vpop.f32.mrb[0].mxu0
  %250 = vmatprep.mubr.bf16.mxu0 0
  %251 = vmatmul.mubr.bf16.gmra.mrb[0].mxu0 %v87
  %v252 = vpop.f32.mrb[0].mxu0
  %v253 = vadd.f32 0.0, %v252
  %v254 = vpop.f32.mrb[0].mxu0
  %v255 = vpop.f32.mrb[0].mxu0
  %v256 = vadd.f32 0.0, %v255
  %v257 = vpop.f32.mrb[0].mxu0
  %258 = vmatprep.mubr.bf16.mxu0 0
  %259 = vmatmul.mubr.bf16.gmra.mrb[0].mxu0 %v88
  %v260 = vpop.f32.mrb[0].mxu0
  %v261 = vadd.f32 0.0, %v260
  %v262 = vpop.f32.mrb[0].mxu0
  %v263 = vpop.f32.mrb[0].mxu0
  %v264 = vadd.f32 0.0, %v263
  %v265 = vpop.f32.mrb[0].mxu0
  %266 = vmatprep.mubr.bf16.mxu0 0
  %267 = vmatmul.mubr.bf16.gmra.mrb[0].mxu0 %v89
  %v268 = vpop.f32.mrb[0].mxu0
  %v269 = vadd.f32 0.0, %v268
  %v270 = vpop.f32.mrb[0].mxu0
  %v271 = vpop.f32.mrb[0].mxu0
  %v272 = vadd.f32 0.0, %v271
  %v273 = vpop.f32.mrb[0].mxu0
  %274 = vmatprep.mubr.bf16.mxu0 0
  %275 = vmatmul.mubr.bf16.gmra.mrb[0].mxu0 %v90
  %v276 = vpop.f32.mrb[0].mxu0
  %v277 = vadd.f32 0.0, %v276
  %v278 = vpop.f32.mrb[0].mxu0
  %v279 = vpop.f32.mrb[0].mxu0
  %v280 = vadd.f32 0.0, %v279
  %v281 = vpop.f32.mrb[0].mxu0
  %282 = vmatprep.mubr.bf16.mxu0 0
  %283 = vmatmul.mubr.bf16.gmra.mrb[0].mxu0 %v91
  %v284 = vpop.f32.mrb[0].mxu0
  %v285 = vadd.f32 0.0, %v284
  %v286 = vpop.f32.mrb[0].mxu0
  %v287 = vpop.f32.mrb[0].mxu0
  %v288 = vadd.f32 0.0, %v287
  %v289 = vpop.f32.mrb[0].mxu0
  %290 = vmatprep.mubr.bf16.mxu0 0
  %291 = vmatmul.mubr.bf16.gmra.mrb[0].mxu0 %v92
  %v292 = vpop.f32.mrb[0].mxu0
  %v293 = vadd.f32 0.0, %v292
  %v294 = vpop.f32.mrb[0].mxu0
  %v295 = vpop.f32.mrb[0].mxu0
  %v296 = vadd.f32 0.0, %v295
  %v297 = vpop.f32.mrb[0].mxu0
  %298 = vmatprep.mubr.bf16.mxu0 0
  %299 = vmatmul.mubr.bf16.gmra.mrb[0].mxu0 %v93
  %v300 = vpop.f32.mrb[0].mxu0
  %v301 = vadd.f32 0.0, %v300
  %v302 = vpop.f32.mrb[0].mxu0
  %v303 = vpop.f32.mrb[0].mxu0
  %v304 = vadd.f32 0.0, %v303
  %v305 = vpop.f32.mrb[0].mxu0
  %306 = vmatprep.mubr.bf16.mxu0 0
  %307 = vmatmul.mubr.bf16.gmra.mrb[0].mxu0 %v94
  %v308 = vpop.f32.mrb[0].mxu0
  %v309 = vadd.f32 0.0, %v308
  %v310 = vpop.f32.mrb[0].mxu0
  %v311 = vpop.f32.mrb[0].mxu0
  %v312 = vadd.f32 0.0, %v311
  %v313 = vpop.f32.mrb[0].mxu0
  %314 = vmatprep.mubr.bf16.mxu0 0
  %315 = vmatmul.mubr.bf16.gmra.mrb[0].mxu0 %v95
  %v316 = vpop.f32.mrb[0].mxu0
  %v317 = vadd.f32 0.0, %v316
  %v318 = vpop.f32.mrb[0].mxu0
  %v319 = vpop.f32.mrb[0].mxu0
  %v320 = vadd.f32 0.0, %v319
  %v321 = vpop.f32.mrb[0].mxu0
  %322 = vmatprep.mubr.bf16.mxu0 0
  %323 = vmatmul.mubr.bf16.gmra.mrb[0].mxu0 %v96
  %v324 = vpop.f32.mrb[0].mxu0
  %v325 = vadd.f32 0.0, %v324
  %v326 = vpop.f32.mrb[0].mxu0
  %v327 = vpop.f32.mrb[0].mxu0
  %v328 = vadd.f32 0.0, %v327
  %v329 = vpop.f32.mrb[0].mxu0
  %330 = vmatprep.mubr.bf16.mxu0 0
  %331 = vmatmul.mubr.bf16.gmra.mrb[0].mxu0 %v97
  %v332 = vpop.f32.mrb[0].mxu0
  %v333 = vadd.f32 0.0, %v332
  %v334 = vpop.f32.mrb[0].mxu0
  %v335 = vpop.f32.mrb[0].mxu0
  %v336 = vadd.f32 0.0, %v335
  %v337 = vpop.f32.mrb[0].mxu0
  %338 = vmatprep.mubr.bf16.mxu0 0
  %339 = vmatmul.mubr.bf16.gmra.mrb[0].mxu0 %v98
  %v340 = vpop.f32.mrb[0].mxu0
  %v341 = vadd.f32 0.0, %v340
  %v342 = vpop.f32.mrb[0].mxu0
  %v343 = vpop.f32.mrb[0].mxu0
  %v344 = vadd.f32 0.0, %v343
  %v345 = vpop.f32.mrb[0].mxu0
  %346 = vmatprep.mubr.bf16.mxu0 0
  %347 = vmatmul.mubr.bf16.gmra.mrb[0].mxu0 %v99
  %v348 = vpop.f32.mrb[0].mxu0
  %v349 = vadd.f32 0.0, %v348
  %v350 = vpop.f32.mrb[0].mxu0
  %v351 = vpop.f32.mrb[0].mxu0
  %v352 = vadd.f32 0.0, %v351
  %v353 = vpop.f32.mrb[0].mxu0
  %354 = vmatprep.mubr.bf16.mxu0 0
  %355 = vmatmul.mubr.bf16.gmra.mrb[0].mxu0 %v100
  %v356 = vpop.f32.mrb[0].mxu0
  %v357 = vadd.f32 0.0, %v356
  %v358 = vpop.f32.mrb[0].mxu0
  %v359 = vpop.f32.mrb[0].mxu0
  %v360 = vadd.f32 0.0, %v359
  %v361 = vpop.f32.mrb[0].mxu0
  %362 = vmatprep.mubr.bf16.mxu0 0
  %363 = vmatmul.mubr.bf16.gmra.mrb[0].mxu0 %v101
  %v364 = vpop.f32.mrb[0].mxu0
  %v365 = vadd.f32 0.0, %v364
  %v366 = vpop.f32.mrb[0].mxu0
  %v367 = vpop.f32.mrb[0].mxu0
  %v368 = vadd.f32 0.0, %v367
  %v369 = vpop.f32.mrb[0].mxu0
  %370 = vmatprep.mubr.bf16.mxu0 0
  %371 = vmatmul.mubr.bf16.gmra.mrb[0].mxu0 %v102
  %v372 = vpop.f32.mrb[0].mxu0
  %v373 = vadd.f32 0.0, %v372
  %v374 = vpop.f32.mrb[0].mxu0
  %v375 = vpop.f32.mrb[0].mxu0
  %v376 = vadd.f32 0.0, %v375
  %v377 = vpop.f32.mrb[0].mxu0
  %378 = vmatprep.mubr.bf16.mxu0 0
  %379 = vmatmul.mubr.bf16.gmra.mrb[0].mxu0 %v103
  %v380 = vpop.f32.mrb[0].mxu0
  %v381 = vadd.f32 0.0, %v380
  %v382 = vpop.f32.mrb[0].mxu0
  %v383 = vpop.f32.mrb[0].mxu0
  %v384 = vadd.f32 0.0, %v383
  %v385 = vpop.f32.mrb[0].mxu0
  %386 = vmatprep.mubr.bf16.mxu0 0
  %387 = vmatmul.mubr.bf16.gmra.mrb[0].mxu0 %v104
  %v388 = vpop.f32.mrb[0].mxu0
  %v389 = vadd.f32 0.0, %v388
  %v390 = vpop.f32.mrb[0].mxu0
  %v391 = vpop.f32.mrb[0].mxu0
  %v392 = vadd.f32 0.0, %v391
  %v393 = vpop.f32.mrb[0].mxu0
  %394 = vmatprep.mubr.bf16.mxu0 0
  %395 = vmatmul.mubr.bf16.gmra.mrb[0].mxu0 %v105
  %v396 = vpop.f32.mrb[0].mxu0
  %v397 = vadd.f32 0.0, %v396
  %v398 = vpop.f32.mrb[0].mxu0
  %v399 = vpop.f32.mrb[0].mxu0
  %v400 = vadd.f32 0.0, %v399
  %v401 = vpop.f32.mrb[0].mxu0
  %402 = vmatprep.mubr.bf16.mxu0 0
  %403 = vmatmul.mubr.bf16.gmra.mrb[0].mxu0 %v106
  %v404 = vpop.f32.mrb[0].mxu0
  %v405 = vadd.f32 0.0, %v404
  %v406 = vpop.f32.mrb[0].mxu0
  %v407 = vpop.f32.mrb[0].mxu0
  %v408 = vadd.f32 0.0, %v407
  %v409 = vpop.f32.mrb[0].mxu0
  %410 = vmatprep.mubr.bf16.mxu0 0
  %411 = vmatmul.mubr.bf16.gmra.mrb[0].mxu0 %v107
  %v412 = vpop.f32.mrb[0].mxu0
  %v413 = vadd.f32 0.0, %v412
  %v414 = vpop.f32.mrb[0].mxu0
  %v415 = vpop.f32.mrb[0].mxu0
  %v416 = vadd.f32 0.0, %v415
  %v417 = vpop.f32.mrb[0].mxu0
  %418 = vmatprep.mubr.bf16.mxu0 0
  %419 = vmatmul.mubr.bf16.gmra.mrb[0].mxu0 %v108
  %v420 = vpop.f32.mrb[0].mxu0
  %v421 = vadd.f32 0.0, %v420
  %v422 = vpop.f32.mrb[0].mxu0
  %v423 = vpop.f32.mrb[0].mxu0
  %v424 = vadd.f32 0.0, %v423
  %v425 = vpop.f32.mrb[0].mxu0
  %426 = vmatprep.mubr.bf16.mxu0 0
  %427 = vmatmul.mubr.bf16.gmra.mrb[0].mxu0 %v109
  %v428 = vpop.f32.mrb[0].mxu0
  %v429 = vadd.f32 0.0, %v428
  %v430 = vpop.f32.mrb[0].mxu0
  %v431 = vpop.f32.mrb[0].mxu0
  %v432 = vadd.f32 0.0, %v431
  %v433 = vpop.f32.mrb[0].mxu0
  %434 = vmatprep.mubr.bf16.mxu0 0
  %435 = vmatmul.mubr.bf16.gmra.mrb[0].mxu0 %v110
  %v436 = vpop.f32.mrb[0].mxu0
  %v437 = vadd.f32 0.0, %v436
  %v438 = vpop.f32.mrb[0].mxu0
  %v439 = vpop.f32.mrb[0].mxu0
  %v440 = vadd.f32 0.0, %v439
  %v441 = vpop.f32.mrb[0].mxu0
  %442 = vmatprep.mubr.bf16.mxu0 0
  %443 = vmatmul.mubr.bf16.gmra.mrb[0].mxu0 %v111
  %v444 = vpop.f32.mrb[0].mxu0
  %v445 = vadd.f32 0.0, %v444
  %v446 = vpop.f32.mrb[0].mxu0
  %v447 = vpop.f32.mrb[0].mxu0
  %v448 = vadd.f32 0.0, %v447
  %v449 = vpop.f32.mrb[0].mxu0
  %450 = vmatprep.mubr.bf16.mxu0 0
  %451 = vmatmul.mubr.bf16.gmra.mrb[0].mxu0 %v112
  %v452 = vpop.f32.mrb[0].mxu0
  %v453 = vadd.f32 0.0, %v452
  %v454 = vpop.f32.mrb[0].mxu0
  %v455 = vpop.f32.mrb[0].mxu0
  %v456 = vadd.f32 0.0, %v455
  %v457 = vpop.f32.mrb[0].mxu0
  %458 = vmatprep.mubr.bf16.mxu0 0
  %459 = vmatmul.mubr.bf16.gmra.mrb[0].mxu0 %v113
  %v460 = vpop.f32.mrb[0].mxu0
  %v461 = vadd.f32 0.0, %v460
  %v462 = vpop.f32.mrb[0].mxu0
  %v463 = vpop.f32.mrb[0].mxu0
  %v464 = vadd.f32 0.0, %v463
  %v465 = vpop.f32.mrb[0].mxu0
  %466 = vdwg.mxu0
  %v467 = vadd.f32 %v213, %v216
  %v468 = vadd.f32 %v467, %v221
  %v469 = vadd.f32 %v468, %v224
  %v470 = vadd.f32 %v469, %v229
  %v471 = vadd.f32 %v470, %v232
  %v472 = vadd.f32 %v471, %v237
  %v473 = vadd.f32 %v472, %v240
  %v474 = vadd.f32 %v473, %v245
  %v475 = vadd.f32 %v474, %v248
  %v476 = vadd.f32 %v475, %v253
  %v477 = vadd.f32 %v476, %v256
  %v478 = vadd.f32 %v477, %v261
  %v479 = vadd.f32 %v478, %v264
  %v480 = vadd.f32 %v479, %v269
  %v481 = vadd.f32 %v480, %v272
  %v482 = vadd.f32 %v481, %v277
  %v483 = vadd.f32 %v482, %v280
  %v484 = vadd.f32 %v483, %v285
  %v485 = vadd.f32 %v484, %v288
  %v486 = vadd.f32 %v485, %v293
  %v487 = vadd.f32 %v486, %v296
  %v488 = vadd.f32 %v487, %v301
  %v489 = vadd.f32 %v488, %v304
  %v490 = vadd.f32 %v489, %v309
  %v491 = vadd.f32 %v490, %v312
  %v492 = vadd.f32 %v491, %v317
  %v493 = vadd.f32 %v492, %v320
  %v494 = vadd.f32 %v493, %v325
  %v495 = vadd.f32 %v494, %v328
  %v496 = vadd.f32 %v495, %v333
  %v497 = vadd.f32 %v496, %v336
  %v498 = vadd.f32 %v497, %v341
  %v499 = vadd.f32 %v498, %v344
  %v500 = vadd.f32 %v499, %v349
  %v501 = vadd.f32 %v500, %v352
  %v502 = vadd.f32 %v501, %v357
  %v503 = vadd.f32 %v502, %v360
  %v504 = vadd.f32 %v503, %v365
  %v505 = vadd.f32 %v504, %v368
  %v506 = vadd.f32 %v505, %v373
  %v507 = vadd.f32 %v506, %v376
  %v508 = vadd.f32 %v507, %v381
  %v509 = vadd.f32 %v508, %v384
  %v510 = vadd.f32 %v509, %v389
  %v511 = vadd.f32 %v510, %v392
  %v512 = vadd.f32 %v511, %v397
  %v513 = vadd.f32 %v512, %v400
  %v514 = vadd.f32 %v513, %v405
  %v515 = vadd.f32 %v514, %v408
  %v516 = vadd.f32 %v515, %v413
  %v517 = vadd.f32 %v516, %v416
  %v518 = vadd.f32 %v517, %v421
  %v519 = vadd.f32 %v518, %v424
  %v520 = vadd.f32 %v519, %v429
  %v521 = vadd.f32 %v520, %v432
  %v522 = vadd.f32 %v521, %v437
  %v523 = vadd.f32 %v522, %v440
  %v524 = vadd.f32 %v523, %v445
  %v525 = vadd.f32 %v524, %v448
  %v526 = vadd.f32 %v525, %v453
  %v527 = vadd.f32 %v526, %v456
  %v528 = vadd.f32 %v527, %v461
  %v529 = vadd.f32 %v528, %v464
  %v530 = vrot.slane %v529, 4
  %v531 = vadd.f32 %v529, %v530
  %v532 = vrot.slane %v531, 2
  %v533 = vadd.f32 %v531, %v532
  %v534 = vrot.slane %v533, 1
  %v535 = vadd.f32 %v533, %v534
  %v536 = vmul.f32 %v535, 0.001953125
  %v537 = vmul.f32 %v213, %v213
  %v538 = vmul.f32 %v216, %v216
  %v539 = vmul.f32 %v221, %v221
  %v540 = vmul.f32 %v224, %v224
  %v541 = vmul.f32 %v229, %v229
  %v542 = vmul.f32 %v232, %v232
  %v543 = vmul.f32 %v237, %v237
  %v544 = vmul.f32 %v240, %v240
  %v545 = vmul.f32 %v245, %v245
  %v546 = vmul.f32 %v248, %v248
  %v547 = vmul.f32 %v253, %v253
  %v548 = vmul.f32 %v256, %v256
  %v549 = vmul.f32 %v261, %v261
  %v550 = vmul.f32 %v264, %v264
  %v551 = vmul.f32 %v269, %v269
  %v552 = vmul.f32 %v272, %v272
  %v553 = vmul.f32 %v277, %v277
  %v554 = vmul.f32 %v280, %v280
  %v555 = vmul.f32 %v285, %v285
  %v556 = vmul.f32 %v288, %v288
  %v557 = vmul.f32 %v293, %v293
  %v558 = vmul.f32 %v296, %v296
  %v559 = vmul.f32 %v301, %v301
  %v560 = vmul.f32 %v304, %v304
  %v561 = vmul.f32 %v309, %v309
  %v562 = vmul.f32 %v312, %v312
  %v563 = vmul.f32 %v317, %v317
  %v564 = vmul.f32 %v320, %v320
  %v565 = vmul.f32 %v325, %v325
  %v566 = vmul.f32 %v328, %v328
  %v567 = vmul.f32 %v333, %v333
  %v568 = vmul.f32 %v336, %v336
  %v569 = vmul.f32 %v341, %v341
  %v570 = vmul.f32 %v344, %v344
  %v571 = vmul.f32 %v349, %v349
  %v572 = vmul.f32 %v352, %v352
  %v573 = vmul.f32 %v357, %v357
  %v574 = vmul.f32 %v360, %v360
  %v575 = vmul.f32 %v365, %v365
  %v576 = vmul.f32 %v368, %v368
  %v577 = vmul.f32 %v373, %v373
  %v578 = vmul.f32 %v376, %v376
  %v579 = vmul.f32 %v381, %v381
  %v580 = vmul.f32 %v384, %v384
  %v581 = vmul.f32 %v389, %v389
  %v582 = vmul.f32 %v392, %v392
  %v583 = vmul.f32 %v397, %v397
  %v584 = vmul.f32 %v400, %v400
  %v585 = vmul.f32 %v405, %v405
  %v586 = vmul.f32 %v408, %v408
  %v587 = vmul.f32 %v413, %v413
  %v588 = vmul.f32 %v416, %v416
  %v589 = vmul.f32 %v421, %v421
  %v590 = vmul.f32 %v424, %v424
  %v591 = vmul.f32 %v429, %v429
  %v592 = vmul.f32 %v432, %v432
  %v593 = vmul.f32 %v437, %v437
  %v594 = vmul.f32 %v440, %v440
  %v595 = vmul.f32 %v445, %v445
  %v596 = vmul.f32 %v448, %v448
  %v597 = vmul.f32 %v453, %v453
  %v598 = vmul.f32 %v456, %v456
  %v599 = vmul.f32 %v461, %v461
  %v600 = vmul.f32 %v464, %v464
  %v601 = vadd.f32 %v537, %v538
  %v602 = vadd.f32 %v601, %v539
  %v603 = vadd.f32 %v602, %v540
  %v604 = vadd.f32 %v603, %v541
  %v605 = vadd.f32 %v604, %v542
  %v606 = vadd.f32 %v605, %v543
  %v607 = vadd.f32 %v606, %v544
  %v608 = vadd.f32 %v607, %v545
  %v609 = vadd.f32 %v608, %v546
  %v610 = vadd.f32 %v609, %v547
  %v611 = vadd.f32 %v610, %v548
  %v612 = vadd.f32 %v611, %v549
  %v613 = vadd.f32 %v612, %v550
  %v614 = vadd.f32 %v613, %v551
  %v615 = vadd.f32 %v614, %v552
  %v616 = vadd.f32 %v615, %v553
  %v617 = vadd.f32 %v616, %v554
  %v618 = vadd.f32 %v617, %v555
  %v619 = vadd.f32 %v618, %v556
  %v620 = vadd.f32 %v619, %v557
  %v621 = vadd.f32 %v620, %v558
  %v622 = vadd.f32 %v621, %v559
  %v623 = vadd.f32 %v622, %v560
  %v624 = vadd.f32 %v623, %v561
  %v625 = vadd.f32 %v624, %v562
  %v626 = vadd.f32 %v625, %v563
  %v627 = vadd.f32 %v626, %v564
  %v628 = vadd.f32 %v627, %v565
  %v629 = vadd.f32 %v628, %v566
  %v630 = vadd.f32 %v629, %v567
  %v631 = vadd.f32 %v630, %v568
  %v632 = vadd.f32 %v631, %v569
  %v633 = vadd.f32 %v632, %v570
  %v634 = vadd.f32 %v633, %v571
  %v635 = vadd.f32 %v634, %v572
  %v636 = vadd.f32 %v635, %v573
  %v637 = vadd.f32 %v636, %v574
  %v638 = vadd.f32 %v637, %v575
  %v639 = vadd.f32 %v638, %v576
  %v640 = vadd.f32 %v639, %v577
  %v641 = vadd.f32 %v640, %v578
  %v642 = vadd.f32 %v641, %v579
  %v643 = vadd.f32 %v642, %v580
  %v644 = vadd.f32 %v643, %v581
  %v645 = vadd.f32 %v644, %v582
  %v646 = vadd.f32 %v645, %v583
  %v647 = vadd.f32 %v646, %v584
  %v648 = vadd.f32 %v647, %v585
  %v649 = vadd.f32 %v648, %v586
  %v650 = vadd.f32 %v649, %v587
  %v651 = vadd.f32 %v650, %v588
  %v652 = vadd.f32 %v651, %v589
  %v653 = vadd.f32 %v652, %v590
  %v654 = vadd.f32 %v653, %v591
  %v655 = vadd.f32 %v654, %v592
  %v656 = vadd.f32 %v655, %v593
  %v657 = vadd.f32 %v656, %v594
  %v658 = vadd.f32 %v657, %v595
  %v659 = vadd.f32 %v658, %v596
  %v660 = vadd.f32 %v659, %v597
  %v661 = vadd.f32 %v660, %v598
  %v662 = vadd.f32 %v661, %v599
  %v663 = vadd.f32 %v662, %v600
  %v664 = vrot.slane %v663, 4
  %v665 = vadd.f32 %v663, %v664
  %v666 = vrot.slane %v665, 2
  %v667 = vadd.f32 %v665, %v666
  %v668 = vrot.slane %v667, 1
  %v669 = vadd.f32 %v667, %v668
  %v670 = vmul.f32 %v669, 0.001953125
  %v671 = vmul.f32 %v536, %v536
  %v672 = vsub.f32 %v670, %v671
  %v673 = vmax.f32 %v672, 0.0
  %v674 = vsub.f32 %v213, %v536
  %v675 = vsub.f32 %v216, %v536
  %v676 = vsub.f32 %v221, %v536
  %v677 = vsub.f32 %v224, %v536
  %v678 = vsub.f32 %v229, %v536
  %v679 = vsub.f32 %v232, %v536
  %v680 = vsub.f32 %v237, %v536
  %v681 = vsub.f32 %v240, %v536
  %v682 = vsub.f32 %v245, %v536
  %v683 = vsub.f32 %v248, %v536
  %v684 = vsub.f32 %v253, %v536
  %v685 = vsub.f32 %v256, %v536
  %v686 = vsub.f32 %v261, %v536
  %v687 = vsub.f32 %v264, %v536
  %v688 = vsub.f32 %v269, %v536
  %v689 = vsub.f32 %v272, %v536
  %v690 = vsub.f32 %v277, %v536
  %v691 = vsub.f32 %v280, %v536
  %v692 = vsub.f32 %v285, %v536
  %v693 = vsub.f32 %v288, %v536
  %v694 = vsub.f32 %v293, %v536
  %v695 = vsub.f32 %v296, %v536
  %v696 = vsub.f32 %v301, %v536
  %v697 = vsub.f32 %v304, %v536
  %v698 = vsub.f32 %v309, %v536
  %v699 = vsub.f32 %v312, %v536
  %v700 = vsub.f32 %v317, %v536
  %v701 = vsub.f32 %v320, %v536
  %v702 = vsub.f32 %v325, %v536
  %v703 = vsub.f32 %v328, %v536
  %v704 = vsub.f32 %v333, %v536
  %v705 = vsub.f32 %v336, %v536
  %v706 = vsub.f32 %v341, %v536
  %v707 = vsub.f32 %v344, %v536
  %v708 = vsub.f32 %v349, %v536
  %v709 = vsub.f32 %v352, %v536
  %v710 = vsub.f32 %v357, %v536
  %v711 = vsub.f32 %v360, %v536
  %v712 = vsub.f32 %v365, %v536
  %v713 = vsub.f32 %v368, %v536
  %v714 = vsub.f32 %v373, %v536
  %v715 = vsub.f32 %v376, %v536
  %v716 = vsub.f32 %v381, %v536
  %v717 = vsub.f32 %v384, %v536
  %v718 = vsub.f32 %v389, %v536
  %v719 = vsub.f32 %v392, %v536
  %v720 = vsub.f32 %v397, %v536
  %v721 = vsub.f32 %v400, %v536
  %v722 = vsub.f32 %v405, %v536
  %v723 = vsub.f32 %v408, %v536
  %v724 = vsub.f32 %v413, %v536
  %v725 = vsub.f32 %v416, %v536
  %v726 = vsub.f32 %v421, %v536
  %v727 = vsub.f32 %v424, %v536
  %v728 = vsub.f32 %v429, %v536
  %v729 = vsub.f32 %v432, %v536
  %v730 = vsub.f32 %v437, %v536
  %v731 = vsub.f32 %v440, %v536
  %v732 = vsub.f32 %v445, %v536
  %v733 = vsub.f32 %v448, %v536
  %v734 = vsub.f32 %v453, %v536
  %v735 = vsub.f32 %v456, %v536
  %v736 = vsub.f32 %v461, %v536
  %v737 = vsub.f32 %v464, %v536
  %v738 = vadd.f32 %v673, 1e-05
  %v739 = vrsqrt.pop %v738
  %v740 = vmul.f32 %v674, %v739
  %v741 = vmul.f32 %v675, %v739
  %v742 = vmul.f32 %v676, %v739
  %v743 = vmul.f32 %v677, %v739
  %v744 = vmul.f32 %v678, %v739
  %v745 = vmul.f32 %v679, %v739
  %v746 = vmul.f32 %v680, %v739
  %v747 = vmul.f32 %v681, %v739
  %v748 = vmul.f32 %v682, %v739
  %v749 = vmul.f32 %v683, %v739
  %v750 = vmul.f32 %v684, %v739
  %v751 = vmul.f32 %v685, %v739
  %v752 = vmul.f32 %v686, %v739
  %v753 = vmul.f32 %v687, %v739
  %v754 = vmul.f32 %v688, %v739
  %v755 = vmul.f32 %v689, %v739
  %v756 = vmul.f32 %v690, %v739
  %v757 = vmul.f32 %v691, %v739
  %v758 = vmul.f32 %v692, %v739
  %v759 = vmul.f32 %v693, %v739
  %v760 = vmul.f32 %v694, %v739
  %v761 = vmul.f32 %v695, %v739
  %v762 = vmul.f32 %v696, %v739
  %v763 = vmul.f32 %v697, %v739
  %v764 = vmul.f32 %v698, %v739
  %v765 = vmul.f32 %v699, %v739
  %v766 = vmul.f32 %v700, %v739
  %v767 = vmul.f32 %v701, %v739
  %v768 = vmul.f32 %v702, %v739
  %v769 = vmul.f32 %v703, %v739
  %v770 = vmul.f32 %v704, %v739
  %v771 = vmul.f32 %v705, %v739
  %v772 = vmul.f32 %v706, %v739
  %v773 = vmul.f32 %v707, %v739
  %v774 = vmul.f32 %v708, %v739
  %v775 = vmul.f32 %v709, %v739
  %v776 = vmul.f32 %v710, %v739
  %v777 = vmul.f32 %v711, %v739
  %v778 = vmul.f32 %v712, %v739
  %v779 = vmul.f32 %v713, %v739
  %v780 = vmul.f32 %v714, %v739
  %v781 = vmul.f32 %v715, %v739
  %v782 = vmul.f32 %v716, %v739
  %v783 = vmul.f32 %v717, %v739
  %v784 = vmul.f32 %v718, %v739
  %v785 = vmul.f32 %v719, %v739
  %v786 = vmul.f32 %v720, %v739
  %v787 = vmul.f32 %v721, %v739
  %v788 = vmul.f32 %v722, %v739
  %v789 = vmul.f32 %v723, %v739
  %v790 = vmul.f32 %v724, %v739
  %v791 = vmul.f32 %v725, %v739
  %v792 = vmul.f32 %v726, %v739
  %v793 = vmul.f32 %v727, %v739
  %v794 = vmul.f32 %v728, %v739
  %v795 = vmul.f32 %v729, %v739
  %v796 = vmul.f32 %v730, %v739
  %v797 = vmul.f32 %v731, %v739
  %v798 = vmul.f32 %v732, %v739
  %v799 = vmul.f32 %v733, %v739
  %v800 = vmul.f32 %v734, %v739
  %v801 = vmul.f32 %v735, %v739
  %v802 = vmul.f32 %v736, %v739
  %v803 = vmul.f32 %v737, %v739
  %v804 = vmax.f32 %v740, 0.0
  %v805 = vmax.f32 %v741, 0.0
  %v806 = vmax.f32 %v742, 0.0
  %v807 = vmax.f32 %v743, 0.0
  %v808 = vmax.f32 %v744, 0.0
  %v809 = vmax.f32 %v745, 0.0
  %v810 = vmax.f32 %v746, 0.0
  %v811 = vmax.f32 %v747, 0.0
  %v812 = vmax.f32 %v748, 0.0
  %v813 = vmax.f32 %v749, 0.0
  %v814 = vmax.f32 %v750, 0.0
  %v815 = vmax.f32 %v751, 0.0
  %v816 = vmax.f32 %v752, 0.0
  %v817 = vmax.f32 %v753, 0.0
  %v818 = vmax.f32 %v754, 0.0
  %v819 = vmax.f32 %v755, 0.0
  %v820 = vmax.f32 %v756, 0.0
  %v821 = vmax.f32 %v757, 0.0
  %v822 = vmax.f32 %v758, 0.0
  %v823 = vmax.f32 %v759, 0.0
  %v824 = vmax.f32 %v760, 0.0
  %v825 = vmax.f32 %v761, 0.0
  %v826 = vmax.f32 %v762, 0.0
  %v827 = vmax.f32 %v763, 0.0
  %v828 = vmax.f32 %v764, 0.0
  %v829 = vmax.f32 %v765, 0.0
  %v830 = vmax.f32 %v766, 0.0
  %v831 = vmax.f32 %v767, 0.0
  %v832 = vmax.f32 %v768, 0.0
  %v833 = vmax.f32 %v769, 0.0
  %v834 = vmax.f32 %v770, 0.0
  %v835 = vmax.f32 %v771, 0.0
  %v836 = vmax.f32 %v772, 0.0
  %v837 = vmax.f32 %v773, 0.0
  %v838 = vmax.f32 %v774, 0.0
  %v839 = vmax.f32 %v775, 0.0
  %v840 = vmax.f32 %v776, 0.0
  %v841 = vmax.f32 %v777, 0.0
  %v842 = vmax.f32 %v778, 0.0
  %v843 = vmax.f32 %v779, 0.0
  %v844 = vmax.f32 %v780, 0.0
  %v845 = vmax.f32 %v781, 0.0
  %v846 = vmax.f32 %v782, 0.0
  %v847 = vmax.f32 %v783, 0.0
  %v848 = vmax.f32 %v784, 0.0
  %v849 = vmax.f32 %v785, 0.0
  %v850 = vmax.f32 %v786, 0.0
  %v851 = vmax.f32 %v787, 0.0
  %v852 = vmax.f32 %v788, 0.0
  %v853 = vmax.f32 %v789, 0.0
  %v854 = vmax.f32 %v790, 0.0
  %v855 = vmax.f32 %v791, 0.0
  %v856 = vmax.f32 %v792, 0.0
  %v857 = vmax.f32 %v793, 0.0
  %v858 = vmax.f32 %v794, 0.0
  %v859 = vmax.f32 %v795, 0.0
  %v860 = vmax.f32 %v796, 0.0
  %v861 = vmax.f32 %v797, 0.0
  %v862 = vmax.f32 %v798, 0.0
  %v863 = vmax.f32 %v799, 0.0
  %v864 = vmax.f32 %v800, 0.0
  %v865 = vmax.f32 %v801, 0.0
  %v866 = vmax.f32 %v802, 0.0
  %v867 = vmax.f32 %v803, 0.0
  %v868 = vmin.f32 %v804, 6.0
  %v869 = vmin.f32 %v805, 6.0
  %v870 = vmin.f32 %v806, 6.0
  %v871 = vmin.f32 %v807, 6.0
  %v872 = vmin.f32 %v808, 6.0
  %v873 = vmin.f32 %v809, 6.0
  %v874 = vmin.f32 %v810, 6.0
  %v875 = vmin.f32 %v811, 6.0
  %v876 = vmin.f32 %v812, 6.0
  %v877 = vmin.f32 %v813, 6.0
  %v878 = vmin.f32 %v814, 6.0
  %v879 = vmin.f32 %v815, 6.0
  %v880 = vmin.f32 %v816, 6.0
  %v881 = vmin.f32 %v817, 6.0
  %v882 = vmin.f32 %v818, 6.0
  %v883 = vmin.f32 %v819, 6.0
  %v884 = vmin.f32 %v820, 6.0
  %v885 = vmin.f32 %v821, 6.0
  %v886 = vmin.f32 %v822, 6.0
  %v887 = vmin.f32 %v823, 6.0
  %v888 = vmin.f32 %v824, 6.0
  %v889 = vmin.f32 %v825, 6.0
  %v890 = vmin.f32 %v826, 6.0
  %v891 = vmin.f32 %v827, 6.0
  %v892 = vmin.f32 %v828, 6.0
  %v893 = vmin.f32 %v829, 6.0
  %v894 = vmin.f32 %v830, 6.0
  %v895 = vmin.f32 %v831, 6.0
  %v896 = vmin.f32 %v832, 6.0
  %v897 = vmin.f32 %v833, 6.0
  %v898 = vmin.f32 %v834, 6.0
  %v899 = vmin.f32 %v835, 6.0
  %v900 = vmin.f32 %v836, 6.0
  %v901 = vmin.f32 %v837, 6.0
  %v902 = vmin.f32 %v838, 6.0
  %v903 = vmin.f32 %v839, 6.0
  %v904 = vmin.f32 %v840, 6.0
  %v905 = vmin.f32 %v841, 6.0
  %v906 = vmin.f32 %v842, 6.0
  %v907 = vmin.f32 %v843, 6.0
  %v908 = vmin.f32 %v844, 6.0
  %v909 = vmin.f32 %v845, 6.0
  %v910 = vmin.f32 %v846, 6.0
  %v911 = vmin.f32 %v847, 6.0
  %v912 = vmin.f32 %v848, 6.0
  %v913 = vmin.f32 %v849, 6.0
  %v914 = vmin.f32 %v850, 6.0
  %v915 = vmin.f32 %v851, 6.0
  %v916 = vmin.f32 %v852, 6.0
  %v917 = vmin.f32 %v853, 6.0
  %v918 = vmin.f32 %v854, 6.0
  %v919 = vmin.f32 %v855, 6.0
  %v920 = vmin.f32 %v856, 6.0
  %v921 = vmin.f32 %v857, 6.0
  %v922 = vmin.f32 %v858, 6.0
  %v923 = vmin.f32 %v859, 6.0
  %v924 = vmin.f32 %v860, 6.0
  %v925 = vmin.f32 %v861, 6.0
  %v926 = vmin.f32 %v862, 6.0
  %v927 = vmin.f32 %v863, 6.0
  %v928 = vmin.f32 %v864, 6.0
  %v929 = vmin.f32 %v865, 6.0
  %v930 = vmin.f32 %v866, 6.0
  %v931 = vmin.f32 %v867, 6.0
  %932 = vst [vmem:[#allocation2] sm:$0xff] 0.0
  %933 = vst [vmem:[#allocation2 + $0x8] sm:$0xff] 0.0
  %934 = vst [vmem:[#allocation2 + $0x10] sm:$0xff] 0.0
  %935 = vst [vmem:[#allocation2 + $0x18] sm:$0xff] 0.0
  %936 = vst [vmem:[#allocation2 + $0x20] sm:$0xff] 0.0
  %937 = vst [vmem:[#allocation2 + $0x28] sm:$0xff] 0.0
  %938 = vst [vmem:[#allocation2 + $0x30] sm:$0xff] 0.0
  %939 = vst [vmem:[#allocation2 + $0x38] sm:$0xff] 0.0
  %940 = vst [vmem:[#allocation2 + $0x40] sm:$0xff] 0.0
  %941 = vst [vmem:[#allocation2 + $0x48] sm:$0xff] 0.0
  %942 = vst [vmem:[#allocation2 + $0x50] sm:$0xff] 0.0
  %943 = vst [vmem:[#allocation2 + $0x58] sm:$0xff] 0.0
  %944 = vst [vmem:[#allocation2 + $0x60] sm:$0xff] 0.0
  %945 = vst [vmem:[#allocation2 + $0x68] sm:$0xff] 0.0
  %946 = vst [vmem:[#allocation2 + $0x70] sm:$0xff] 0.0
  %947 = vst [vmem:[#allocation2 + $0x78] sm:$0xff] 0.0
  %948 = vst [vmem:[#allocation2 + $0x80] sm:$0xff] 0.0
  %949 = vst [vmem:[#allocation2 + $0x88] sm:$0xff] 0.0
  %950 = vst [vmem:[#allocation2 + $0x90] sm:$0xff] 0.0
  %951 = vst [vmem:[#allocation2 + $0x98] sm:$0xff] 0.0
  %952 = vst [vmem:[#allocation2 + $0xa0] sm:$0xff] 0.0
  %953 = vst [vmem:[#allocation2 + $0xa8] sm:$0xff] 0.0
  %954 = vst [vmem:[#allocation2 + $0xb0] sm:$0xff] 0.0
  %955 = vst [vmem:[#allocation2 + $0xb8] sm:$0xff] 0.0
  %956 = vst [vmem:[#allocation2 + $0xc0] sm:$0xff] 0.0
  %957 = vst [vmem:[#allocation2 + $0xc8] sm:$0xff] 0.0
  %958 = vst [vmem:[#allocation2 + $0xd0] sm:$0xff] 0.0
  %959 = vst [vmem:[#allocation2 + $0xd8] sm:$0xff] 0.0
  %960 = vst [vmem:[#allocation2 + $0xe0] sm:$0xff] 0.0
  %961 = vst [vmem:[#allocation2 + $0xe8] sm:$0xff] 0.0
  %962 = vst [vmem:[#allocation2 + $0xf0] sm:$0xff] 0.0
  %963 = vst [vmem:[#allocation2 + $0xf8] sm:$0xff] 0.0
  %964 = vst [vmem:[#allocation2 + $0x100] sm:$0xff] 0.0
  %965 = vst [vmem:[#allocation2 + $0x108] sm:$0xff] 0.0
  %966 = vst [vmem:[#allocation2 + $0x110] sm:$0xff] 0.0
  %967 = vst [vmem:[#allocation2 + $0x118] sm:$0xff] 0.0
  %968 = vst [vmem:[#allocation2 + $0x120] sm:$0xff] 0.0
  %969 = vst [vmem:[#allocation2 + $0x128] sm:$0xff] 0.0
  %970 = vst [vmem:[#allocation2 + $0x130] sm:$0xff] 0.0
  %971 = vst [vmem:[#allocation2 + $0x138] sm:$0xff] 0.0
  %972 = vst [vmem:[#allocation2 + $0x140] sm:$0xff] 0.0
  %973 = vst [vmem:[#allocation2 + $0x148] sm:$0xff] 0.0
  %974 = vst [vmem:[#allocation2 + $0x150] sm:$0xff] 0.0
  %975 = vst [vmem:[#allocation2 + $0x158] sm:$0xff] 0.0
  %976 = vst [vmem:[#allocation2 + $0x160] sm:$0xff] 0.0
  %977 = vst [vmem:[#allocation2 + $0x168] sm:$0xff] 0.0
  %978 = vst [vmem:[#allocation2 + $0x170] sm:$0xff] 0.0
  %979 = vst [vmem:[#allocation2 + $0x178] sm:$0xff] 0.0
  %980 = vst [vmem:[#allocation2 + $0x180] sm:$0xff] 0.0
  %981 = vst [vmem:[#allocation2 + $0x188] sm:$0xff] 0.0
  %982 = vst [vmem:[#allocation2 + $0x190] sm:$0xff] 0.0
  %983 = vst [vmem:[#allocation2 + $0x198] sm:$0xff] 0.0
  %984 = vst [vmem:[#allocation2 + $0x1a0] sm:$0xff] 0.0
  %985 = vst [vmem:[#allocation2 + $0x1a8] sm:$0xff] 0.0
  %986 = vst [vmem:[#allocation2 + $0x1b0] sm:$0xff] 0.0
  %987 = vst [vmem:[#allocation2 + $0x1b8] sm:$0xff] 0.0
  %988 = vst [vmem:[#allocation2 + $0x1c0] sm:$0xff] 0.0
  %989 = vst [vmem:[#allocation2 + $0x1c8] sm:$0xff] 0.0
  %990 = vst [vmem:[#allocation2 + $0x1d0] sm:$0xff] 0.0
  %991 = vst [vmem:[#allocation2 + $0x1d8] sm:$0xff] 0.0
  %992 = vst [vmem:[#allocation2 + $0x1e0] sm:$0xff] 0.0
  %993 = vst [vmem:[#allocation2 + $0x1e8] sm:$0xff] 0.0
  %994 = vst [vmem:[#allocation2 + $0x1f0] sm:$0xff] 0.0
  %995 = vst [vmem:[#allocation2 + $0x1f8] sm:$0xff] 0.0
  %996 = vst [vmem:[#allocation2 + $0x200] sm:$0xff] 0.0
  %997 = vst [vmem:[#allocation2 + $0x208] sm:$0xff] 0.0
  %998 = vst [vmem:[#allocation2 + $0x210] sm:$0xff] 0.0
  %999 = vst [vmem:[#allocation2 + $0x218] sm:$0xff] 0.0
  %1000 = vst [vmem:[#allocation2 + $0x220] sm:$0xff] 0.0
  %1001 = vst [vmem:[#allocation2 + $0x228] sm:$0xff] 0.0
  %1002 = vst [vmem:[#allocation2 + $0x230] sm:$0xff] 0.0
  %1003 = vst [vmem:[#allocation2 + $0x238] sm:$0xff] 0.0
  %1004 = vst [vmem:[#allocation2 + $0x240] sm:$0xff] 0.0
  %1005 = vst [vmem:[#allocation2 + $0x248] sm:$0xff] 0.0
  %1006 = vst [vmem:[#allocation2 + $0x250] sm:$0xff] 0.0
  %1007 = vst [vmem:[#allocation2 + $0x258] sm:$0xff] 0.0
  %1008 = vst [vmem:[#allocation2 + $0x260] sm:$0xff] 0.0
  %1009 = vst [vmem:[#allocation2 + $0x268] sm:$0xff] 0.0
  %1010 = vst [vmem:[#allocation2 + $0x270] sm:$0xff] 0.0
  %1011 = vst [vmem:[#allocation2 + $0x278] sm:$0xff] 0.0
  %1012 = vst [vmem:[#allocation2 + $0x280] sm:$0xff] 0.0
  %1013 = vst [vmem:[#allocation2 + $0x288] sm:$0xff] 0.0
  %1014 = vst [vmem:[#allocation2 + $0x290] sm:$0xff] 0.0
  %1015 = vst [vmem:[#allocation2 + $0x298] sm:$0xff] 0.0
  %1016 = vst [vmem:[#allocation2 + $0x2a0] sm:$0xff] 0.0
  %1017 = vst [vmem:[#allocation2 + $0x2a8] sm:$0xff] 0.0
  %1018 = vst [vmem:[#allocation2 + $0x2b0] sm:$0xff] 0.0
  %1019 = vst [vmem:[#allocation2 + $0x2b8] sm:$0xff] 0.0
  %1020 = vst [vmem:[#allocation2 + $0x2c0] sm:$0xff] 0.0
  %1021 = vst [vmem:[#allocation2 + $0x2c8] sm:$0xff] 0.0
  %1022 = vst [vmem:[#allocation2 + $0x2d0] sm:$0xff] 0.0
  %1023 = vst [vmem:[#allocation2 + $0x2d8] sm:$0xff] 0.0
  %1024 = vst [vmem:[#allocation2 + $0x2e0] sm:$0xff] 0.0
  %1025 = vst [vmem:[#allocation2 + $0x2e8] sm:$0xff] 0.0
  %1026 = vst [vmem:[#allocation2 + $0x2f0] sm:$0xff] 0.0
  %1027 = vst [vmem:[#allocation2 + $0x2f8] sm:$0xff] 0.0
  %1028 = vst [vmem:[#allocation2 + $0x300] sm:$0xff] 0.0
  %1029 = vst [vmem:[#allocation2 + $0x308] sm:$0xff] 0.0
  %1030 = vst [vmem:[#allocation2 + $0x310] sm:$0xff] 0.0
  %1031 = vst [vmem:[#allocation2 + $0x318] sm:$0xff] 0.0
  %1032 = vst [vmem:[#allocation2 + $0x320] sm:$0xff] 0.0
  %1033 = vst [vmem:[#allocation2 + $0x328] sm:$0xff] 0.0
  %1034 = vst [vmem:[#allocation2 + $0x330] sm:$0xff] 0.0
  %1035 = vst [vmem:[#allocation2 + $0x338] sm:$0xff] 0.0
  %1036 = vst [vmem:[#allocation2 + $0x340] sm:$0xff] 0.0
  %1037 = vst [vmem:[#allocation2 + $0x348] sm:$0xff] 0.0
  %1038 = vst [vmem:[#allocation2 + $0x350] sm:$0xff] 0.0
  %1039 = vst [vmem:[#allocation2 + $0x358] sm:$0xff] 0.0
  %1040 = vst [vmem:[#allocation2 + $0x360] sm:$0xff] 0.0
  %1041 = vst [vmem:[#allocation2 + $0x368] sm:$0xff] 0.0
  %1042 = vst [vmem:[#allocation2 + $0x370] sm:$0xff] 0.0
  %1043 = vst [vmem:[#allocation2 + $0x378] sm:$0xff] 0.0
  %1044 = vst [vmem:[#allocation2 + $0x380] sm:$0xff] 0.0
  %1045 = vst [vmem:[#allocation2 + $0x388] sm:$0xff] 0.0
  %1046 = vst [vmem:[#allocation2 + $0x390] sm:$0xff] 0.0
  %1047 = vst [vmem:[#allocation2 + $0x398] sm:$0xff] 0.0
  %1048 = vst [vmem:[#allocation2 + $0x3a0] sm:$0xff] 0.0
  %1049 = vst [vmem:[#allocation2 + $0x3a8] sm:$0xff] 0.0
  %1050 = vst [vmem:[#allocation2 + $0x3b0] sm:$0xff] 0.0
  %1051 = vst [vmem:[#allocation2 + $0x3b8] sm:$0xff] 0.0
  %1052 = vst [vmem:[#allocation2 + $0x3c0] sm:$0xff] 0.0
  %1053 = vst [vmem:[#allocation2 + $0x3c8] sm:$0xff] 0.0
  %1054 = vst [vmem:[#allocation2 + $0x3d0] sm:$0xff] 0.0
  %1055 = vst [vmem:[#allocation2 + $0x3d8] sm:$0xff] 0.0
  %1056 = vst [vmem:[#allocation2 + $0x3e0] sm:$0xff] 0.0
  %1057 = vst [vmem:[#allocation2 + $0x3e8] sm:$0xff] 0.0
  %1058 = vst [vmem:[#allocation2 + $0x3f0] sm:$0xff] 0.0
  %1059 = vst [vmem:[#allocation2 + $0x3f8] sm:$0xff] 0.0
  %1060 = vst [vmem:[#allocation2 + $0x400] sm:$0xff] 0.0
  %1061 = vst [vmem:[#allocation2 + $0x408] sm:$0xff] 0.0
  %1062 = vst [vmem:[#allocation2 + $0x410] sm:$0xff] 0.0
  %1063 = vst [vmem:[#allocation2 + $0x418] sm:$0xff] 0.0
  %1064 = vst [vmem:[#allocation2 + $0x420] sm:$0xff] 0.0
  %1065 = vst [vmem:[#allocation2 + $0x428] sm:$0xff] 0.0
  %1066 = vst [vmem:[#allocation2 + $0x430] sm:$0xff] 0.0
  %1067 = vst [vmem:[#allocation2 + $0x438] sm:$0xff] 0.0
  %1068 = vst [vmem:[#allocation2 + $0x440] sm:$0xff] 0.0
  %1069 = vst [vmem:[#allocation2 + $0x448] sm:$0xff] 0.0
  %1070 = vst [vmem:[#allocation2 + $0x450] sm:$0xff] 0.0
  %1071 = vst [vmem:[#allocation2 + $0x458] sm:$0xff] 0.0
  %1072 = vst [vmem:[#allocation2 + $0x460] sm:$0xff] 0.0
  %1073 = vst [vmem:[#allocation2 + $0x468] sm:$0xff] 0.0
  %1074 = vst [vmem:[#allocation2 + $0x470] sm:$0xff] 0.0
  %1075 = vst [vmem:[#allocation2 + $0x478] sm:$0xff] 0.0
  %s1076 = scalar_lea.vmem [#allocation2], 32
  %1077 = vst [vmem:[%s1076 + $0x8] sm:$0xff] %v868
  %1078 = vst [vmem:[%s1076 + $0x10] sm:$0xff] %v869
  %1079 = vst [vmem:[%s1076 + $0x28] sm:$0xff] %v870
  %1080 = vst [vmem:[%s1076 + $0x30] sm:$0xff] %v871
  %1081 = vst [vmem:[%s1076 + $0x48] sm:$0xff] %v872
  %1082 = vst [vmem:[%s1076 + $0x50] sm:$0xff] %v873
  %1083 = vst [vmem:[%s1076 + $0x68] sm:$0xff] %v874
  %1084 = vst [vmem:[%s1076 + $0x70] sm:$0xff] %v875
  %1085 = vst [vmem:[%s1076 + $0x88] sm:$0xff] %v876
  %1086 = vst [vmem:[%s1076 + $0x90] sm:$0xff] %v877
  %1087 = vst [vmem:[%s1076 + $0xa8] sm:$0xff] %v878
  %1088 = vst [vmem:[%s1076 + $0xb0] sm:$0xff] %v879
  %1089 = vst [vmem:[%s1076 + $0xc8] sm:$0xff] %v880
  %1090 = vst [vmem:[%s1076 + $0xd0] sm:$0xff] %v881
  %1091 = vst [vmem:[%s1076 + $0xe8] sm:$0xff] %v882
  %1092 = vst [vmem:[%s1076 + $0xf0] sm:$0xff] %v883
  %1093 = vst [vmem:[%s1076 + $0x108] sm:$0xff] %v884
  %1094 = vst [vmem:[%s1076 + $0x110] sm:$0xff] %v885
  %1095 = vst [vmem:[%s1076 + $0x128] sm:$0xff] %v886
  %1096 = vst [vmem:[%s1076 + $0x130] sm:$0xff] %v887
  %1097 = vst [vmem:[%s1076 + $0x148] sm:$0xff] %v888
  %1098 = vst [vmem:[%s1076 + $0x150] sm:$0xff] %v889
  %1099 = vst [vmem:[%s1076 + $0x168] sm:$0xff] %v890
  %1100 = vst [vmem:[%s1076 + $0x170] sm:$0xff] %v891
  %1101 = vst [vmem:[%s1076 + $0x188] sm:$0xff] %v892
  %1102 = vst [vmem:[%s1076 + $0x190] sm:$0xff] %v893
  %1103 = vst [vmem:[%s1076 + $0x1a8] sm:$0xff] %v894
  %1104 = vst [vmem:[%s1076 + $0x1b0] sm:$0xff] %v895
  %1105 = vst [vmem:[%s1076 + $0x1c8] sm:$0xff] %v896
  %1106 = vst [vmem:[%s1076 + $0x1d0] sm:$0xff] %v897
  %1107 = vst [vmem:[%s1076 + $0x1e8] sm:$0xff] %v898
  %1108 = vst [vmem:[%s1076 + $0x1f0] sm:$0xff] %v899
  %1109 = vst [vmem:[%s1076 + $0x248] sm:$0xff] %v900
  %1110 = vst [vmem:[%s1076 + $0x250] sm:$0xff] %v901
  %1111 = vst [vmem:[%s1076 + $0x268] sm:$0xff] %v902
  %1112 = vst [vmem:[%s1076 + $0x270] sm:$0xff] %v903
  %1113 = vst [vmem:[%s1076 + $0x288] sm:$0xff] %v904
  %1114 = vst [vmem:[%s1076 + $0x290] sm:$0xff] %v905
  %1115 = vst [vmem:[%s1076 + $0x2a8] sm:$0xff] %v906
  %1116 = vst [vmem:[%s1076 + $0x2b0] sm:$0xff] %v907
  %1117 = vst [vmem:[%s1076 + $0x2c8] sm:$0xff] %v908
  %1118 = vst [vmem:[%s1076 + $0x2d0] sm:$0xff] %v909
  %1119 = vst [vmem:[%s1076 + $0x2e8] sm:$0xff] %v910
  %1120 = vst [vmem:[%s1076 + $0x2f0] sm:$0xff] %v911
  %1121 = vst [vmem:[%s1076 + $0x308] sm:$0xff] %v912
  %1122 = vst [vmem:[%s1076 + $0x310] sm:$0xff] %v913
  %1123 = vst [vmem:[%s1076 + $0x328] sm:$0xff] %v914
  %1124 = vst [vmem:[%s1076 + $0x330] sm:$0xff] %v915
  %1125 = vst [vmem:[%s1076 + $0x348] sm:$0xff] %v916
  %1126 = vst [vmem:[%s1076 + $0x350] sm:$0xff] %v917
  %1127 = vst [vmem:[%s1076 + $0x368] sm:$0xff] %v918
  %1128 = vst [vmem:[%s1076 + $0x370] sm:$0xff] %v919
  %1129 = vst [vmem:[%s1076 + $0x388] sm:$0xff] %v920
  %1130 = vst [vmem:[%s1076 + $0x390] sm:$0xff] %v921
  %1131 = vst [vmem:[%s1076 + $0x3a8] sm:$0xff] %v922
  %1132 = vst [vmem:[%s1076 + $0x3b0] sm:$0xff] %v923
  %1133 = vst [vmem:[%s1076 + $0x3c8] sm:$0xff] %v924
  %1134 = vst [vmem:[%s1076 + $0x3d0] sm:$0xff] %v925
  %1135 = vst [vmem:[%s1076 + $0x3e8] sm:$0xff] %v926
  %1136 = vst [vmem:[%s1076 + $0x3f0] sm:$0xff] %v927
  %1137 = vst [vmem:[%s1076 + $0x408] sm:$0xff] %v928
  %1138 = vst [vmem:[%s1076 + $0x410] sm:$0xff] %v929
  %1139 = vst [vmem:[%s1076 + $0x428] sm:$0xff] %v930
  %1140 = vst [vmem:[%s1076 + $0x430] sm:$0xff] %v931
  %v1141 = vld [vmem:[#allocation2] sm:$0xff]
  %v1142 = vld [vmem:[#allocation2 + $0x8] sm:$0xff]
  %v1143 = vld [vmem:[#allocation2 + $0x10] sm:$0xff]
  %v1144 = vld [vmem:[#allocation2 + $0x18] sm:$0xff]
  %v1145 = vld [vmem:[#allocation2 + $0x20] sm:$0xff]
  %v1146 = vld [vmem:[#allocation2 + $0x28] sm:$0xff]
  %v1147 = vld [vmem:[#allocation2 + $0x30] sm:$0xff]
  %v1148 = vld [vmem:[#allocation2 + $0x38] sm:$0xff]
  %v1149 = vld [vmem:[#allocation2 + $0x40] sm:$0xff]
  %v1150 = vld [vmem:[#allocation2 + $0x48] sm:$0xff]
  %v1151 = vld [vmem:[#allocation2 + $0x50] sm:$0xff]
  %v1152 = vld [vmem:[#allocation2 + $0x58] sm:$0xff]
  %v1153 = vld [vmem:[#allocation2 + $0x60] sm:$0xff]
  %v1154 = vld [vmem:[#allocation2 + $0x68] sm:$0xff]
  %v1155 = vld [vmem:[#allocation2 + $0x70] sm:$0xff]
  %v1156 = vld [vmem:[#allocation2 + $0x78] sm:$0xff]
  %v1157 = vld [vmem:[#allocation2 + $0x80] sm:$0xff]
  %v1158 = vld [vmem:[#allocation2 + $0x88] sm:$0xff]
  %v1159 = vld [vmem:[#allocation2 + $0x90] sm:$0xff]
  %v1160 = vld [vmem:[#allocation2 + $0x98] sm:$0xff]
  %v1161 = vld [vmem:[#allocation2 + $0xa0] sm:$0xff]
  %v1162 = vld [vmem:[#allocation2 + $0xa8] sm:$0xff]
  %v1163 = vld [vmem:[#allocation2 + $0xb0] sm:$0xff]
  %v1164 = vld [vmem:[#allocation2 + $0xb8] sm:$0xff]
  %v1165 = vld [vmem:[#allocation2 + $0xc0] sm:$0xff]
  %v1166 = vld [vmem:[#allocation2 + $0xc8] sm:$0xff]
  %v1167 = vld [vmem:[#allocation2 + $0xd0] sm:$0xff]
  %v1168 = vld [vmem:[#allocation2 + $0xd8] sm:$0xff]
  %v1169 = vld [vmem:[#allocation2 + $0xe0] sm:$0xff]
  %v1170 = vld [vmem:[#allocation2 + $0xe8] sm:$0xff]
  %v1171 = vld [vmem:[#allocation2 + $0xf0] sm:$0xff]
  %v1172 = vld [vmem:[#allocation2 + $0xf8] sm:$0xff]
  %v1173 = vld [vmem:[#allocation2 + $0x100] sm:$0xff]
  %v1174 = vld [vmem:[#allocation2 + $0x108] sm:$0xff]
  %v1175 = vld [vmem:[#allocation2 + $0x110] sm:$0xff]
  %v1176 = vld [vmem:[#allocation2 + $0x118] sm:$0xff]
  %v1177 = vld [vmem:[#allocation2 + $0x120] sm:$0xff]
  %v1178 = vld [vmem:[#allocation2 + $0x128] sm:$0xff]
  %v1179 = vld [vmem:[#allocation2 + $0x130] sm:$0xff]
  %v1180 = vld [vmem:[#allocation2 + $0x138] sm:$0xff]
  %v1181 = vld [vmem:[#allocation2 + $0x140] sm:$0xff]
  %v1182 = vld [vmem:[#allocation2 + $0x148] sm:$0xff]
  %v1183 = vld [vmem:[#allocation2 + $0x150] sm:$0xff]
  %v1184 = vld [vmem:[#allocation2 + $0x158] sm:$0xff]
  %v1185 = vld [vmem:[#allocation2 + $0x160] sm:$0xff]
  %v1186 = vld [vmem:[#allocation2 + $0x168] sm:$0xff]
  %v1187 = vld [vmem:[#allocation2 + $0x170] sm:$0xff]
  %v1188 = vld [vmem:[#allocation2 + $0x178] sm:$0xff]
  %v1189 = vld [vmem:[#allocation2 + $0x180] sm:$0xff]
  %v1190 = vld [vmem:[#allocation2 + $0x188] sm:$0xff]
  %v1191 = vld [vmem:[#allocation2 + $0x190] sm:$0xff]
  %v1192 = vld [vmem:[#allocation2 + $0x198] sm:$0xff]
  %v1193 = vld [vmem:[#allocation2 + $0x1a0] sm:$0xff]
  %v1194 = vld [vmem:[#allocation2 + $0x1a8] sm:$0xff]
  %v1195 = vld [vmem:[#allocation2 + $0x1b0] sm:$0xff]
  %v1196 = vld [vmem:[#allocation2 + $0x1b8] sm:$0xff]
  %v1197 = vld [vmem:[#allocation2 + $0x1c0] sm:$0xff]
  %v1198 = vld [vmem:[#allocation2 + $0x1c8] sm:$0xff]
  %v1199 = vld [vmem:[#allocation2 + $0x1d0] sm:$0xff]
  %v1200 = vld [vmem:[#allocation2 + $0x1d8] sm:$0xff]
  %v1201 = vld [vmem:[#allocation2 + $0x1e0] sm:$0xff]
  %v1202 = vld [vmem:[#allocation2 + $0x1e8] sm:$0xff]
  %v1203 = vld [vmem:[#allocation2 + $0x1f0] sm:$0xff]
  %v1204 = vld [vmem:[#allocation2 + $0x1f8] sm:$0xff]
  %v1205 = vld [vmem:[#allocation2 + $0x240] sm:$0xff]
  %v1206 = vld [vmem:[#allocation2 + $0x248] sm:$0xff]
  %v1207 = vld [vmem:[#allocation2 + $0x250] sm:$0xff]
  %v1208 = vld [vmem:[#allocation2 + $0x258] sm:$0xff]
  %v1209 = vld [vmem:[#allocation2 + $0x260] sm:$0xff]
  %v1210 = vld [vmem:[#allocation2 + $0x268] sm:$0xff]
  %v1211 = vld [vmem:[#allocation2 + $0x270] sm:$0xff]
  %v1212 = vld [vmem:[#allocation2 + $0x278] sm:$0xff]
  %v1213 = vld [vmem:[#allocation2 + $0x280] sm:$0xff]
  %v1214 = vld [vmem:[#allocation2 + $0x288] sm:$0xff]
  %v1215 = vld [vmem:[#allocation2 + $0x290] sm:$0xff]
  %v1216 = vld [vmem:[#allocation2 + $0x298] sm:$0xff]
  %v1217 = vld [vmem:[#allocation2 + $0x2a0] sm:$0xff]
  %v1218 = vld [vmem:[#allocation2 + $0x2a8] sm:$0xff]
  %v1219 = vld [vmem:[#allocation2 + $0x2b0] sm:$0xff]
  %v1220 = vld [vmem:[#allocation2 + $0x2b8] sm:$0xff]
  %v1221 = vld [vmem:[#allocation2 + $0x2c0] sm:$0xff]
  %v1222 = vld [vmem:[#allocation2 + $0x2c8] sm:$0xff]
  %v1223 = vld [vmem:[#allocation2 + $0x2d0] sm:$0xff]
  %v1224 = vld [vmem:[#allocation2 + $0x2d8] sm:$0xff]
  %v1225 = vld [vmem:[#allocation2 + $0x2e0] sm:$0xff]
  %v1226 = vld [vmem:[#allocation2 + $0x2e8] sm:$0xff]
  %v1227 = vld [vmem:[#allocation2 + $0x2f0] sm:$0xff]
  %v1228 = vld [vmem:[#allocation2 + $0x2f8] sm:$0xff]
  %v1229 = vld [vmem:[#allocation2 + $0x300] sm:$0xff]
  %v1230 = vld [vmem:[#allocation2 + $0x308] sm:$0xff]
  %v1231 = vld [vmem:[#allocation2 + $0x310] sm:$0xff]
  %v1232 = vld [vmem:[#allocation2 + $0x318] sm:$0xff]
  %v1233 = vld [vmem:[#allocation2 + $0x320] sm:$0xff]
  %v1234 = vld [vmem:[#allocation2 + $0x328] sm:$0xff]
  %v1235 = vld [vmem:[#allocation2 + $0x330] sm:$0xff]
  %v1236 = vld [vmem:[#allocation2 + $0x338] sm:$0xff]
  %v1237 = vld [vmem:[#allocation2 + $0x340] sm:$0xff]
  %v1238 = vld [vmem:[#allocation2 + $0x348] sm:$0xff]
  %v1239 = vld [vmem:[#allocation2 + $0x350] sm:$0xff]
  %v1240 = vld [vmem:[#allocation2 + $0x358] sm:$0xff]
  %v1241 = vld [vmem:[#allocation2 + $0x360] sm:$0xff]
  %v1242 = vld [vmem:[#allocation2 + $0x368] sm:$0xff]
  %v1243 = vld [vmem:[#allocation2 + $0x370] sm:$0xff]
  %v1244 = vld [vmem:[#allocation2 + $0x378] sm:$0xff]
  %v1245 = vld [vmem:[#allocation2 + $0x380] sm:$0xff]
  %v1246 = vld [vmem:[#allocation2 + $0x388] sm:$0xff]
  %v1247 = vld [vmem:[#allocation2 + $0x390] sm:$0xff]
  %v1248 = vld [vmem:[#allocation2 + $0x398] sm:$0xff]
  %v1249 = vld [vmem:[#allocation2 + $0x3a0] sm:$0xff]
  %v1250 = vld [vmem:[#allocation2 + $0x3a8] sm:$0xff]
  %v1251 = vld [vmem:[#allocation2 + $0x3b0] sm:$0xff]
  %v1252 = vld [vmem:[#allocation2 + $0x3b8] sm:$0xff]
  %v1253 = vld [vmem:[#allocation2 + $0x3c0] sm:$0xff]
  %v1254 = vld [vmem:[#allocation2 + $0x3c8] sm:$0xff]
  %v1255 = vld [vmem:[#allocation2 + $0x3d0] sm:$0xff]
  %v1256 = vld [vmem:[#allocation2 + $0x3d8] sm:$0xff]
  %v1257 = vld [vmem:[#allocation2 + $0x3e0] sm:$0xff]
  %v1258 = vld [vmem:[#allocation2 + $0x3e8] sm:$0xff]
  %v1259 = vld [vmem:[#allocation2 + $0x3f0] sm:$0xff]
  %v1260 = vld [vmem:[#allocation2 + $0x3f8] sm:$0xff]
  %v1261 = vld [vmem:[#allocation2 + $0x400] sm:$0xff]
  %v1262 = vld [vmem:[#allocation2 + $0x408] sm:$0xff]
  %v1263 = vld [vmem:[#allocation2 + $0x410] sm:$0xff]
  %v1264 = vld [vmem:[#allocation2 + $0x418] sm:$0xff]
  %v1265 = vld [vmem:[#allocation2 + $0x420] sm:$0xff]
  %v1266 = vld [vmem:[#allocation2 + $0x428] sm:$0xff]
  %v1267 = vld [vmem:[#allocation2 + $0x430] sm:$0xff]
  %v1268 = vld [vmem:[#allocation2 + $0x438] sm:$0xff]
  %v1269 = vld [vmem:[%s2] sm:$0x1]
  %v1270 = vlaneseq
  %v1271 = vshrl.u32 %v1270, 7
  %v1272 = vsub.s32 0, %v1271
  %v1273 = vrot.slane %v1269, %v1272
  %v1274 = vmul.f32 %v1141, %v1273
  %v1275 = vmul.f32 %v1142, %v1273
  %v1276 = vmul.f32 %v1143, %v1273
  %v1277 = vmul.f32 %v1145, %v1273
  %v1278 = vmul.f32 %v1146, %v1273
  %v1279 = vmul.f32 %v1147, %v1273
  %v1280 = vmul.f32 %v1149, %v1273
  %v1281 = vmul.f32 %v1150, %v1273
  %v1282 = vmul.f32 %v1151, %v1273
  %v1283 = vmul.f32 %v1153, %v1273
  %v1284 = vmul.f32 %v1154, %v1273
  %v1285 = vmul.f32 %v1155, %v1273
  %v1286 = vmul.f32 %v1157, %v1273
  %v1287 = vmul.f32 %v1158, %v1273
  %v1288 = vmul.f32 %v1159, %v1273
  %v1289 = vmul.f32 %v1161, %v1273
  %v1290 = vmul.f32 %v1162, %v1273
  %v1291 = vmul.f32 %v1163, %v1273
  %v1292 = vmul.f32 %v1165, %v1273
  %v1293 = vmul.f32 %v1166, %v1273
  %v1294 = vmul.f32 %v1167, %v1273
  %v1295 = vmul.f32 %v1169, %v1273
  %v1296 = vmul.f32 %v1170, %v1273
  %v1297 = vmul.f32 %v1171, %v1273
  %v1298 = vmul.f32 %v1173, %v1273
  %v1299 = vmul.f32 %v1174, %v1273
  %v1300 = vmul.f32 %v1175, %v1273
  %v1301 = vmul.f32 %v1177, %v1273
  %v1302 = vmul.f32 %v1178, %v1273
  %v1303 = vmul.f32 %v1179, %v1273
  %v1304 = vmul.f32 %v1181, %v1273
  %v1305 = vmul.f32 %v1182, %v1273
  %v1306 = vmul.f32 %v1183, %v1273
  %v1307 = vmul.f32 %v1185, %v1273
  %v1308 = vmul.f32 %v1186, %v1273
  %v1309 = vmul.f32 %v1187, %v1273
  %v1310 = vmul.f32 %v1189, %v1273
  %v1311 = vmul.f32 %v1190, %v1273
  %v1312 = vmul.f32 %v1191, %v1273
  %v1313 = vmul.f32 %v1193, %v1273
  %v1314 = vmul.f32 %v1194, %v1273
  %v1315 = vmul.f32 %v1195, %v1273
  %v1316 = vmul.f32 %v1197, %v1273
  %v1317 = vmul.f32 %v1198, %v1273
  %v1318 = vmul.f32 %v1199, %v1273
  %v1319 = vmul.f32 %v1201, %v1273
  %v1320 = vmul.f32 %v1202, %v1273
  %v1321 = vmul.f32 %v1203, %v1273
  %v1322 = vmul.f32 %v1205, %v1273
  %v1323 = vmul.f32 %v1206, %v1273
  %v1324 = vmul.f32 %v1207, %v1273
  %v1325 = vmul.f32 %v1209, %v1273
  %v1326 = vmul.f32 %v1210, %v1273
  %v1327 = vmul.f32 %v1211, %v1273
  %v1328 = vmul.f32 %v1213, %v1273
  %v1329 = vmul.f32 %v1214, %v1273
  %v1330 = vmul.f32 %v1215, %v1273
  %v1331 = vmul.f32 %v1217, %v1273
  %v1332 = vmul.f32 %v1218, %v1273
  %v1333 = vmul.f32 %v1219, %v1273
  %v1334 = vmul.f32 %v1221, %v1273
  %v1335 = vmul.f32 %v1222, %v1273
  %v1336 = vmul.f32 %v1223, %v1273
  %v1337 = vmul.f32 %v1225, %v1273
  %v1338 = vmul.f32 %v1226, %v1273
  %v1339 = vmul.f32 %v1227, %v1273
  %v1340 = vmul.f32 %v1229, %v1273
  %v1341 = vmul.f32 %v1230, %v1273
  %v1342 = vmul.f32 %v1231, %v1273
  %v1343 = vmul.f32 %v1233, %v1273
  %v1344 = vmul.f32 %v1234, %v1273
  %v1345 = vmul.f32 %v1235, %v1273
  %v1346 = vmul.f32 %v1237, %v1273
  %v1347 = vmul.f32 %v1238, %v1273
  %v1348 = vmul.f32 %v1239, %v1273
  %v1349 = vmul.f32 %v1241, %v1273
  %v1350 = vmul.f32 %v1242, %v1273
  %v1351 = vmul.f32 %v1243, %v1273
  %v1352 = vmul.f32 %v1245, %v1273
  %v1353 = vmul.f32 %v1246, %v1273
  %v1354 = vmul.f32 %v1247, %v1273
  %v1355 = vmul.f32 %v1249, %v1273
  %v1356 = vmul.f32 %v1250, %v1273
  %v1357 = vmul.f32 %v1251, %v1273
  %v1358 = vmul.f32 %v1253, %v1273
  %v1359 = vmul.f32 %v1254, %v1273
  %v1360 = vmul.f32 %v1255, %v1273
  %v1361 = vmul.f32 %v1257, %v1273
  %v1362 = vmul.f32 %v1258, %v1273
  %v1363 = vmul.f32 %v1259, %v1273
  %v1364 = vmul.f32 %v1261, %v1273
  %v1365 = vmul.f32 %v1262, %v1273
  %v1366 = vmul.f32 %v1263, %v1273
  %v1367 = vmul.f32 %v1265, %v1273
  %v1368 = vmul.f32 %v1266, %v1273
  %v1369 = vmul.f32 %v1267, %v1273
  %v1370 = vadd.f32 %v1274, 0.0
  %v1371 = vadd.f32 %v1275, 0.0
  %v1372 = vadd.f32 %v1276, 0.0
  %v1373 = vadd.f32 %v1277, 0.0
  %v1374 = vadd.f32 %v1278, 0.0
  %v1375 = vadd.f32 %v1279, 0.0
  %v1376 = vadd.f32 %v1280, 0.0
  %v1377 = vadd.f32 %v1281, 0.0
  %v1378 = vadd.f32 %v1282, 0.0
  %v1379 = vadd.f32 %v1283, 0.0
  %v1380 = vadd.f32 %v1284, 0.0
  %v1381 = vadd.f32 %v1285, 0.0
  %v1382 = vadd.f32 %v1286, 0.0
  %v1383 = vadd.f32 %v1287, 0.0
  %v1384 = vadd.f32 %v1288, 0.0
  %v1385 = vadd.f32 %v1289, 0.0
  %v1386 = vadd.f32 %v1290, 0.0
  %v1387 = vadd.f32 %v1291, 0.0
  %v1388 = vadd.f32 %v1292, 0.0
  %v1389 = vadd.f32 %v1293, 0.0
  %v1390 = vadd.f32 %v1294, 0.0
  %v1391 = vadd.f32 %v1295, 0.0
  %v1392 = vadd.f32 %v1296, 0.0
  %v1393 = vadd.f32 %v1297, 0.0
  %v1394 = vadd.f32 %v1298, 0.0
  %v1395 = vadd.f32 %v1299, 0.0
  %v1396 = vadd.f32 %v1300, 0.0
  %v1397 = vadd.f32 %v1301, 0.0
  %v1398 = vadd.f32 %v1302, 0.0
  %v1399 = vadd.f32 %v1303, 0.0
  %v1400 = vadd.f32 %v1304, 0.0
  %v1401 = vadd.f32 %v1305, 0.0
  %v1402 = vadd.f32 %v1306, 0.0
  %v1403 = vadd.f32 %v1307, 0.0
  %v1404 = vadd.f32 %v1308, 0.0
  %v1405 = vadd.f32 %v1309, 0.0
  %v1406 = vadd.f32 %v1310, 0.0
  %v1407 = vadd.f32 %v1311, 0.0
  %v1408 = vadd.f32 %v1312, 0.0
  %v1409 = vadd.f32 %v1313, 0.0
  %v1410 = vadd.f32 %v1314, 0.0
  %v1411 = vadd.f32 %v1315, 0.0
  %v1412 = vadd.f32 %v1316, 0.0
  %v1413 = vadd.f32 %v1317, 0.0
  %v1414 = vadd.f32 %v1318, 0.0
  %v1415 = vadd.f32 %v1319, 0.0
  %v1416 = vadd.f32 %v1320, 0.0
  %v1417 = vadd.f32 %v1321, 0.0
  %v1418 = vadd.f32 %v1322, 0.0
  %v1419 = vadd.f32 %v1323, 0.0
  %v1420 = vadd.f32 %v1324, 0.0
  %v1421 = vadd.f32 %v1325, 0.0
  %v1422 = vadd.f32 %v1326, 0.0
  %v1423 = vadd.f32 %v1327, 0.0
  %v1424 = vadd.f32 %v1328, 0.0
  %v1425 = vadd.f32 %v1329, 0.0
  %v1426 = vadd.f32 %v1330, 0.0
  %v1427 = vadd.f32 %v1331, 0.0
  %v1428 = vadd.f32 %v1332, 0.0
  %v1429 = vadd.f32 %v1333, 0.0
  %v1430 = vadd.f32 %v1334, 0.0
  %v1431 = vadd.f32 %v1335, 0.0
  %v1432 = vadd.f32 %v1336, 0.0
  %v1433 = vadd.f32 %v1337, 0.0
  %v1434 = vadd.f32 %v1338, 0.0
  %v1435 = vadd.f32 %v1339, 0.0
  %v1436 = vadd.f32 %v1340, 0.0
  %v1437 = vadd.f32 %v1341, 0.0
  %v1438 = vadd.f32 %v1342, 0.0
  %v1439 = vadd.f32 %v1343, 0.0
  %v1440 = vadd.f32 %v1344, 0.0
  %v1441 = vadd.f32 %v1345, 0.0
  %v1442 = vadd.f32 %v1346, 0.0
  %v1443 = vadd.f32 %v1347, 0.0
  %v1444 = vadd.f32 %v1348, 0.0
  %v1445 = vadd.f32 %v1349, 0.0
  %v1446 = vadd.f32 %v1350, 0.0
  %v1447 = vadd.f32 %v1351, 0.0
  %v1448 = vadd.f32 %v1352, 0.0
  %v1449 = vadd.f32 %v1353, 0.0
  %v1450 = vadd.f32 %v1354, 0.0
  %v1451 = vadd.f32 %v1355, 0.0
  %v1452 = vadd.f32 %v1356, 0.0
  %v1453 = vadd.f32 %v1357, 0.0
  %v1454 = vadd.f32 %v1358, 0.0
  %v1455 = vadd.f32 %v1359, 0.0
  %v1456 = vadd.f32 %v1360, 0.0
  %v1457 = vadd.f32 %v1361, 0.0
  %v1458 = vadd.f32 %v1362, 0.0
  %v1459 = vadd.f32 %v1363, 0.0
  %v1460 = vadd.f32 %v1364, 0.0
  %v1461 = vadd.f32 %v1365, 0.0
  %v1462 = vadd.f32 %v1366, 0.0
  %v1463 = vadd.f32 %v1367, 0.0
  %v1464 = vadd.f32 %v1368, 0.0
  %v1465 = vadd.f32 %v1369, 0.0
  %v1466 = vld [vmem:[%s2 + $0x1] sm:$0x1]
  %v1467 = vlaneseq
  %v1468 = vshrl.u32 %v1467, 7
  %v1469 = vsub.s32 0, %v1468
  %v1470 = vrot.slane %v1466, %v1469
  %v1471 = vmul.f32 %v1142, %v1470
  %v1472 = vmul.f32 %v1143, %v1470
  %v1473 = vmul.f32 %v1146, %v1470
  %v1474 = vmul.f32 %v1147, %v1470
  %v1475 = vmul.f32 %v1150, %v1470
  %v1476 = vmul.f32 %v1151, %v1470
  %v1477 = vmul.f32 %v1154, %v1470
  %v1478 = vmul.f32 %v1155, %v1470
  %v1479 = vmul.f32 %v1158, %v1470
  %v1480 = vmul.f32 %v1159, %v1470
  %v1481 = vmul.f32 %v1162, %v1470
  %v1482 = vmul.f32 %v1163, %v1470
  %v1483 = vmul.f32 %v1166, %v1470
  %v1484 = vmul.f32 %v1167, %v1470
  %v1485 = vmul.f32 %v1170, %v1470
  %v1486 = vmul.f32 %v1171, %v1470
  %v1487 = vmul.f32 %v1174, %v1470
  %v1488 = vmul.f32 %v1175, %v1470
  %v1489 = vmul.f32 %v1178, %v1470
  %v1490 = vmul.f32 %v1179, %v1470
  %v1491 = vmul.f32 %v1182, %v1470
  %v1492 = vmul.f32 %v1183, %v1470
  %v1493 = vmul.f32 %v1186, %v1470
  %v1494 = vmul.f32 %v1187, %v1470
  %v1495 = vmul.f32 %v1190, %v1470
  %v1496 = vmul.f32 %v1191, %v1470
  %v1497 = vmul.f32 %v1194, %v1470
  %v1498 = vmul.f32 %v1195, %v1470
  %v1499 = vmul.f32 %v1198, %v1470
  %v1500 = vmul.f32 %v1199, %v1470
  %v1501 = vmul.f32 %v1202, %v1470
  %v1502 = vmul.f32 %v1203, %v1470
  %v1503 = vmul.f32 %v1206, %v1470
  %v1504 = vmul.f32 %v1207, %v1470
  %v1505 = vmul.f32 %v1210, %v1470
  %v1506 = vmul.f32 %v1211, %v1470
  %v1507 = vmul.f32 %v1214, %v1470
  %v1508 = vmul.f32 %v1215, %v1470
  %v1509 = vmul.f32 %v1218, %v1470
  %v1510 = vmul.f32 %v1219, %v1470
  %v1511 = vmul.f32 %v1222, %v1470
  %v1512 = vmul.f32 %v1223, %v1470
  %v1513 = vmul.f32 %v1226, %v1470
  %v1514 = vmul.f32 %v1227, %v1470
  %v1515 = vmul.f32 %v1230, %v1470
  %v1516 = vmul.f32 %v1231, %v1470
  %v1517 = vmul.f32 %v1234, %v1470
  %v1518 = vmul.f32 %v1235, %v1470
  %v1519 = vmul.f32 %v1238, %v1470
  %v1520 = vmul.f32 %v1239, %v1470
  %v1521 = vmul.f32 %v1242, %v1470
  %v1522 = vmul.f32 %v1243, %v1470
  %v1523 = vmul.f32 %v1246, %v1470
  %v1524 = vmul.f32 %v1247, %v1470
  %v1525 = vmul.f32 %v1250, %v1470
  %v1526 = vmul.f32 %v1251, %v1470
  %v1527 = vmul.f32 %v1254, %v1470
  %v1528 = vmul.f32 %v1255, %v1470
  %v1529 = vmul.f32 %v1258, %v1470
  %v1530 = vmul.f32 %v1259, %v1470
  %v1531 = vmul.f32 %v1262, %v1470
  %v1532 = vmul.f32 %v1263, %v1470
  %v1533 = vmul.f32 %v1266, %v1470
  %v1534 = vmul.f32 %v1267, %v1470
  %vm1599 = vcmask 1046528
  %v1600 = vrot.slane %v1471, 1
  %v1601 = vrot.slane %v1472, 1
  %v1602 = vsel %vm1599, %v1600, %v1601
  %v1603 = vrot.slane %v1473, 1
  %v1604 = vrot.slane %v1474, 1
  %v1605 = vsel %vm1599, %v1603, %v1604
  %v1606 = vrot.slane %v1475, 1
  %v1607 = vrot.slane %v1476, 1
  %v1608 = vsel %vm1599, %v1606, %v1607
  %v1609 = vrot.slane %v1477, 1
  %v1610 = vrot.slane %v1478, 1
  %v1611 = vsel %vm1599, %v1609, %v1610
  %v1612 = vrot.slane %v1479, 1
  %v1613 = vrot.slane %v1480, 1
  %v1614 = vsel %vm1599, %v1612, %v1613
  %v1615 = vrot.slane %v1481, 1
  %v1616 = vrot.slane %v1482, 1
  %v1617 = vsel %vm1599, %v1615, %v1616
  %v1618 = vrot.slane %v1483, 1
  %v1619 = vrot.slane %v1484, 1
  %v1620 = vsel %vm1599, %v1618, %v1619
  %v1621 = vrot.slane %v1485, 1
  %v1622 = vrot.slane %v1486, 1
  %v1623 = vsel %vm1599, %v1621, %v1622
  %v1624 = vrot.slane %v1487, 1
  %v1625 = vrot.slane %v1488, 1
  %v1626 = vsel %vm1599, %v1624, %v1625
  %v1627 = vrot.slane %v1489, 1
  %v1628 = vrot.slane %v1490, 1
  %v1629 = vsel %vm1599, %v1627, %v1628
  %v1630 = vrot.slane %v1491, 1
  %v1631 = vrot.slane %v1492, 1
  %v1632 = vsel %vm1599, %v1630, %v1631
  %v1633 = vrot.slane %v1493, 1
  %v1634 = vrot.slane %v1494, 1
  %v1635 = vsel %vm1599, %v1633, %v1634
  %v1636 = vrot.slane %v1495, 1
  %v1637 = vrot.slane %v1496, 1
  %v1638 = vsel %vm1599, %v1636, %v1637
  %v1639 = vrot.slane %v1497, 1
  %v1640 = vrot.slane %v1498, 1
  %v1641 = vsel %vm1599, %v1639, %v1640
  %v1642 = vrot.slane %v1499, 1
  %v1643 = vrot.slane %v1500, 1
  %v1644 = vsel %vm1599, %v1642, %v1643
  %v1645 = vrot.slane %v1501, 1
  %v1646 = vrot.slane %v1502, 1
  %v1647 = vsel %vm1599, %v1645, %v1646
  %v1648 = vrot.slane %v1503, 1
  %v1649 = vrot.slane %v1504, 1
  %v1650 = vsel %vm1599, %v1648, %v1649
  %v1651 = vrot.slane %v1505, 1
  %v1652 = vrot.slane %v1506, 1
  %v1653 = vsel %vm1599, %v1651, %v1652
  %v1654 = vrot.slane %v1507, 1
  %v1655 = vrot.slane %v1508, 1
  %v1656 = vsel %vm1599, %v1654, %v1655
  %v1657 = vrot.slane %v1509, 1
  %v1658 = vrot.slane %v1510, 1
  %v1659 = vsel %vm1599, %v1657, %v1658
  %v1660 = vrot.slane %v1511, 1
  %v1661 = vrot.slane %v1512, 1
  %v1662 = vsel %vm1599, %v1660, %v1661
  %v1663 = vrot.slane %v1513, 1
  %v1664 = vrot.slane %v1514, 1
  %v1665 = vsel %vm1599, %v1663, %v1664
  %v1666 = vrot.slane %v1515, 1
  %v1667 = vrot.slane %v1516, 1
  %v1668 = vsel %vm1599, %v1666, %v1667
  %v1669 = vrot.slane %v1517, 1
  %v1670 = vrot.slane %v1518, 1
  %v1671 = vsel %vm1599, %v1669, %v1670
  %v1672 = vrot.slane %v1519, 1
  %v1673 = vrot.slane %v1520, 1
  %v1674 = vsel %vm1599, %v1672, %v1673
  %v1675 = vrot.slane %v1521, 1
  %v1676 = vrot.slane %v1522, 1
  %v1677 = vsel %vm1599, %v1675, %v1676
  %v1678 = vrot.slane %v1523, 1
  %v1679 = vrot.slane %v1524, 1
  %v1680 = vsel %vm1599, %v1678, %v1679
  %v1681 = vrot.slane %v1525, 1
  %v1682 = vrot.slane %v1526, 1
  %v1683 = vsel %vm1599, %v1681, %v1682
  %v1684 = vrot.slane %v1527, 1
  %v1685 = vrot.slane %v1528, 1
  %v1686 = vsel %vm1599, %v1684, %v1685
  %v1687 = vrot.slane %v1529, 1
  %v1688 = vrot.slane %v1530, 1
  %v1689 = vsel %vm1599, %v1687, %v1688
  %v1690 = vrot.slane %v1531, 1
  %v1691 = vrot.slane %v1532, 1
  %v1692 = vsel %vm1599, %v1690, %v1691
  %v1693 = vrot.slane %v1533, 1
  %v1694 = vrot.slane %v1534, 1
  %v1695 = vsel %vm1599, %v1693, %v1694
  %v1792 = vadd.f32 %v1370, %v1600
  %v1793 = vadd.f32 %v1371, %v1602
  %v1794 = vadd.f32 %v1372, %v1601
  %v1795 = vadd.f32 %v1373, %v1603
  %v1796 = vadd.f32 %v1374, %v1605
  %v1797 = vadd.f32 %v1375, %v1604
  %v1798 = vadd.f32 %v1376, %v1606
  %v1799 = vadd.f32 %v1377, %v1608
  %v1800 = vadd.f32 %v1378, %v1607
  %v1801 = vadd.f32 %v1379, %v1609
  %v1802 = vadd.f32 %v1380, %v1611
  %v1803 = vadd.f32 %v1381, %v1610
  %v1804 = vadd.f32 %v1382, %v1612
  %v1805 = vadd.f32 %v1383, %v1614
  %v1806 = vadd.f32 %v1384, %v1613
  %v1807 = vadd.f32 %v1385, %v1615
  %v1808 = vadd.f32 %v1386, %v1617
  %v1809 = vadd.f32 %v1387, %v1616
  %v1810 = vadd.f32 %v1388, %v1618
  %v1811 = vadd.f32 %v1389, %v1620
  %v1812 = vadd.f32 %v1390, %v1619
  %v1813 = vadd.f32 %v1391, %v1621
  %v1814 = vadd.f32 %v1392, %v1623
  %v1815 = vadd.f32 %v1393, %v1622
  %v1816 = vadd.f32 %v1394, %v1624
  %v1817 = vadd.f32 %v1395, %v1626
  %v1818 = vadd.f32 %v1396, %v1625
  %v1819 = vadd.f32 %v1397, %v1627
  %v1820 = vadd.f32 %v1398, %v1629
  %v1821 = vadd.f32 %v1399, %v1628
  %v1822 = vadd.f32 %v1400, %v1630
  %v1823 = vadd.f32 %v1401, %v1632
  %v1824 = vadd.f32 %v1402, %v1631
  %v1825 = vadd.f32 %v1403, %v1633
  %v1826 = vadd.f32 %v1404, %v1635
  %v1827 = vadd.f32 %v1405, %v1634
  %v1828 = vadd.f32 %v1406, %v1636
  %v1829 = vadd.f32 %v1407, %v1638
  %v1830 = vadd.f32 %v1408, %v1637
  %v1831 = vadd.f32 %v1409, %v1639
  %v1832 = vadd.f32 %v1410, %v1641
  %v1833 = vadd.f32 %v1411, %v1640
  %v1834 = vadd.f32 %v1412, %v1642
  %v1835 = vadd.f32 %v1413, %v1644
  %v1836 = vadd.f32 %v1414, %v1643
  %v1837 = vadd.f32 %v1415, %v1645
  %v1838 = vadd.f32 %v1416, %v1647
  %v1839 = vadd.f32 %v1417, %v1646
  %v1840 = vadd.f32 %v1418, %v1648
  %v1841 = vadd.f32 %v1419, %v1650
  %v1842 = vadd.f32 %v1420, %v1649
  %v1843 = vadd.f32 %v1421, %v1651
  %v1844 = vadd.f32 %v1422, %v1653
  %v1845 = vadd.f32 %v1423, %v1652
  %v1846 = vadd.f32 %v1424, %v1654
  %v1847 = vadd.f32 %v1425, %v1656
  %v1848 = vadd.f32 %v1426, %v1655
  %v1849 = vadd.f32 %v1427, %v1657
  %v1850 = vadd.f32 %v1428, %v1659
  %v1851 = vadd.f32 %v1429, %v1658
  %v1852 = vadd.f32 %v1430, %v1660
  %v1853 = vadd.f32 %v1431, %v1662
  %v1854 = vadd.f32 %v1432, %v1661
  %v1855 = vadd.f32 %v1433, %v1663
  %v1856 = vadd.f32 %v1434, %v1665
  %v1857 = vadd.f32 %v1435, %v1664
  %v1858 = vadd.f32 %v1436, %v1666
  %v1859 = vadd.f32 %v1437, %v1668
  %v1860 = vadd.f32 %v1438, %v1667
  %v1861 = vadd.f32 %v1439, %v1669
  %v1862 = vadd.f32 %v1440, %v1671
  %v1863 = vadd.f32 %v1441, %v1670
  %v1864 = vadd.f32 %v1442, %v1672
  %v1865 = vadd.f32 %v1443, %v1674
  %v1866 = vadd.f32 %v1444, %v1673
  %v1867 = vadd.f32 %v1445, %v1675
  %v1868 = vadd.f32 %v1446, %v1677
  %v1869 = vadd.f32 %v1447, %v1676
  %v1870 = vadd.f32 %v1448, %v1678
  %v1871 = vadd.f32 %v1449, %v1680
  %v1872 = vadd.f32 %v1450, %v1679
  %v1873 = vadd.f32 %v1451, %v1681
  %v1874 = vadd.f32 %v1452, %v1683
  %v1875 = vadd.f32 %v1453, %v1682
  %v1876 = vadd.f32 %v1454, %v1684
  %v1877 = vadd.f32 %v1455, %v1686
  %v1878 = vadd.f32 %v1456, %v1685
  %v1879 = vadd.f32 %v1457, %v1687
  %v1880 = vadd.f32 %v1458, %v1689
  %v1881 = vadd.f32 %v1459, %v1688
  %v1882 = vadd.f32 %v1460, %v1690
  %v1883 = vadd.f32 %v1461, %v1692
  %v1884 = vadd.f32 %v1462, %v1691
  %v1885 = vadd.f32 %v1463, %v1693
  %v1886 = vadd.f32 %v1464, %v1695
  %v1887 = vadd.f32 %v1465, %v1694
  %v1888 = vld [vmem:[%s2 + $0x2] sm:$0x1]
  %v1889 = vlaneseq
  %v1890 = vshrl.u32 %v1889, 7
  %v1891 = vsub.s32 0, %v1890
  %v1892 = vrot.slane %v1888, %v1891
  %v1893 = vmul.f32 %v1142, %v1892
  %v1894 = vmul.f32 %v1143, %v1892
  %v1895 = vmul.f32 %v1144, %v1892
  %v1896 = vmul.f32 %v1146, %v1892
  %v1897 = vmul.f32 %v1147, %v1892
  %v1898 = vmul.f32 %v1148, %v1892
  %v1899 = vmul.f32 %v1150, %v1892
  %v1900 = vmul.f32 %v1151, %v1892
  %v1901 = vmul.f32 %v1152, %v1892
  %v1902 = vmul.f32 %v1154, %v1892
  %v1903 = vmul.f32 %v1155, %v1892
  %v1904 = vmul.f32 %v1156, %v1892
  %v1905 = vmul.f32 %v1158, %v1892
  %v1906 = vmul.f32 %v1159, %v1892
  %v1907 = vmul.f32 %v1160, %v1892
  %v1908 = vmul.f32 %v1162, %v1892
  %v1909 = vmul.f32 %v1163, %v1892
  %v1910 = vmul.f32 %v1164, %v1892
  %v1911 = vmul.f32 %v1166, %v1892
  %v1912 = vmul.f32 %v1167, %v1892
  %v1913 = vmul.f32 %v1168, %v1892
  %v1914 = vmul.f32 %v1170, %v1892
  %v1915 = vmul.f32 %v1171, %v1892
  %v1916 = vmul.f32 %v1172, %v1892
  %v1917 = vmul.f32 %v1174, %v1892
  %v1918 = vmul.f32 %v1175, %v1892
  %v1919 = vmul.f32 %v1176, %v1892
  %v1920 = vmul.f32 %v1178, %v1892
  %v1921 = vmul.f32 %v1179, %v1892
  %v1922 = vmul.f32 %v1180, %v1892
  %v1923 = vmul.f32 %v1182, %v1892
  %v1924 = vmul.f32 %v1183, %v1892
  %v1925 = vmul.f32 %v1184, %v1892
  %v1926 = vmul.f32 %v1186, %v1892
  %v1927 = vmul.f32 %v1187, %v1892
  %v1928 = vmul.f32 %v1188, %v1892
  %v1929 = vmul.f32 %v1190, %v1892
  %v1930 = vmul.f32 %v1191, %v1892
  %v1931 = vmul.f32 %v1192, %v1892
  %v1932 = vmul.f32 %v1194, %v1892
  %v1933 = vmul.f32 %v1195, %v1892
  %v1934 = vmul.f32 %v1196, %v1892
  %v1935 = vmul.f32 %v1198, %v1892
  %v1936 = vmul.f32 %v1199, %v1892
  %v1937 = vmul.f32 %v1200, %v1892
  %v1938 = vmul.f32 %v1202, %v1892
  %v1939 = vmul.f32 %v1203, %v1892
  %v1940 = vmul.f32 %v1204, %v1892
  %v1941 = vmul.f32 %v1206, %v1892
  %v1942 = vmul.f32 %v1207, %v1892
  %v1943 = vmul.f32 %v1208, %v1892
  %v1944 = vmul.f32 %v1210, %v1892
  %v1945 = vmul.f32 %v1211, %v1892
  %v1946 = vmul.f32 %v1212, %v1892
  %v1947 = vmul.f32 %v1214, %v1892
  %v1948 = vmul.f32 %v1215, %v1892
  %v1949 = vmul.f32 %v1216, %v1892
  %v1950 = vmul.f32 %v1218, %v1892
  %v1951 = vmul.f32 %v1219, %v1892
  %v1952 = vmul.f32 %v1220, %v1892
  %v1953 = vmul.f32 %v1222, %v1892
  %v1954 = vmul.f32 %v1223, %v1892
  %v1955 = vmul.f32 %v1224, %v1892
  %v1956 = vmul.f32 %v1226, %v1892
  %v1957 = vmul.f32 %v1227, %v1892
  %v1958 = vmul.f32 %v1228, %v1892
  %v1959 = vmul.f32 %v1230, %v1892
  %v1960 = vmul.f32 %v1231, %v1892
  %v1961 = vmul.f32 %v1232, %v1892
  %v1962 = vmul.f32 %v1234, %v1892
  %v1963 = vmul.f32 %v1235, %v1892
  %v1964 = vmul.f32 %v1236, %v1892
  %v1965 = vmul.f32 %v1238, %v1892
  %v1966 = vmul.f32 %v1239, %v1892
  %v1967 = vmul.f32 %v1240, %v1892
  %v1968 = vmul.f32 %v1242, %v1892
  %v1969 = vmul.f32 %v1243, %v1892
  %v1970 = vmul.f32 %v1244, %v1892
  %v1971 = vmul.f32 %v1246, %v1892
  %v1972 = vmul.f32 %v1247, %v1892
  %v1973 = vmul.f32 %v1248, %v1892
  %v1974 = vmul.f32 %v1250, %v1892
  %v1975 = vmul.f32 %v1251, %v1892
  %v1976 = vmul.f32 %v1252, %v1892
  %v1977 = vmul.f32 %v1254, %v1892
  %v1978 = vmul.f32 %v1255, %v1892
  %v1979 = vmul.f32 %v1256, %v1892
  %v1980 = vmul.f32 %v1258, %v1892
  %v1981 = vmul.f32 %v1259, %v1892
  %v1982 = vmul.f32 %v1260, %v1892
  %v1983 = vmul.f32 %v1262, %v1892
  %v1984 = vmul.f32 %v1263, %v1892
  %v1985 = vmul.f32 %v1264, %v1892
  %v1986 = vmul.f32 %v1266, %v1892
  %v1987 = vmul.f32 %v1267, %v1892
  %v1988 = vmul.f32 %v1268, %v1892
  %vm2085 = vcmask 1045504
  %v2086 = vrot.slane %v1893, 2
  %v2087 = vrot.slane %v1894, 2
  %v2088 = vsel %vm2085, %v2086, %v2087
  %v2089 = vrot.slane %v1895, 2
  %v2090 = vsel %vm2085, %v2087, %v2089
  %v2091 = vrot.slane %v1896, 2
  %v2092 = vrot.slane %v1897, 2
  %v2093 = vsel %vm2085, %v2091, %v2092
  %v2094 = vrot.slane %v1898, 2
  %v2095 = vsel %vm2085, %v2092, %v2094
  %v2096 = vrot.slane %v1899, 2
  %v2097 = vrot.slane %v1900, 2
  %v2098 = vsel %vm2085, %v2096, %v2097
  %v2099 = vrot.slane %v1901, 2
  %v2100 = vsel %vm2085, %v2097, %v2099
  %v2101 = vrot.slane %v1902, 2
  %v2102 = vrot.slane %v1903, 2
  %v2103 = vsel %vm2085, %v2101, %v2102
  %v2104 = vrot.slane %v1904, 2
  %v2105 = vsel %vm2085, %v2102, %v2104
  %v2106 = vrot.slane %v1905, 2
  %v2107 = vrot.slane %v1906, 2
  %v2108 = vsel %vm2085, %v2106, %v2107
  %v2109 = vrot.slane %v1907, 2
  %v2110 = vsel %vm2085, %v2107, %v2109
  %v2111 = vrot.slane %v1908, 2
  %v2112 = vrot.slane %v1909, 2
  %v2113 = vsel %vm2085, %v2111, %v2112
  %v2114 = vrot.slane %v1910, 2
  %v2115 = vsel %vm2085, %v2112, %v2114
  %v2116 = vrot.slane %v1911, 2
  %v2117 = vrot.slane %v1912, 2
  %v2118 = vsel %vm2085, %v2116, %v2117
  %v2119 = vrot.slane %v1913, 2
  %v2120 = vsel %vm2085, %v2117, %v2119
  %v2121 = vrot.slane %v1914, 2
  %v2122 = vrot.slane %v1915, 2
  %v2123 = vsel %vm2085, %v2121, %v2122
  %v2124 = vrot.slane %v1916, 2
  %v2125 = vsel %vm2085, %v2122, %v2124
  %v2126 = vrot.slane %v1917, 2
  %v2127 = vrot.slane %v1918, 2
  %v2128 = vsel %vm2085, %v2126, %v2127
  %v2129 = vrot.slane %v1919, 2
  %v2130 = vsel %vm2085, %v2127, %v2129
  %v2131 = vrot.slane %v1920, 2
  %v2132 = vrot.slane %v1921, 2
  %v2133 = vsel %vm2085, %v2131, %v2132
  %v2134 = vrot.slane %v1922, 2
  %v2135 = vsel %vm2085, %v2132, %v2134
  %v2136 = vrot.slane %v1923, 2
  %v2137 = vrot.slane %v1924, 2
  %v2138 = vsel %vm2085, %v2136, %v2137
  %v2139 = vrot.slane %v1925, 2
  %v2140 = vsel %vm2085, %v2137, %v2139
  %v2141 = vrot.slane %v1926, 2
  %v2142 = vrot.slane %v1927, 2
  %v2143 = vsel %vm2085, %v2141, %v2142
  %v2144 = vrot.slane %v1928, 2
  %v2145 = vsel %vm2085, %v2142, %v2144
  %v2146 = vrot.slane %v1929, 2
  %v2147 = vrot.slane %v1930, 2
  %v2148 = vsel %vm2085, %v2146, %v2147
  %v2149 = vrot.slane %v1931, 2
  %v2150 = vsel %vm2085, %v2147, %v2149
  %v2151 = vrot.slane %v1932, 2
  %v2152 = vrot.slane %v1933, 2
  %v2153 = vsel %vm2085, %v2151, %v2152
  %v2154 = vrot.slane %v1934, 2
  %v2155 = vsel %vm2085, %v2152, %v2154
  %v2156 = vrot.slane %v1935, 2
  %v2157 = vrot.slane %v1936, 2
  %v2158 = vsel %vm2085, %v2156, %v2157
  %v2159 = vrot.slane %v1937, 2
  %v2160 = vsel %vm2085, %v2157, %v2159
  %v2161 = vrot.slane %v1938, 2
  %v2162 = vrot.slane %v1939, 2
  %v2163 = vsel %vm2085, %v2161, %v2162
  %v2164 = vrot.slane %v1940, 2
  %v2165 = vsel %vm2085, %v2162, %v2164
  %v2166 = vrot.slane %v1941, 2
  %v2167 = vrot.slane %v1942, 2
  %v2168 = vsel %vm2085, %v2166, %v2167
  %v2169 = vrot.slane %v1943, 2
  %v2170 = vsel %vm2085, %v2167, %v2169
  %v2171 = vrot.slane %v1944, 2
  %v2172 = vrot.slane %v1945, 2
  %v2173 = vsel %vm2085, %v2171, %v2172
  %v2174 = vrot.slane %v1946, 2
  %v2175 = vsel %vm2085, %v2172, %v2174
  %v2176 = vrot.slane %v1947, 2
  %v2177 = vrot.slane %v1948, 2
  %v2178 = vsel %vm2085, %v2176, %v2177
  %v2179 = vrot.slane %v1949, 2
  %v2180 = vsel %vm2085, %v2177, %v2179
  %v2181 = vrot.slane %v1950, 2
  %v2182 = vrot.slane %v1951, 2
  %v2183 = vsel %vm2085, %v2181, %v2182
  %v2184 = vrot.slane %v1952, 2
  %v2185 = vsel %vm2085, %v2182, %v2184
  %v2186 = vrot.slane %v1953, 2
  %v2187 = vrot.slane %v1954, 2
  %v2188 = vsel %vm2085, %v2186, %v2187
  %v2189 = vrot.slane %v1955, 2
  %v2190 = vsel %vm2085, %v2187, %v2189
  %v2191 = vrot.slane %v1956, 2
  %v2192 = vrot.slane %v1957, 2
  %v2193 = vsel %vm2085, %v2191, %v2192
  %v2194 = vrot.slane %v1958, 2
  %v2195 = vsel %vm2085, %v2192, %v2194
  %v2196 = vrot.slane %v1959, 2
  %v2197 = vrot.slane %v1960, 2
  %v2198 = vsel %vm2085, %v2196, %v2197
  %v2199 = vrot.slane %v1961, 2
  %v2200 = vsel %vm2085, %v2197, %v2199
  %v2201 = vrot.slane %v1962, 2
  %v2202 = vrot.slane %v1963, 2
  %v2203 = vsel %vm2085, %v2201, %v2202
  %v2204 = vrot.slane %v1964, 2
  %v2205 = vsel %vm2085, %v2202, %v2204
  %v2206 = vrot.slane %v1965, 2
  %v2207 = vrot.slane %v1966, 2
  %v2208 = vsel %vm2085, %v2206, %v2207
  %v2209 = vrot.slane %v1967, 2
  %v2210 = vsel %vm2085, %v2207, %v2209
  %v2211 = vrot.slane %v1968, 2
  %v2212 = vrot.slane %v1969, 2
  %v2213 = vsel %vm2085, %v2211, %v2212
  %v2214 = vrot.slane %v1970, 2
  %v2215 = vsel %vm2085, %v2212, %v2214
  %v2216 = vrot.slane %v1971, 2
  %v2217 = vrot.slane %v1972, 2
  %v2218 = vsel %vm2085, %v2216, %v2217
  %v2219 = vrot.slane %v1973, 2
  %v2220 = vsel %vm2085, %v2217, %v2219
  %v2221 = vrot.slane %v1974, 2
  %v2222 = vrot.slane %v1975, 2
  %v2223 = vsel %vm2085, %v2221, %v2222
  %v2224 = vrot.slane %v1976, 2
  %v2225 = vsel %vm2085, %v2222, %v2224
  %v2226 = vrot.slane %v1977, 2
  %v2227 = vrot.slane %v1978, 2
  %v2228 = vsel %vm2085, %v2226, %v2227
  %v2229 = vrot.slane %v1979, 2
  %v2230 = vsel %vm2085, %v2227, %v2229
  %v2231 = vrot.slane %v1980, 2
  %v2232 = vrot.slane %v1981, 2
  %v2233 = vsel %vm2085, %v2231, %v2232
  %v2234 = vrot.slane %v1982, 2
  %v2235 = vsel %vm2085, %v2232, %v2234
  %v2236 = vrot.slane %v1983, 2
  %v2237 = vrot.slane %v1984, 2
  %v2238 = vsel %vm2085, %v2236, %v2237
  %v2239 = vrot.slane %v1985, 2
  %v2240 = vsel %vm2085, %v2237, %v2239
  %v2241 = vrot.slane %v1986, 2
  %v2242 = vrot.slane %v1987, 2
  %v2243 = vsel %vm2085, %v2241, %v2242
  %v2244 = vrot.slane %v1988, 2
  %v2245 = vsel %vm2085, %v2242, %v2244
  %v2342 = vadd.f32 %v1792, %v2086
  %v2343 = vadd.f32 %v1793, %v2088
  %v2344 = vadd.f32 %v1794, %v2090
  %v2345 = vadd.f32 %v1795, %v2091
  %v2346 = vadd.f32 %v1796, %v2093
  %v2347 = vadd.f32 %v1797, %v2095
  %v2348 = vadd.f32 %v1798, %v2096
  %v2349 = vadd.f32 %v1799, %v2098
  %v2350 = vadd.f32 %v1800, %v2100
  %v2351 = vadd.f32 %v1801, %v2101
  %v2352 = vadd.f32 %v1802, %v2103
  %v2353 = vadd.f32 %v1803, %v2105
  %v2354 = vadd.f32 %v1804, %v2106
  %v2355 = vadd.f32 %v1805, %v2108
  %v2356 = vadd.f32 %v1806, %v2110
  %v2357 = vadd.f32 %v1807, %v2111
  %v2358 = vadd.f32 %v1808, %v2113
  %v2359 = vadd.f32 %v1809, %v2115
  %v2360 = vadd.f32 %v1810, %v2116
  %v2361 = vadd.f32 %v1811, %v2118
  %v2362 = vadd.f32 %v1812, %v2120
  %v2363 = vadd.f32 %v1813, %v2121
  %v2364 = vadd.f32 %v1814, %v2123
  %v2365 = vadd.f32 %v1815, %v2125
  %v2366 = vadd.f32 %v1816, %v2126
  %v2367 = vadd.f32 %v1817, %v2128
  %v2368 = vadd.f32 %v1818, %v2130
  %v2369 = vadd.f32 %v1819, %v2131
  %v2370 = vadd.f32 %v1820, %v2133
  %v2371 = vadd.f32 %v1821, %v2135
  %v2372 = vadd.f32 %v1822, %v2136
  %v2373 = vadd.f32 %v1823, %v2138
  %v2374 = vadd.f32 %v1824, %v2140
  %v2375 = vadd.f32 %v1825, %v2141
  %v2376 = vadd.f32 %v1826, %v2143
  %v2377 = vadd.f32 %v1827, %v2145
  %v2378 = vadd.f32 %v1828, %v2146
  %v2379 = vadd.f32 %v1829, %v2148
  %v2380 = vadd.f32 %v1830, %v2150
  %v2381 = vadd.f32 %v1831, %v2151
  %v2382 = vadd.f32 %v1832, %v2153
  %v2383 = vadd.f32 %v1833, %v2155
  %v2384 = vadd.f32 %v1834, %v2156
  %v2385 = vadd.f32 %v1835, %v2158
  %v2386 = vadd.f32 %v1836, %v2160
  %v2387 = vadd.f32 %v1837, %v2161
  %v2388 = vadd.f32 %v1838, %v2163
  %v2389 = vadd.f32 %v1839, %v2165
  %v2390 = vadd.f32 %v1840, %v2166
  %v2391 = vadd.f32 %v1841, %v2168
  %v2392 = vadd.f32 %v1842, %v2170
  %v2393 = vadd.f32 %v1843, %v2171
  %v2394 = vadd.f32 %v1844, %v2173
  %v2395 = vadd.f32 %v1845, %v2175
  %v2396 = vadd.f32 %v1846, %v2176
  %v2397 = vadd.f32 %v1847, %v2178
  %v2398 = vadd.f32 %v1848, %v2180
  %v2399 = vadd.f32 %v1849, %v2181
  %v2400 = vadd.f32 %v1850, %v2183
  %v2401 = vadd.f32 %v1851, %v2185
  %v2402 = vadd.f32 %v1852, %v2186
  %v2403 = vadd.f32 %v1853, %v2188
  %v2404 = vadd.f32 %v1854, %v2190
  %v2405 = vadd.f32 %v1855, %v2191
  %v2406 = vadd.f32 %v1856, %v2193
  %v2407 = vadd.f32 %v1857, %v2195
  %v2408 = vadd.f32 %v1858, %v2196
  %v2409 = vadd.f32 %v1859, %v2198
  %v2410 = vadd.f32 %v1860, %v2200
  %v2411 = vadd.f32 %v1861, %v2201
  %v2412 = vadd.f32 %v1862, %v2203
  %v2413 = vadd.f32 %v1863, %v2205
  %v2414 = vadd.f32 %v1864, %v2206
  %v2415 = vadd.f32 %v1865, %v2208
  %v2416 = vadd.f32 %v1866, %v2210
  %v2417 = vadd.f32 %v1867, %v2211
  %v2418 = vadd.f32 %v1868, %v2213
  %v2419 = vadd.f32 %v1869, %v2215
  %v2420 = vadd.f32 %v1870, %v2216
  %v2421 = vadd.f32 %v1871, %v2218
  %v2422 = vadd.f32 %v1872, %v2220
  %v2423 = vadd.f32 %v1873, %v2221
  %v2424 = vadd.f32 %v1874, %v2223
  %v2425 = vadd.f32 %v1875, %v2225
  %v2426 = vadd.f32 %v1876, %v2226
  %v2427 = vadd.f32 %v1877, %v2228
  %v2428 = vadd.f32 %v1878, %v2230
  %v2429 = vadd.f32 %v1879, %v2231
  %v2430 = vadd.f32 %v1880, %v2233
  %v2431 = vadd.f32 %v1881, %v2235
  %v2432 = vadd.f32 %v1882, %v2236
  %v2433 = vadd.f32 %v1883, %v2238
  %v2434 = vadd.f32 %v1884, %v2240
  %v2435 = vadd.f32 %v1885, %v2241
  %v2436 = vadd.f32 %v1886, %v2243
  %v2437 = vadd.f32 %v1887, %v2245
  %v2438 = vld [vmem:[%s1076] sm:$0xff]
  %v2439 = vld [vmem:[%s1076 + $0x8] sm:$0xff]
  %v2440 = vld [vmem:[%s1076 + $0x10] sm:$0xff]
  %v2441 = vld [vmem:[%s1076 + $0x18] sm:$0xff]
  %v2442 = vld [vmem:[%s1076 + $0x20] sm:$0xff]
  %v2443 = vld [vmem:[%s1076 + $0x28] sm:$0xff]
  %v2444 = vld [vmem:[%s1076 + $0x30] sm:$0xff]
  %v2445 = vld [vmem:[%s1076 + $0x38] sm:$0xff]
  %v2446 = vld [vmem:[%s1076 + $0x40] sm:$0xff]
  %v2447 = vld [vmem:[%s1076 + $0x48] sm:$0xff]
  %v2448 = vld [vmem:[%s1076 + $0x50] sm:$0xff]
  %v2449 = vld [vmem:[%s1076 + $0x58] sm:$0xff]
  %v2450 = vld [vmem:[%s1076 + $0x60] sm:$0xff]
  %v2451 = vld [vmem:[%s1076 + $0x68] sm:$0xff]
  %v2452 = vld [vmem:[%s1076 + $0x70] sm:$0xff]
  %v2453 = vld [vmem:[%s1076 + $0x78] sm:$0xff]
  %v2454 = vld [vmem:[%s1076 + $0x80] sm:$0xff]
  %v2455 = vld [vmem:[%s1076 + $0x88] sm:$0xff]
  %v2456 = vld [vmem:[%s1076 + $0x90] sm:$0xff]
  %v2457 = vld [vmem:[%s1076 + $0x98] sm:$0xff]
  %v2458 = vld [vmem:[%s1076 + $0xa0] sm:$0xff]
  %v2459 = vld [vmem:[%s1076 + $0xa8] sm:$0xff]
  %v2460 = vld [vmem:[%s1076 + $0xb0] sm:$0xff]
  %v2461 = vld [vmem:[%s1076 + $0xb8] sm:$0xff]
  %v2462 = vld [vmem:[%s1076 + $0xc0] sm:$0xff]
  %v2463 = vld [vmem:[%s1076 + $0xc8] sm:$0xff]
  %v2464 = vld [vmem:[%s1076 + $0xd0] sm:$0xff]
  %v2465 = vld [vmem:[%s1076 + $0xd8] sm:$0xff]
  %v2466 = vld [vmem:[%s1076 + $0xe0] sm:$0xff]
  %v2467 = vld [vmem:[%s1076 + $0xe8] sm:$0xff]
  %v2468 = vld [vmem:[%s1076 + $0xf0] sm:$0xff]
  %v2469 = vld [vmem:[%s1076 + $0xf8] sm:$0xff]
  %v2470 = vld [vmem:[%s1076 + $0x100] sm:$0xff]
  %v2471 = vld [vmem:[%s1076 + $0x108] sm:$0xff]
  %v2472 = vld [vmem:[%s1076 + $0x110] sm:$0xff]
  %v2473 = vld [vmem:[%s1076 + $0x118] sm:$0xff]
  %v2474 = vld [vmem:[%s1076 + $0x120] sm:$0xff]
  %v2475 = vld [vmem:[%s1076 + $0x128] sm:$0xff]
  %v2476 = vld [vmem:[%s1076 + $0x130] sm:$0xff]
  %v2477 = vld [vmem:[%s1076 + $0x138] sm:$0xff]
  %v2478 = vld [vmem:[%s1076 + $0x140] sm:$0xff]
  %v2479 = vld [vmem:[%s1076 + $0x148] sm:$0xff]
  %v2480 = vld [vmem:[%s1076 + $0x150] sm:$0xff]
  %v2481 = vld [vmem:[%s1076 + $0x158] sm:$0xff]
  %v2482 = vld [vmem:[%s1076 + $0x160] sm:$0xff]
  %v2483 = vld [vmem:[%s1076 + $0x168] sm:$0xff]
  %v2484 = vld [vmem:[%s1076 + $0x170] sm:$0xff]
  %v2485 = vld [vmem:[%s1076 + $0x178] sm:$0xff]
  %v2486 = vld [vmem:[%s1076 + $0x180] sm:$0xff]
  %v2487 = vld [vmem:[%s1076 + $0x188] sm:$0xff]
  %v2488 = vld [vmem:[%s1076 + $0x190] sm:$0xff]
  %v2489 = vld [vmem:[%s1076 + $0x198] sm:$0xff]
  %v2490 = vld [vmem:[%s1076 + $0x1a0] sm:$0xff]
  %v2491 = vld [vmem:[%s1076 + $0x1a8] sm:$0xff]
  %v2492 = vld [vmem:[%s1076 + $0x1b0] sm:$0xff]
  %v2493 = vld [vmem:[%s1076 + $0x1b8] sm:$0xff]
  %v2494 = vld [vmem:[%s1076 + $0x1c0] sm:$0xff]
  %v2495 = vld [vmem:[%s1076 + $0x1c8] sm:$0xff]
  %v2496 = vld [vmem:[%s1076 + $0x1d0] sm:$0xff]
  %v2497 = vld [vmem:[%s1076 + $0x1d8] sm:$0xff]
  %v2498 = vld [vmem:[%s1076 + $0x1e0] sm:$0xff]
  %v2499 = vld [vmem:[%s1076 + $0x1e8] sm:$0xff]
  %v2500 = vld [vmem:[%s1076 + $0x1f0] sm:$0xff]
  %v2501 = vld [vmem:[%s1076 + $0x1f8] sm:$0xff]
  %v2502 = vld [vmem:[%s1076 + $0x240] sm:$0xff]
  %v2503 = vld [vmem:[%s1076 + $0x248] sm:$0xff]
  %v2504 = vld [vmem:[%s1076 + $0x250] sm:$0xff]
  %v2505 = vld [vmem:[%s1076 + $0x258] sm:$0xff]
  %v2506 = vld [vmem:[%s1076 + $0x260] sm:$0xff]
  %v2507 = vld [vmem:[%s1076 + $0x268] sm:$0xff]
  %v2508 = vld [vmem:[%s1076 + $0x270] sm:$0xff]
  %v2509 = vld [vmem:[%s1076 + $0x278] sm:$0xff]
  %v2510 = vld [vmem:[%s1076 + $0x280] sm:$0xff]
  %v2511 = vld [vmem:[%s1076 + $0x288] sm:$0xff]
  %v2512 = vld [vmem:[%s1076 + $0x290] sm:$0xff]
  %v2513 = vld [vmem:[%s1076 + $0x298] sm:$0xff]
  %v2514 = vld [vmem:[%s1076 + $0x2a0] sm:$0xff]
  %v2515 = vld [vmem:[%s1076 + $0x2a8] sm:$0xff]
  %v2516 = vld [vmem:[%s1076 + $0x2b0] sm:$0xff]
  %v2517 = vld [vmem:[%s1076 + $0x2b8] sm:$0xff]
  %v2518 = vld [vmem:[%s1076 + $0x2c0] sm:$0xff]
  %v2519 = vld [vmem:[%s1076 + $0x2c8] sm:$0xff]
  %v2520 = vld [vmem:[%s1076 + $0x2d0] sm:$0xff]
  %v2521 = vld [vmem:[%s1076 + $0x2d8] sm:$0xff]
  %v2522 = vld [vmem:[%s1076 + $0x2e0] sm:$0xff]
  %v2523 = vld [vmem:[%s1076 + $0x2e8] sm:$0xff]
  %v2524 = vld [vmem:[%s1076 + $0x2f0] sm:$0xff]
  %v2525 = vld [vmem:[%s1076 + $0x2f8] sm:$0xff]
  %v2526 = vld [vmem:[%s1076 + $0x300] sm:$0xff]
  %v2527 = vld [vmem:[%s1076 + $0x308] sm:$0xff]
  %v2528 = vld [vmem:[%s1076 + $0x310] sm:$0xff]
  %v2529 = vld [vmem:[%s1076 + $0x318] sm:$0xff]
  %v2530 = vld [vmem:[%s1076 + $0x320] sm:$0xff]
  %v2531 = vld [vmem:[%s1076 + $0x328] sm:$0xff]
  %v2532 = vld [vmem:[%s1076 + $0x330] sm:$0xff]
  %v2533 = vld [vmem:[%s1076 + $0x338] sm:$0xff]
  %v2534 = vld [vmem:[%s1076 + $0x340] sm:$0xff]
  %v2535 = vld [vmem:[%s1076 + $0x348] sm:$0xff]
  %v2536 = vld [vmem:[%s1076 + $0x350] sm:$0xff]
  %v2537 = vld [vmem:[%s1076 + $0x358] sm:$0xff]
  %v2538 = vld [vmem:[%s1076 + $0x360] sm:$0xff]
  %v2539 = vld [vmem:[%s1076 + $0x368] sm:$0xff]
  %v2540 = vld [vmem:[%s1076 + $0x370] sm:$0xff]
  %v2541 = vld [vmem:[%s1076 + $0x378] sm:$0xff]
  %v2542 = vld [vmem:[%s1076 + $0x380] sm:$0xff]
  %v2543 = vld [vmem:[%s1076 + $0x388] sm:$0xff]
  %v2544 = vld [vmem:[%s1076 + $0x390] sm:$0xff]
  %v2545 = vld [vmem:[%s1076 + $0x398] sm:$0xff]
  %v2546 = vld [vmem:[%s1076 + $0x3a0] sm:$0xff]
  %v2547 = vld [vmem:[%s1076 + $0x3a8] sm:$0xff]
  %v2548 = vld [vmem:[%s1076 + $0x3b0] sm:$0xff]
  %v2549 = vld [vmem:[%s1076 + $0x3b8] sm:$0xff]
  %v2550 = vld [vmem:[%s1076 + $0x3c0] sm:$0xff]
  %v2551 = vld [vmem:[%s1076 + $0x3c8] sm:$0xff]
  %v2552 = vld [vmem:[%s1076 + $0x3d0] sm:$0xff]
  %v2553 = vld [vmem:[%s1076 + $0x3d8] sm:$0xff]
  %v2554 = vld [vmem:[%s1076 + $0x3e0] sm:$0xff]
  %v2555 = vld [vmem:[%s1076 + $0x3e8] sm:$0xff]
  %v2556 = vld [vmem:[%s1076 + $0x3f0] sm:$0xff]
  %v2557 = vld [vmem:[%s1076 + $0x3f8] sm:$0xff]
  %v2558 = vld [vmem:[%s1076 + $0x400] sm:$0xff]
  %v2559 = vld [vmem:[%s1076 + $0x408] sm:$0xff]
  %v2560 = vld [vmem:[%s1076 + $0x410] sm:$0xff]
  %v2561 = vld [vmem:[%s1076 + $0x418] sm:$0xff]
  %v2562 = vld [vmem:[%s1076 + $0x420] sm:$0xff]
  %v2563 = vld [vmem:[%s1076 + $0x428] sm:$0xff]
  %v2564 = vld [vmem:[%s1076 + $0x430] sm:$0xff]
  %v2565 = vld [vmem:[%s1076 + $0x438] sm:$0xff]
  %v2566 = vld [vmem:[%s2 + $0x3] sm:$0x1]
  %v2567 = vlaneseq
  %v2568 = vshrl.u32 %v2567, 7
  %v2569 = vsub.s32 0, %v2568
  %v2570 = vrot.slane %v2566, %v2569
  %v2571 = vmul.f32 %v2438, %v2570
  %v2572 = vmul.f32 %v2439, %v2570
  %v2573 = vmul.f32 %v2440, %v2570
  %v2574 = vmul.f32 %v2442, %v2570
  %v2575 = vmul.f32 %v2443, %v2570
  %v2576 = vmul.f32 %v2444, %v2570
  %v2577 = vmul.f32 %v2446, %v2570
  %v2578 = vmul.f32 %v2447, %v2570
  %v2579 = vmul.f32 %v2448, %v2570
  %v2580 = vmul.f32 %v2450, %v2570
  %v2581 = vmul.f32 %v2451, %v2570
  %v2582 = vmul.f32 %v2452, %v2570
  %v2583 = vmul.f32 %v2454, %v2570
  %v2584 = vmul.f32 %v2455, %v2570
  %v2585 = vmul.f32 %v2456, %v2570
  %v2586 = vmul.f32 %v2458, %v2570
  %v2587 = vmul.f32 %v2459, %v2570
  %v2588 = vmul.f32 %v2460, %v2570
  %v2589 = vmul.f32 %v2462, %v2570
  %v2590 = vmul.f32 %v2463, %v2570
  %v2591 = vmul.f32 %v2464, %v2570
  %v2592 = vmul.f32 %v2466, %v2570
  %v2593 = vmul.f32 %v2467, %v2570
  %v2594 = vmul.f32 %v2468, %v2570
  %v2595 = vmul.f32 %v2470, %v2570
  %v2596 = vmul.f32 %v2471, %v2570
  %v2597 = vmul.f32 %v2472, %v2570
  %v2598 = vmul.f32 %v2474, %v2570
  %v2599 = vmul.f32 %v2475, %v2570
  %v2600 = vmul.f32 %v2476, %v2570
  %v2601 = vmul.f32 %v2478, %v2570
  %v2602 = vmul.f32 %v2479, %v2570
  %v2603 = vmul.f32 %v2480, %v2570
  %v2604 = vmul.f32 %v2482, %v2570
  %v2605 = vmul.f32 %v2483, %v2570
  %v2606 = vmul.f32 %v2484, %v2570
  %v2607 = vmul.f32 %v2486, %v2570
  %v2608 = vmul.f32 %v2487, %v2570
  %v2609 = vmul.f32 %v2488, %v2570
  %v2610 = vmul.f32 %v2490, %v2570
  %v2611 = vmul.f32 %v2491, %v2570
  %v2612 = vmul.f32 %v2492, %v2570
  %v2613 = vmul.f32 %v2494, %v2570
  %v2614 = vmul.f32 %v2495, %v2570
  %v2615 = vmul.f32 %v2496, %v2570
  %v2616 = vmul.f32 %v2498, %v2570
  %v2617 = vmul.f32 %v2499, %v2570
  %v2618 = vmul.f32 %v2500, %v2570
  %v2619 = vmul.f32 %v2502, %v2570
  %v2620 = vmul.f32 %v2503, %v2570
  %v2621 = vmul.f32 %v2504, %v2570
  %v2622 = vmul.f32 %v2506, %v2570
  %v2623 = vmul.f32 %v2507, %v2570
  %v2624 = vmul.f32 %v2508, %v2570
  %v2625 = vmul.f32 %v2510, %v2570
  %v2626 = vmul.f32 %v2511, %v2570
  %v2627 = vmul.f32 %v2512, %v2570
  %v2628 = vmul.f32 %v2514, %v2570
  %v2629 = vmul.f32 %v2515, %v2570
  %v2630 = vmul.f32 %v2516, %v2570
  %v2631 = vmul.f32 %v2518, %v2570
  %v2632 = vmul.f32 %v2519, %v2570
  %v2633 = vmul.f32 %v2520, %v2570
  %v2634 = vmul.f32 %v2522, %v2570
  %v2635 = vmul.f32 %v2523, %v2570
  %v2636 = vmul.f32 %v2524, %v2570
  %v2637 = vmul.f32 %v2526, %v2570
  %v2638 = vmul.f32 %v2527, %v2570
  %v2639 = vmul.f32 %v2528, %v2570
  %v2640 = vmul.f32 %v2530, %v2570
  %v2641 = vmul.f32 %v2531, %v2570
  %v2642 = vmul.f32 %v2532, %v2570
  %v2643 = vmul.f32 %v2534, %v2570
  %v2644 = vmul.f32 %v2535, %v2570
  %v2645 = vmul.f32 %v2536, %v2570
  %v2646 = vmul.f32 %v2538, %v2570
  %v2647 = vmul.f32 %v2539, %v2570
  %v2648 = vmul.f32 %v2540, %v2570
  %v2649 = vmul.f32 %v2542, %v2570
  %v2650 = vmul.f32 %v2543, %v2570
  %v2651 = vmul.f32 %v2544, %v2570
  %v2652 = vmul.f32 %v2546, %v2570
  %v2653 = vmul.f32 %v2547, %v2570
  %v2654 = vmul.f32 %v2548, %v2570
  %v2655 = vmul.f32 %v2550, %v2570
  %v2656 = vmul.f32 %v2551, %v2570
  %v2657 = vmul.f32 %v2552, %v2570
  %v2658 = vmul.f32 %v2554, %v2570
  %v2659 = vmul.f32 %v2555, %v2570
  %v2660 = vmul.f32 %v2556, %v2570
  %v2661 = vmul.f32 %v2558, %v2570
  %v2662 = vmul.f32 %v2559, %v2570
  %v2663 = vmul.f32 %v2560, %v2570
  %v2664 = vmul.f32 %v2562, %v2570
  %v2665 = vmul.f32 %v2563, %v2570
  %v2666 = vmul.f32 %v2564, %v2570
  %v2667 = vadd.f32 %v2342, %v2571
  %v2668 = vadd.f32 %v2343, %v2572
  %v2669 = vadd.f32 %v2344, %v2573
  %v2670 = vadd.f32 %v2345, %v2574
  %v2671 = vadd.f32 %v2346, %v2575
  %v2672 = vadd.f32 %v2347, %v2576
  %v2673 = vadd.f32 %v2348, %v2577
  %v2674 = vadd.f32 %v2349, %v2578
  %v2675 = vadd.f32 %v2350, %v2579
  %v2676 = vadd.f32 %v2351, %v2580
  %v2677 = vadd.f32 %v2352, %v2581
  %v2678 = vadd.f32 %v2353, %v2582
  %v2679 = vadd.f32 %v2354, %v2583
  %v2680 = vadd.f32 %v2355, %v2584
  %v2681 = vadd.f32 %v2356, %v2585
  %v2682 = vadd.f32 %v2357, %v2586
  %v2683 = vadd.f32 %v2358, %v2587
  %v2684 = vadd.f32 %v2359, %v2588
  %v2685 = vadd.f32 %v2360, %v2589
  %v2686 = vadd.f32 %v2361, %v2590
  %v2687 = vadd.f32 %v2362, %v2591
  %v2688 = vadd.f32 %v2363, %v2592
  %v2689 = vadd.f32 %v2364, %v2593
  %v2690 = vadd.f32 %v2365, %v2594
  %v2691 = vadd.f32 %v2366, %v2595
  %v2692 = vadd.f32 %v2367, %v2596
  %v2693 = vadd.f32 %v2368, %v2597
  %v2694 = vadd.f32 %v2369, %v2598
  %v2695 = vadd.f32 %v2370, %v2599
  %v2696 = vadd.f32 %v2371, %v2600
  %v2697 = vadd.f32 %v2372, %v2601
  %v2698 = vadd.f32 %v2373, %v2602
  %v2699 = vadd.f32 %v2374, %v2603
  %v2700 = vadd.f32 %v2375, %v2604
  %v2701 = vadd.f32 %v2376, %v2605
  %v2702 = vadd.f32 %v2377, %v2606
  %v2703 = vadd.f32 %v2378, %v2607
  %v2704 = vadd.f32 %v2379, %v2608
  %v2705 = vadd.f32 %v2380, %v2609
  %v2706 = vadd.f32 %v2381, %v2610
  %v2707 = vadd.f32 %v2382, %v2611
  %v2708 = vadd.f32 %v2383, %v2612
  %v2709 = vadd.f32 %v2384, %v2613
  %v2710 = vadd.f32 %v2385, %v2614
  %v2711 = vadd.f32 %v2386, %v2615
  %v2712 = vadd.f32 %v2387, %v2616
  %v2713 = vadd.f32 %v2388, %v2617
  %v2714 = vadd.f32 %v2389, %v2618
  %v2715 = vadd.f32 %v2390, %v2619
  %v2716 = vadd.f32 %v2391, %v2620
  %v2717 = vadd.f32 %v2392, %v2621
  %v2718 = vadd.f32 %v2393, %v2622
  %v2719 = vadd.f32 %v2394, %v2623
  %v2720 = vadd.f32 %v2395, %v2624
  %v2721 = vadd.f32 %v2396, %v2625
  %v2722 = vadd.f32 %v2397, %v2626
  %v2723 = vadd.f32 %v2398, %v2627
  %v2724 = vadd.f32 %v2399, %v2628
  %v2725 = vadd.f32 %v2400, %v2629
  %v2726 = vadd.f32 %v2401, %v2630
  %v2727 = vadd.f32 %v2402, %v2631
  %v2728 = vadd.f32 %v2403, %v2632
  %v2729 = vadd.f32 %v2404, %v2633
  %v2730 = vadd.f32 %v2405, %v2634
  %v2731 = vadd.f32 %v2406, %v2635
  %v2732 = vadd.f32 %v2407, %v2636
  %v2733 = vadd.f32 %v2408, %v2637
  %v2734 = vadd.f32 %v2409, %v2638
  %v2735 = vadd.f32 %v2410, %v2639
  %v2736 = vadd.f32 %v2411, %v2640
  %v2737 = vadd.f32 %v2412, %v2641
  %v2738 = vadd.f32 %v2413, %v2642
  %v2739 = vadd.f32 %v2414, %v2643
  %v2740 = vadd.f32 %v2415, %v2644
  %v2741 = vadd.f32 %v2416, %v2645
  %v2742 = vadd.f32 %v2417, %v2646
  %v2743 = vadd.f32 %v2418, %v2647
  %v2744 = vadd.f32 %v2419, %v2648
  %v2745 = vadd.f32 %v2420, %v2649
  %v2746 = vadd.f32 %v2421, %v2650
  %v2747 = vadd.f32 %v2422, %v2651
  %v2748 = vadd.f32 %v2423, %v2652
  %v2749 = vadd.f32 %v2424, %v2653
  %v2750 = vadd.f32 %v2425, %v2654
  %v2751 = vadd.f32 %v2426, %v2655
  %v2752 = vadd.f32 %v2427, %v2656
  %v2753 = vadd.f32 %v2428, %v2657
  %v2754 = vadd.f32 %v2429, %v2658
  %v2755 = vadd.f32 %v2430, %v2659
  %v2756 = vadd.f32 %v2431, %v2660
  %v2757 = vadd.f32 %v2432, %v2661
  %v2758 = vadd.f32 %v2433, %v2662
  %v2759 = vadd.f32 %v2434, %v2663
  %v2760 = vadd.f32 %v2435, %v2664
  %v2761 = vadd.f32 %v2436, %v2665
  %v2762 = vadd.f32 %v2437, %v2666
  %v2763 = vld [vmem:[%s2 + $0x4] sm:$0x1]
  %v2764 = vlaneseq
  %v2765 = vshrl.u32 %v2764, 7
  %v2766 = vsub.s32 0, %v2765
  %v2767 = vrot.slane %v2763, %v2766
  %v2768 = vmul.f32 %v2439, %v2767
  %v2769 = vmul.f32 %v2440, %v2767
  %v2770 = vmul.f32 %v2443, %v2767
  %v2771 = vmul.f32 %v2444, %v2767
  %v2772 = vmul.f32 %v2447, %v2767
  %v2773 = vmul.f32 %v2448, %v2767
  %v2774 = vmul.f32 %v2451, %v2767
  %v2775 = vmul.f32 %v2452, %v2767
  %v2776 = vmul.f32 %v2455, %v2767
  %v2777 = vmul.f32 %v2456, %v2767
  %v2778 = vmul.f32 %v2459, %v2767
  %v2779 = vmul.f32 %v2460, %v2767
  %v2780 = vmul.f32 %v2463, %v2767
  %v2781 = vmul.f32 %v2464, %v2767
  %v2782 = vmul.f32 %v2467, %v2767
  %v2783 = vmul.f32 %v2468, %v2767
  %v2784 = vmul.f32 %v2471, %v2767
  %v2785 = vmul.f32 %v2472, %v2767
  %v2786 = vmul.f32 %v2475, %v2767
  %v2787 = vmul.f32 %v2476, %v2767
  %v2788 = vmul.f32 %v2479, %v2767
  %v2789 = vmul.f32 %v2480, %v2767
  %v2790 = vmul.f32 %v2483, %v2767
  %v2791 = vmul.f32 %v2484, %v2767
  %v2792 = vmul.f32 %v2487, %v2767
  %v2793 = vmul.f32 %v2488, %v2767
  %v2794 = vmul.f32 %v2491, %v2767
  %v2795 = vmul.f32 %v2492, %v2767
  %v2796 = vmul.f32 %v2495, %v2767
  %v2797 = vmul.f32 %v2496, %v2767
  %v2798 = vmul.f32 %v2499, %v2767
  %v2799 = vmul.f32 %v2500, %v2767
  %v2800 = vmul.f32 %v2503, %v2767
  %v2801 = vmul.f32 %v2504, %v2767
  %v2802 = vmul.f32 %v2507, %v2767
  %v2803 = vmul.f32 %v2508, %v2767
  %v2804 = vmul.f32 %v2511, %v2767
  %v2805 = vmul.f32 %v2512, %v2767
  %v2806 = vmul.f32 %v2515, %v2767
  %v2807 = vmul.f32 %v2516, %v2767
  %v2808 = vmul.f32 %v2519, %v2767
  %v2809 = vmul.f32 %v2520, %v2767
  %v2810 = vmul.f32 %v2523, %v2767
  %v2811 = vmul.f32 %v2524, %v2767
  %v2812 = vmul.f32 %v2527, %v2767
  %v2813 = vmul.f32 %v2528, %v2767
  %v2814 = vmul.f32 %v2531, %v2767
  %v2815 = vmul.f32 %v2532, %v2767
  %v2816 = vmul.f32 %v2535, %v2767
  %v2817 = vmul.f32 %v2536, %v2767
  %v2818 = vmul.f32 %v2539, %v2767
  %v2819 = vmul.f32 %v2540, %v2767
  %v2820 = vmul.f32 %v2543, %v2767
  %v2821 = vmul.f32 %v2544, %v2767
  %v2822 = vmul.f32 %v2547, %v2767
  %v2823 = vmul.f32 %v2548, %v2767
  %v2824 = vmul.f32 %v2551, %v2767
  %v2825 = vmul.f32 %v2552, %v2767
  %v2826 = vmul.f32 %v2555, %v2767
  %v2827 = vmul.f32 %v2556, %v2767
  %v2828 = vmul.f32 %v2559, %v2767
  %v2829 = vmul.f32 %v2560, %v2767
  %v2830 = vmul.f32 %v2563, %v2767
  %v2831 = vmul.f32 %v2564, %v2767
  %v2896 = vrot.slane %v2768, 1
  %v2897 = vrot.slane %v2769, 1
  %v2898 = vsel %vm1599, %v2896, %v2897
  %v2899 = vrot.slane %v2770, 1
  %v2900 = vrot.slane %v2771, 1
  %v2901 = vsel %vm1599, %v2899, %v2900
  %v2902 = vrot.slane %v2772, 1
  %v2903 = vrot.slane %v2773, 1
  %v2904 = vsel %vm1599, %v2902, %v2903
  %v2905 = vrot.slane %v2774, 1
  %v2906 = vrot.slane %v2775, 1
  %v2907 = vsel %vm1599, %v2905, %v2906
  %v2908 = vrot.slane %v2776, 1
  %v2909 = vrot.slane %v2777, 1
  %v2910 = vsel %vm1599, %v2908, %v2909
  %v2911 = vrot.slane %v2778, 1
  %v2912 = vrot.slane %v2779, 1
  %v2913 = vsel %vm1599, %v2911, %v2912
  %v2914 = vrot.slane %v2780, 1
  %v2915 = vrot.slane %v2781, 1
  %v2916 = vsel %vm1599, %v2914, %v2915
  %v2917 = vrot.slane %v2782, 1
  %v2918 = vrot.slane %v2783, 1
  %v2919 = vsel %vm1599, %v2917, %v2918
  %v2920 = vrot.slane %v2784, 1
  %v2921 = vrot.slane %v2785, 1
  %v2922 = vsel %vm1599, %v2920, %v2921
  %v2923 = vrot.slane %v2786, 1
  %v2924 = vrot.slane %v2787, 1
  %v2925 = vsel %vm1599, %v2923, %v2924
  %v2926 = vrot.slane %v2788, 1
  %v2927 = vrot.slane %v2789, 1
  %v2928 = vsel %vm1599, %v2926, %v2927
  %v2929 = vrot.slane %v2790, 1
  %v2930 = vrot.slane %v2791, 1
  %v2931 = vsel %vm1599, %v2929, %v2930
  %v2932 = vrot.slane %v2792, 1
  %v2933 = vrot.slane %v2793, 1
  %v2934 = vsel %vm1599, %v2932, %v2933
  %v2935 = vrot.slane %v2794, 1
  %v2936 = vrot.slane %v2795, 1
  %v2937 = vsel %vm1599, %v2935, %v2936
  %v2938 = vrot.slane %v2796, 1
  %v2939 = vrot.slane %v2797, 1
  %v2940 = vsel %vm1599, %v2938, %v2939
  %v2941 = vrot.slane %v2798, 1
  %v2942 = vrot.slane %v2799, 1
  %v2943 = vsel %vm1599, %v2941, %v2942
  %v2944 = vrot.slane %v2800, 1
  %v2945 = vrot.slane %v2801, 1
  %v2946 = vsel %vm1599, %v2944, %v2945
  %v2947 = vrot.slane %v2802, 1
  %v2948 = vrot.slane %v2803, 1
  %v2949 = vsel %vm1599, %v2947, %v2948
  %v2950 = vrot.slane %v2804, 1
  %v2951 = vrot.slane %v2805, 1
  %v2952 = vsel %vm1599, %v2950, %v2951
  %v2953 = vrot.slane %v2806, 1
  %v2954 = vrot.slane %v2807, 1
  %v2955 = vsel %vm1599, %v2953, %v2954
  %v2956 = vrot.slane %v2808, 1
  %v2957 = vrot.slane %v2809, 1
  %v2958 = vsel %vm1599, %v2956, %v2957
  %v2959 = vrot.slane %v2810, 1
  %v2960 = vrot.slane %v2811, 1
  %v2961 = vsel %vm1599, %v2959, %v2960
  %v2962 = vrot.slane %v2812, 1
  %v2963 = vrot.slane %v2813, 1
  %v2964 = vsel %vm1599, %v2962, %v2963
  %v2965 = vrot.slane %v2814, 1
  %v2966 = vrot.slane %v2815, 1
  %v2967 = vsel %vm1599, %v2965, %v2966
  %v2968 = vrot.slane %v2816, 1
  %v2969 = vrot.slane %v2817, 1
  %v2970 = vsel %vm1599, %v2968, %v2969
  %v2971 = vrot.slane %v2818, 1
  %v2972 = vrot.slane %v2819, 1
  %v2973 = vsel %vm1599, %v2971, %v2972
  %v2974 = vrot.slane %v2820, 1
  %v2975 = vrot.slane %v2821, 1
  %v2976 = vsel %vm1599, %v2974, %v2975
  %v2977 = vrot.slane %v2822, 1
  %v2978 = vrot.slane %v2823, 1
  %v2979 = vsel %vm1599, %v2977, %v2978
  %v2980 = vrot.slane %v2824, 1
  %v2981 = vrot.slane %v2825, 1
  %v2982 = vsel %vm1599, %v2980, %v2981
  %v2983 = vrot.slane %v2826, 1
  %v2984 = vrot.slane %v2827, 1
  %v2985 = vsel %vm1599, %v2983, %v2984
  %v2986 = vrot.slane %v2828, 1
  %v2987 = vrot.slane %v2829, 1
  %v2988 = vsel %vm1599, %v2986, %v2987
  %v2989 = vrot.slane %v2830, 1
  %v2990 = vrot.slane %v2831, 1
  %v2991 = vsel %vm1599, %v2989, %v2990
  %v3088 = vadd.f32 %v2667, %v2896
  %v3089 = vadd.f32 %v2668, %v2898
  %v3090 = vadd.f32 %v2669, %v2897
  %v3091 = vadd.f32 %v2670, %v2899
  %v3092 = vadd.f32 %v2671, %v2901
  %v3093 = vadd.f32 %v2672, %v2900
  %v3094 = vadd.f32 %v2673, %v2902
  %v3095 = vadd.f32 %v2674, %v2904
  %v3096 = vadd.f32 %v2675, %v2903
  %v3097 = vadd.f32 %v2676, %v2905
  %v3098 = vadd.f32 %v2677, %v2907
  %v3099 = vadd.f32 %v2678, %v2906
  %v3100 = vadd.f32 %v2679, %v2908
  %v3101 = vadd.f32 %v2680, %v2910
  %v3102 = vadd.f32 %v2681, %v2909
  %v3103 = vadd.f32 %v2682, %v2911
  %v3104 = vadd.f32 %v2683, %v2913
  %v3105 = vadd.f32 %v2684, %v2912
  %v3106 = vadd.f32 %v2685, %v2914
  %v3107 = vadd.f32 %v2686, %v2916
  %v3108 = vadd.f32 %v2687, %v2915
  %v3109 = vadd.f32 %v2688, %v2917
  %v3110 = vadd.f32 %v2689, %v2919
  %v3111 = vadd.f32 %v2690, %v2918
  %v3112 = vadd.f32 %v2691, %v2920
  %v3113 = vadd.f32 %v2692, %v2922
  %v3114 = vadd.f32 %v2693, %v2921
  %v3115 = vadd.f32 %v2694, %v2923
  %v3116 = vadd.f32 %v2695, %v2925
  %v3117 = vadd.f32 %v2696, %v2924
  %v3118 = vadd.f32 %v2697, %v2926
  %v3119 = vadd.f32 %v2698, %v2928
  %v3120 = vadd.f32 %v2699, %v2927
  %v3121 = vadd.f32 %v2700, %v2929
  %v3122 = vadd.f32 %v2701, %v2931
  %v3123 = vadd.f32 %v2702, %v2930
  %v3124 = vadd.f32 %v2703, %v2932
  %v3125 = vadd.f32 %v2704, %v2934
  %v3126 = vadd.f32 %v2705, %v2933
  %v3127 = vadd.f32 %v2706, %v2935
  %v3128 = vadd.f32 %v2707, %v2937
  %v3129 = vadd.f32 %v2708, %v2936
  %v3130 = vadd.f32 %v2709, %v2938
  %v3131 = vadd.f32 %v2710, %v2940
  %v3132 = vadd.f32 %v2711, %v2939
  %v3133 = vadd.f32 %v2712, %v2941
  %v3134 = vadd.f32 %v2713, %v2943
  %v3135 = vadd.f32 %v2714, %v2942
  %v3136 = vadd.f32 %v2715, %v2944
  %v3137 = vadd.f32 %v2716, %v2946
  %v3138 = vadd.f32 %v2717, %v2945
  %v3139 = vadd.f32 %v2718, %v2947
  %v3140 = vadd.f32 %v2719, %v2949
  %v3141 = vadd.f32 %v2720, %v2948
  %v3142 = vadd.f32 %v2721, %v2950
  %v3143 = vadd.f32 %v2722, %v2952
  %v3144 = vadd.f32 %v2723, %v2951
  %v3145 = vadd.f32 %v2724, %v2953
  %v3146 = vadd.f32 %v2725, %v2955
  %v3147 = vadd.f32 %v2726, %v2954
  %v3148 = vadd.f32 %v2727, %v2956
  %v3149 = vadd.f32 %v2728, %v2958
  %v3150 = vadd.f32 %v2729, %v2957
  %v3151 = vadd.f32 %v2730, %v2959
  %v3152 = vadd.f32 %v2731, %v2961
  %v3153 = vadd.f32 %v2732, %v2960
  %v3154 = vadd.f32 %v2733, %v2962
  %v3155 = vadd.f32 %v2734, %v2964
  %v3156 = vadd.f32 %v2735, %v2963
  %v3157 = vadd.f32 %v2736, %v2965
  %v3158 = vadd.f32 %v2737, %v2967
  %v3159 = vadd.f32 %v2738, %v2966
  %v3160 = vadd.f32 %v2739, %v2968
  %v3161 = vadd.f32 %v2740, %v2970
  %v3162 = vadd.f32 %v2741, %v2969
  %v3163 = vadd.f32 %v2742, %v2971
  %v3164 = vadd.f32 %v2743, %v2973
  %v3165 = vadd.f32 %v2744, %v2972
  %v3166 = vadd.f32 %v2745, %v2974
  %v3167 = vadd.f32 %v2746, %v2976
  %v3168 = vadd.f32 %v2747, %v2975
  %v3169 = vadd.f32 %v2748, %v2977
  %v3170 = vadd.f32 %v2749, %v2979
  %v3171 = vadd.f32 %v2750, %v2978
  %v3172 = vadd.f32 %v2751, %v2980
  %v3173 = vadd.f32 %v2752, %v2982
  %v3174 = vadd.f32 %v2753, %v2981
  %v3175 = vadd.f32 %v2754, %v2983
  %v3176 = vadd.f32 %v2755, %v2985
  %v3177 = vadd.f32 %v2756, %v2984
  %v3178 = vadd.f32 %v2757, %v2986
  %v3179 = vadd.f32 %v2758, %v2988
  %v3180 = vadd.f32 %v2759, %v2987
  %v3181 = vadd.f32 %v2760, %v2989
  %v3182 = vadd.f32 %v2761, %v2991
  %v3183 = vadd.f32 %v2762, %v2990
  %v3184 = vld [vmem:[%s2 + $0x5] sm:$0x1]
  %v3185 = vlaneseq
  %v3186 = vshrl.u32 %v3185, 7
  %v3187 = vsub.s32 0, %v3186
  %v3188 = vrot.slane %v3184, %v3187
  %v3189 = vmul.f32 %v2439, %v3188
  %v3190 = vmul.f32 %v2440, %v3188
  %v3191 = vmul.f32 %v2441, %v3188
  %v3192 = vmul.f32 %v2443, %v3188
  %v3193 = vmul.f32 %v2444, %v3188
  %v3194 = vmul.f32 %v2445, %v3188
  %v3195 = vmul.f32 %v2447, %v3188
  %v3196 = vmul.f32 %v2448, %v3188
  %v3197 = vmul.f32 %v2449, %v3188
  %v3198 = vmul.f32 %v2451, %v3188
  %v3199 = vmul.f32 %v2452, %v3188
  %v3200 = vmul.f32 %v2453, %v3188
  %v3201 = vmul.f32 %v2455, %v3188
  %v3202 = vmul.f32 %v2456, %v3188
  %v3203 = vmul.f32 %v2457, %v3188
  %v3204 = vmul.f32 %v2459, %v3188
  %v3205 = vmul.f32 %v2460, %v3188
  %v3206 = vmul.f32 %v2461, %v3188
  %v3207 = vmul.f32 %v2463, %v3188
  %v3208 = vmul.f32 %v2464, %v3188
  %v3209 = vmul.f32 %v2465, %v3188
  %v3210 = vmul.f32 %v2467, %v3188
  %v3211 = vmul.f32 %v2468, %v3188
  %v3212 = vmul.f32 %v2469, %v3188
  %v3213 = vmul.f32 %v2471, %v3188
  %v3214 = vmul.f32 %v2472, %v3188
  %v3215 = vmul.f32 %v2473, %v3188
  %v3216 = vmul.f32 %v2475, %v3188
  %v3217 = vmul.f32 %v2476, %v3188
  %v3218 = vmul.f32 %v2477, %v3188
  %v3219 = vmul.f32 %v2479, %v3188
  %v3220 = vmul.f32 %v2480, %v3188
  %v3221 = vmul.f32 %v2481, %v3188
  %v3222 = vmul.f32 %v2483, %v3188
  %v3223 = vmul.f32 %v2484, %v3188
  %v3224 = vmul.f32 %v2485, %v3188
  %v3225 = vmul.f32 %v2487, %v3188
  %v3226 = vmul.f32 %v2488, %v3188
  %v3227 = vmul.f32 %v2489, %v3188
  %v3228 = vmul.f32 %v2491, %v3188
  %v3229 = vmul.f32 %v2492, %v3188
  %v3230 = vmul.f32 %v2493, %v3188
  %v3231 = vmul.f32 %v2495, %v3188
  %v3232 = vmul.f32 %v2496, %v3188
  %v3233 = vmul.f32 %v2497, %v3188
  %v3234 = vmul.f32 %v2499, %v3188
  %v3235 = vmul.f32 %v2500, %v3188
  %v3236 = vmul.f32 %v2501, %v3188
  %v3237 = vmul.f32 %v2503, %v3188
  %v3238 = vmul.f32 %v2504, %v3188
  %v3239 = vmul.f32 %v2505, %v3188
  %v3240 = vmul.f32 %v2507, %v3188
  %v3241 = vmul.f32 %v2508, %v3188
  %v3242 = vmul.f32 %v2509, %v3188
  %v3243 = vmul.f32 %v2511, %v3188
  %v3244 = vmul.f32 %v2512, %v3188
  %v3245 = vmul.f32 %v2513, %v3188
  %v3246 = vmul.f32 %v2515, %v3188
  %v3247 = vmul.f32 %v2516, %v3188
  %v3248 = vmul.f32 %v2517, %v3188
  %v3249 = vmul.f32 %v2519, %v3188
  %v3250 = vmul.f32 %v2520, %v3188
  %v3251 = vmul.f32 %v2521, %v3188
  %v3252 = vmul.f32 %v2523, %v3188
  %v3253 = vmul.f32 %v2524, %v3188
  %v3254 = vmul.f32 %v2525, %v3188
  %v3255 = vmul.f32 %v2527, %v3188
  %v3256 = vmul.f32 %v2528, %v3188
  %v3257 = vmul.f32 %v2529, %v3188
  %v3258 = vmul.f32 %v2531, %v3188
  %v3259 = vmul.f32 %v2532, %v3188
  %v3260 = vmul.f32 %v2533, %v3188
  %v3261 = vmul.f32 %v2535, %v3188
  %v3262 = vmul.f32 %v2536, %v3188
  %v3263 = vmul.f32 %v2537, %v3188
  %v3264 = vmul.f32 %v2539, %v3188
  %v3265 = vmul.f32 %v2540, %v3188
  %v3266 = vmul.f32 %v2541, %v3188
  %v3267 = vmul.f32 %v2543, %v3188
  %v3268 = vmul.f32 %v2544, %v3188
  %v3269 = vmul.f32 %v2545, %v3188
  %v3270 = vmul.f32 %v2547, %v3188
  %v3271 = vmul.f32 %v2548, %v3188
  %v3272 = vmul.f32 %v2549, %v3188
  %v3273 = vmul.f32 %v2551, %v3188
  %v3274 = vmul.f32 %v2552, %v3188
  %v3275 = vmul.f32 %v2553, %v3188
  %v3276 = vmul.f32 %v2555, %v3188
  %v3277 = vmul.f32 %v2556, %v3188
  %v3278 = vmul.f32 %v2557, %v3188
  %v3279 = vmul.f32 %v2559, %v3188
  %v3280 = vmul.f32 %v2560, %v3188
  %v3281 = vmul.f32 %v2561, %v3188
  %v3282 = vmul.f32 %v2563, %v3188
  %v3283 = vmul.f32 %v2564, %v3188
  %v3284 = vmul.f32 %v2565, %v3188
  %v3381 = vrot.slane %v3189, 2
  %v3382 = vrot.slane %v3190, 2
  %v3383 = vsel %vm2085, %v3381, %v3382
  %v3384 = vrot.slane %v3191, 2
  %v3385 = vsel %vm2085, %v3382, %v3384
  %v3386 = vrot.slane %v3192, 2
  %v3387 = vrot.slane %v3193, 2
  %v3388 = vsel %vm2085, %v3386, %v3387
  %v3389 = vrot.slane %v3194, 2
  %v3390 = vsel %vm2085, %v3387, %v3389
  %v3391 = vrot.slane %v3195, 2
  %v3392 = vrot.slane %v3196, 2
  %v3393 = vsel %vm2085, %v3391, %v3392
  %v3394 = vrot.slane %v3197, 2
  %v3395 = vsel %vm2085, %v3392, %v3394
  %v3396 = vrot.slane %v3198, 2
  %v3397 = vrot.slane %v3199, 2
  %v3398 = vsel %vm2085, %v3396, %v3397
  %v3399 = vrot.slane %v3200, 2
  %v3400 = vsel %vm2085, %v3397, %v3399
  %v3401 = vrot.slane %v3201, 2
  %v3402 = vrot.slane %v3202, 2
  %v3403 = vsel %vm2085, %v3401, %v3402
  %v3404 = vrot.slane %v3203, 2
  %v3405 = vsel %vm2085, %v3402, %v3404
  %v3406 = vrot.slane %v3204, 2
  %v3407 = vrot.slane %v3205, 2
  %v3408 = vsel %vm2085, %v3406, %v3407
  %v3409 = vrot.slane %v3206, 2
  %v3410 = vsel %vm2085, %v3407, %v3409
  %v3411 = vrot.slane %v3207, 2
  %v3412 = vrot.slane %v3208, 2
  %v3413 = vsel %vm2085, %v3411, %v3412
  %v3414 = vrot.slane %v3209, 2
  %v3415 = vsel %vm2085, %v3412, %v3414
  %v3416 = vrot.slane %v3210, 2
  %v3417 = vrot.slane %v3211, 2
  %v3418 = vsel %vm2085, %v3416, %v3417
  %v3419 = vrot.slane %v3212, 2
  %v3420 = vsel %vm2085, %v3417, %v3419
  %v3421 = vrot.slane %v3213, 2
  %v3422 = vrot.slane %v3214, 2
  %v3423 = vsel %vm2085, %v3421, %v3422
  %v3424 = vrot.slane %v3215, 2
  %v3425 = vsel %vm2085, %v3422, %v3424
  %v3426 = vrot.slane %v3216, 2
  %v3427 = vrot.slane %v3217, 2
  %v3428 = vsel %vm2085, %v3426, %v3427
  %v3429 = vrot.slane %v3218, 2
  %v3430 = vsel %vm2085, %v3427, %v3429
  %v3431 = vrot.slane %v3219, 2
  %v3432 = vrot.slane %v3220, 2
  %v3433 = vsel %vm2085, %v3431, %v3432
  %v3434 = vrot.slane %v3221, 2
  %v3435 = vsel %vm2085, %v3432, %v3434
  %v3436 = vrot.slane %v3222, 2
  %v3437 = vrot.slane %v3223, 2
  %v3438 = vsel %vm2085, %v3436, %v3437
  %v3439 = vrot.slane %v3224, 2
  %v3440 = vsel %vm2085, %v3437, %v3439
  %v3441 = vrot.slane %v3225, 2
  %v3442 = vrot.slane %v3226, 2
  %v3443 = vsel %vm2085, %v3441, %v3442
  %v3444 = vrot.slane %v3227, 2
  %v3445 = vsel %vm2085, %v3442, %v3444
  %v3446 = vrot.slane %v3228, 2
  %v3447 = vrot.slane %v3229, 2
  %v3448 = vsel %vm2085, %v3446, %v3447
  %v3449 = vrot.slane %v3230, 2
  %v3450 = vsel %vm2085, %v3447, %v3449
  %v3451 = vrot.slane %v3231, 2
  %v3452 = vrot.slane %v3232, 2
  %v3453 = vsel %vm2085, %v3451, %v3452
  %v3454 = vrot.slane %v3233, 2
  %v3455 = vsel %vm2085, %v3452, %v3454
  %v3456 = vrot.slane %v3234, 2
  %v3457 = vrot.slane %v3235, 2
  %v3458 = vsel %vm2085, %v3456, %v3457
  %v3459 = vrot.slane %v3236, 2
  %v3460 = vsel %vm2085, %v3457, %v3459
  %v3461 = vrot.slane %v3237, 2
  %v3462 = vrot.slane %v3238, 2
  %v3463 = vsel %vm2085, %v3461, %v3462
  %v3464 = vrot.slane %v3239, 2
  %v3465 = vsel %vm2085, %v3462, %v3464
  %v3466 = vrot.slane %v3240, 2
  %v3467 = vrot.slane %v3241, 2
  %v3468 = vsel %vm2085, %v3466, %v3467
  %v3469 = vrot.slane %v3242, 2
  %v3470 = vsel %vm2085, %v3467, %v3469
  %v3471 = vrot.slane %v3243, 2
  %v3472 = vrot.slane %v3244, 2
  %v3473 = vsel %vm2085, %v3471, %v3472
  %v3474 = vrot.slane %v3245, 2
  %v3475 = vsel %vm2085, %v3472, %v3474
  %v3476 = vrot.slane %v3246, 2
  %v3477 = vrot.slane %v3247, 2
  %v3478 = vsel %vm2085, %v3476, %v3477
  %v3479 = vrot.slane %v3248, 2
  %v3480 = vsel %vm2085, %v3477, %v3479
  %v3481 = vrot.slane %v3249, 2
  %v3482 = vrot.slane %v3250, 2
  %v3483 = vsel %vm2085, %v3481, %v3482
  %v3484 = vrot.slane %v3251, 2
  %v3485 = vsel %vm2085, %v3482, %v3484
  %v3486 = vrot.slane %v3252, 2
  %v3487 = vrot.slane %v3253, 2
  %v3488 = vsel %vm2085, %v3486, %v3487
  %v3489 = vrot.slane %v3254, 2
  %v3490 = vsel %vm2085, %v3487, %v3489
  %v3491 = vrot.slane %v3255, 2
  %v3492 = vrot.slane %v3256, 2
  %v3493 = vsel %vm2085, %v3491, %v3492
  %v3494 = vrot.slane %v3257, 2
  %v3495 = vsel %vm2085, %v3492, %v3494
  %v3496 = vrot.slane %v3258, 2
  %v3497 = vrot.slane %v3259, 2
  %v3498 = vsel %vm2085, %v3496, %v3497
  %v3499 = vrot.slane %v3260, 2
  %v3500 = vsel %vm2085, %v3497, %v3499
  %v3501 = vrot.slane %v3261, 2
  %v3502 = vrot.slane %v3262, 2
  %v3503 = vsel %vm2085, %v3501, %v3502
  %v3504 = vrot.slane %v3263, 2
  %v3505 = vsel %vm2085, %v3502, %v3504
  %v3506 = vrot.slane %v3264, 2
  %v3507 = vrot.slane %v3265, 2
  %v3508 = vsel %vm2085, %v3506, %v3507
  %v3509 = vrot.slane %v3266, 2
  %v3510 = vsel %vm2085, %v3507, %v3509
  %v3511 = vrot.slane %v3267, 2
  %v3512 = vrot.slane %v3268, 2
  %v3513 = vsel %vm2085, %v3511, %v3512
  %v3514 = vrot.slane %v3269, 2
  %v3515 = vsel %vm2085, %v3512, %v3514
  %v3516 = vrot.slane %v3270, 2
  %v3517 = vrot.slane %v3271, 2
  %v3518 = vsel %vm2085, %v3516, %v3517
  %v3519 = vrot.slane %v3272, 2
  %v3520 = vsel %vm2085, %v3517, %v3519
  %v3521 = vrot.slane %v3273, 2
  %v3522 = vrot.slane %v3274, 2
  %v3523 = vsel %vm2085, %v3521, %v3522
  %v3524 = vrot.slane %v3275, 2
  %v3525 = vsel %vm2085, %v3522, %v3524
  %v3526 = vrot.slane %v3276, 2
  %v3527 = vrot.slane %v3277, 2
  %v3528 = vsel %vm2085, %v3526, %v3527
  %v3529 = vrot.slane %v3278, 2
  %v3530 = vsel %vm2085, %v3527, %v3529
  %v3531 = vrot.slane %v3279, 2
  %v3532 = vrot.slane %v3280, 2
  %v3533 = vsel %vm2085, %v3531, %v3532
  %v3534 = vrot.slane %v3281, 2
  %v3535 = vsel %vm2085, %v3532, %v3534
  %v3536 = vrot.slane %v3282, 2
  %v3537 = vrot.slane %v3283, 2
  %v3538 = vsel %vm2085, %v3536, %v3537
  %v3539 = vrot.slane %v3284, 2
  %v3540 = vsel %vm2085, %v3537, %v3539
  %v3637 = vadd.f32 %v3088, %v3381
  %v3638 = vadd.f32 %v3089, %v3383
  %v3639 = vadd.f32 %v3090, %v3385
  %v3640 = vadd.f32 %v3091, %v3386
  %v3641 = vadd.f32 %v3092, %v3388
  %v3642 = vadd.f32 %v3093, %v3390
  %v3643 = vadd.f32 %v3094, %v3391
  %v3644 = vadd.f32 %v3095, %v3393
  %v3645 = vadd.f32 %v3096, %v3395
  %v3646 = vadd.f32 %v3097, %v3396
  %v3647 = vadd.f32 %v3098, %v3398
  %v3648 = vadd.f32 %v3099, %v3400
  %v3649 = vadd.f32 %v3100, %v3401
  %v3650 = vadd.f32 %v3101, %v3403
  %v3651 = vadd.f32 %v3102, %v3405
  %v3652 = vadd.f32 %v3103, %v3406
  %v3653 = vadd.f32 %v3104, %v3408
  %v3654 = vadd.f32 %v3105, %v3410
  %v3655 = vadd.f32 %v3106, %v3411
  %v3656 = vadd.f32 %v3107, %v3413
  %v3657 = vadd.f32 %v3108, %v3415
  %v3658 = vadd.f32 %v3109, %v3416
  %v3659 = vadd.f32 %v3110, %v3418
  %v3660 = vadd.f32 %v3111, %v3420
  %v3661 = vadd.f32 %v3112, %v3421
  %v3662 = vadd.f32 %v3113, %v3423
  %v3663 = vadd.f32 %v3114, %v3425
  %v3664 = vadd.f32 %v3115, %v3426
  %v3665 = vadd.f32 %v3116, %v3428
  %v3666 = vadd.f32 %v3117, %v3430
  %v3667 = vadd.f32 %v3118, %v3431
  %v3668 = vadd.f32 %v3119, %v3433
  %v3669 = vadd.f32 %v3120, %v3435
  %v3670 = vadd.f32 %v3121, %v3436
  %v3671 = vadd.f32 %v3122, %v3438
  %v3672 = vadd.f32 %v3123, %v3440
  %v3673 = vadd.f32 %v3124, %v3441
  %v3674 = vadd.f32 %v3125, %v3443
  %v3675 = vadd.f32 %v3126, %v3445
  %v3676 = vadd.f32 %v3127, %v3446
  %v3677 = vadd.f32 %v3128, %v3448
  %v3678 = vadd.f32 %v3129, %v3450
  %v3679 = vadd.f32 %v3130, %v3451
  %v3680 = vadd.f32 %v3131, %v3453
  %v3681 = vadd.f32 %v3132, %v3455
  %v3682 = vadd.f32 %v3133, %v3456
  %v3683 = vadd.f32 %v3134, %v3458
  %v3684 = vadd.f32 %v3135, %v3460
  %v3685 = vadd.f32 %v3136, %v3461
  %v3686 = vadd.f32 %v3137, %v3463
  %v3687 = vadd.f32 %v3138, %v3465
  %v3688 = vadd.f32 %v3139, %v3466
  %v3689 = vadd.f32 %v3140, %v3468
  %v3690 = vadd.f32 %v3141, %v3470
  %v3691 = vadd.f32 %v3142, %v3471
  %v3692 = vadd.f32 %v3143, %v3473
  %v3693 = vadd.f32 %v3144, %v3475
  %v3694 = vadd.f32 %v3145, %v3476
  %v3695 = vadd.f32 %v3146, %v3478
  %v3696 = vadd.f32 %v3147, %v3480
  %v3697 = vadd.f32 %v3148, %v3481
  %v3698 = vadd.f32 %v3149, %v3483
  %v3699 = vadd.f32 %v3150, %v3485
  %v3700 = vadd.f32 %v3151, %v3486
  %v3701 = vadd.f32 %v3152, %v3488
  %v3702 = vadd.f32 %v3153, %v3490
  %v3703 = vadd.f32 %v3154, %v3491
  %v3704 = vadd.f32 %v3155, %v3493
  %v3705 = vadd.f32 %v3156, %v3495
  %v3706 = vadd.f32 %v3157, %v3496
  %v3707 = vadd.f32 %v3158, %v3498
  %v3708 = vadd.f32 %v3159, %v3500
  %v3709 = vadd.f32 %v3160, %v3501
  %v3710 = vadd.f32 %v3161, %v3503
  %v3711 = vadd.f32 %v3162, %v3505
  %v3712 = vadd.f32 %v3163, %v3506
  %v3713 = vadd.f32 %v3164, %v3508
  %v3714 = vadd.f32 %v3165, %v3510
  %v3715 = vadd.f32 %v3166, %v3511
  %v3716 = vadd.f32 %v3167, %v3513
  %v3717 = vadd.f32 %v3168, %v3515
  %v3718 = vadd.f32 %v3169, %v3516
  %v3719 = vadd.f32 %v3170, %v3518
  %v3720 = vadd.f32 %v3171, %v3520
  %v3721 = vadd.f32 %v3172, %v3521
  %v3722 = vadd.f32 %v3173, %v3523
  %v3723 = vadd.f32 %v3174, %v3525
  %v3724 = vadd.f32 %v3175, %v3526
  %v3725 = vadd.f32 %v3176, %v3528
  %v3726 = vadd.f32 %v3177, %v3530
  %v3727 = vadd.f32 %v3178, %v3531
  %v3728 = vadd.f32 %v3179, %v3533
  %v3729 = vadd.f32 %v3180, %v3535
  %v3730 = vadd.f32 %v3181, %v3536
  %v3731 = vadd.f32 %v3182, %v3538
  %v3732 = vadd.f32 %v3183, %v3540
  %s3733 = scalar_lea.vmem [#allocation2], 64
  %v3734 = vld [vmem:[%s3733] sm:$0xff]
  %v3735 = vld [vmem:[%s3733 + $0x8] sm:$0xff]
  %v3736 = vld [vmem:[%s3733 + $0x10] sm:$0xff]
  %v3737 = vld [vmem:[%s3733 + $0x18] sm:$0xff]
  %v3738 = vld [vmem:[%s3733 + $0x20] sm:$0xff]
  %v3739 = vld [vmem:[%s3733 + $0x28] sm:$0xff]
  %v3740 = vld [vmem:[%s3733 + $0x30] sm:$0xff]
  %v3741 = vld [vmem:[%s3733 + $0x38] sm:$0xff]
  %v3742 = vld [vmem:[%s3733 + $0x40] sm:$0xff]
  %v3743 = vld [vmem:[%s3733 + $0x48] sm:$0xff]
  %v3744 = vld [vmem:[%s3733 + $0x50] sm:$0xff]
  %v3745 = vld [vmem:[%s3733 + $0x58] sm:$0xff]
  %v3746 = vld [vmem:[%s3733 + $0x60] sm:$0xff]
  %v3747 = vld [vmem:[%s3733 + $0x68] sm:$0xff]
  %v3748 = vld [vmem:[%s3733 + $0x70] sm:$0xff]
  %v3749 = vld [vmem:[%s3733 + $0x78] sm:$0xff]
  %v3750 = vld [vmem:[%s3733 + $0x80] sm:$0xff]
  %v3751 = vld [vmem:[%s3733 + $0x88] sm:$0xff]
  %v3752 = vld [vmem:[%s3733 + $0x90] sm:$0xff]
  %v3753 = vld [vmem:[%s3733 + $0x98] sm:$0xff]
  %v3754 = vld [vmem:[%s3733 + $0xa0] sm:$0xff]
  %v3755 = vld [vmem:[%s3733 + $0xa8] sm:$0xff]
  %v3756 = vld [vmem:[%s3733 + $0xb0] sm:$0xff]
  %v3757 = vld [vmem:[%s3733 + $0xb8] sm:$0xff]
  %v3758 = vld [vmem:[%s3733 + $0xc0] sm:$0xff]
  %v3759 = vld [vmem:[%s3733 + $0xc8] sm:$0xff]
  %v3760 = vld [vmem:[%s3733 + $0xd0] sm:$0xff]
  %v3761 = vld [vmem:[%s3733 + $0xd8] sm:$0xff]
  %v3762 = vld [vmem:[%s3733 + $0xe0] sm:$0xff]
  %v3763 = vld [vmem:[%s3733 + $0xe8] sm:$0xff]
  %v3764 = vld [vmem:[%s3733 + $0xf0] sm:$0xff]
  %v3765 = vld [vmem:[%s3733 + $0xf8] sm:$0xff]
  %v3766 = vld [vmem:[%s3733 + $0x100] sm:$0xff]
  %v3767 = vld [vmem:[%s3733 + $0x108] sm:$0xff]
  %v3768 = vld [vmem:[%s3733 + $0x110] sm:$0xff]
  %v3769 = vld [vmem:[%s3733 + $0x118] sm:$0xff]
  %v3770 = vld [vmem:[%s3733 + $0x120] sm:$0xff]
  %v3771 = vld [vmem:[%s3733 + $0x128] sm:$0xff]
  %v3772 = vld [vmem:[%s3733 + $0x130] sm:$0xff]
  %v3773 = vld [vmem:[%s3733 + $0x138] sm:$0xff]
  %v3774 = vld [vmem:[%s3733 + $0x140] sm:$0xff]
  %v3775 = vld [vmem:[%s3733 + $0x148] sm:$0xff]
  %v3776 = vld [vmem:[%s3733 + $0x150] sm:$0xff]
  %v3777 = vld [vmem:[%s3733 + $0x158] sm:$0xff]
  %v3778 = vld [vmem:[%s3733 + $0x160] sm:$0xff]
  %v3779 = vld [vmem:[%s3733 + $0x168] sm:$0xff]
  %v3780 = vld [vmem:[%s3733 + $0x170] sm:$0xff]
  %v3781 = vld [vmem:[%s3733 + $0x178] sm:$0xff]
  %v3782 = vld [vmem:[%s3733 + $0x180] sm:$0xff]
  %v3783 = vld [vmem:[%s3733 + $0x188] sm:$0xff]
  %v3784 = vld [vmem:[%s3733 + $0x190] sm:$0xff]
  %v3785 = vld [vmem:[%s3733 + $0x198] sm:$0xff]
  %v3786 = vld [vmem:[%s3733 + $0x1a0] sm:$0xff]
  %v3787 = vld [vmem:[%s3733 + $0x1a8] sm:$0xff]
  %v3788 = vld [vmem:[%s3733 + $0x1b0] sm:$0xff]
  %v3789 = vld [vmem:[%s3733 + $0x1b8] sm:$0xff]
  %v3790 = vld [vmem:[%s3733 + $0x1c0] sm:$0xff]
  %v3791 = vld [vmem:[%s3733 + $0x1c8] sm:$0xff]
  %v3792 = vld [vmem:[%s3733 + $0x1d0] sm:$0xff]
  %v3793 = vld [vmem:[%s3733 + $0x1d8] sm:$0xff]
  %v3794 = vld [vmem:[%s3733 + $0x1e0] sm:$0xff]
  %v3795 = vld [vmem:[%s3733 + $0x1e8] sm:$0xff]
  %v3796 = vld [vmem:[%s3733 + $0x1f0] sm:$0xff]
  %v3797 = vld [vmem:[%s3733 + $0x1f8] sm:$0xff]
  %v3798 = vld [vmem:[%s3733 + $0x240] sm:$0xff]
  %v3799 = vld [vmem:[%s3733 + $0x248] sm:$0xff]
  %v3800 = vld [vmem:[%s3733 + $0x250] sm:$0xff]
  %v3801 = vld [vmem:[%s3733 + $0x258] sm:$0xff]
  %v3802 = vld [vmem:[%s3733 + $0x260] sm:$0xff]
  %v3803 = vld [vmem:[%s3733 + $0x268] sm:$0xff]
  %v3804 = vld [vmem:[%s3733 + $0x270] sm:$0xff]
  %v3805 = vld [vmem:[%s3733 + $0x278] sm:$0xff]
  %v3806 = vld [vmem:[%s3733 + $0x280] sm:$0xff]
  %v3807 = vld [vmem:[%s3733 + $0x288] sm:$0xff]
  %v3808 = vld [vmem:[%s3733 + $0x290] sm:$0xff]
  %v3809 = vld [vmem:[%s3733 + $0x298] sm:$0xff]
  %v3810 = vld [vmem:[%s3733 + $0x2a0] sm:$0xff]
  %v3811 = vld [vmem:[%s3733 + $0x2a8] sm:$0xff]
  %v3812 = vld [vmem:[%s3733 + $0x2b0] sm:$0xff]
  %v3813 = vld [vmem:[%s3733 + $0x2b8] sm:$0xff]
  %v3814 = vld [vmem:[%s3733 + $0x2c0] sm:$0xff]
  %v3815 = vld [vmem:[%s3733 + $0x2c8] sm:$0xff]
  %v3816 = vld [vmem:[%s3733 + $0x2d0] sm:$0xff]
  %v3817 = vld [vmem:[%s3733 + $0x2d8] sm:$0xff]
  %v3818 = vld [vmem:[%s3733 + $0x2e0] sm:$0xff]
  %v3819 = vld [vmem:[%s3733 + $0x2e8] sm:$0xff]
  %v3820 = vld [vmem:[%s3733 + $0x2f0] sm:$0xff]
  %v3821 = vld [vmem:[%s3733 + $0x2f8] sm:$0xff]
  %v3822 = vld [vmem:[%s3733 + $0x300] sm:$0xff]
  %v3823 = vld [vmem:[%s3733 + $0x308] sm:$0xff]
  %v3824 = vld [vmem:[%s3733 + $0x310] sm:$0xff]
  %v3825 = vld [vmem:[%s3733 + $0x318] sm:$0xff]
  %v3826 = vld [vmem:[%s3733 + $0x320] sm:$0xff]
  %v3827 = vld [vmem:[%s3733 + $0x328] sm:$0xff]
  %v3828 = vld [vmem:[%s3733 + $0x330] sm:$0xff]
  %v3829 = vld [vmem:[%s3733 + $0x338] sm:$0xff]
  %v3830 = vld [vmem:[%s3733 + $0x340] sm:$0xff]
  %v3831 = vld [vmem:[%s3733 + $0x348] sm:$0xff]
  %v3832 = vld [vmem:[%s3733 + $0x350] sm:$0xff]
  %v3833 = vld [vmem:[%s3733 + $0x358] sm:$0xff]
  %v3834 = vld [vmem:[%s3733 + $0x360] sm:$0xff]
  %v3835 = vld [vmem:[%s3733 + $0x368] sm:$0xff]
  %v3836 = vld [vmem:[%s3733 + $0x370] sm:$0xff]
  %v3837 = vld [vmem:[%s3733 + $0x378] sm:$0xff]
  %v3838 = vld [vmem:[%s3733 + $0x380] sm:$0xff]
  %v3839 = vld [vmem:[%s3733 + $0x388] sm:$0xff]
  %v3840 = vld [vmem:[%s3733 + $0x390] sm:$0xff]
  %v3841 = vld [vmem:[%s3733 + $0x398] sm:$0xff]
  %v3842 = vld [vmem:[%s3733 + $0x3a0] sm:$0xff]
  %v3843 = vld [vmem:[%s3733 + $0x3a8] sm:$0xff]
  %v3844 = vld [vmem:[%s3733 + $0x3b0] sm:$0xff]
  %v3845 = vld [vmem:[%s3733 + $0x3b8] sm:$0xff]
  %v3846 = vld [vmem:[%s3733 + $0x3c0] sm:$0xff]
  %v3847 = vld [vmem:[%s3733 + $0x3c8] sm:$0xff]
  %v3848 = vld [vmem:[%s3733 + $0x3d0] sm:$0xff]
  %v3849 = vld [vmem:[%s3733 + $0x3d8] sm:$0xff]
  %v3850 = vld [vmem:[%s3733 + $0x3e0] sm:$0xff]
  %v3851 = vld [vmem:[%s3733 + $0x3e8] sm:$0xff]
  %v3852 = vld [vmem:[%s3733 + $0x3f0] sm:$0xff]
  %v3853 = vld [vmem:[%s3733 + $0x3f8] sm:$0xff]
  %v3854 = vld [vmem:[%s3733 + $0x400] sm:$0xff]
  %v3855 = vld [vmem:[%s3733 + $0x408] sm:$0xff]
  %v3856 = vld [vmem:[%s3733 + $0x410] sm:$0xff]
  %v3857 = vld [vmem:[%s3733 + $0x418] sm:$0xff]
  %v3858 = vld [vmem:[%s3733 + $0x420] sm:$0xff]
  %v3859 = vld [vmem:[%s3733 + $0x428] sm:$0xff]
  %v3860 = vld [vmem:[%s3733 + $0x430] sm:$0xff]
  %v3861 = vld [vmem:[%s3733 + $0x438] sm:$0xff]
  %v3862 = vld [vmem:[%s2 + $0x6] sm:$0x1]
  %v3863 = vlaneseq
  %v3864 = vshrl.u32 %v3863, 7
  %v3865 = vsub.s32 0, %v3864
  %v3866 = vrot.slane %v3862, %v3865
  %v3867 = vmul.f32 %v3734, %v3866
  %v3868 = vmul.f32 %v3735, %v3866
  %v3869 = vmul.f32 %v3736, %v3866
  %v3870 = vmul.f32 %v3738, %v3866
  %v3871 = vmul.f32 %v3739, %v3866
  %v3872 = vmul.f32 %v3740, %v3866
  %v3873 = vmul.f32 %v3742, %v3866
  %v3874 = vmul.f32 %v3743, %v3866
  %v3875 = vmul.f32 %v3744, %v3866
  %v3876 = vmul.f32 %v3746, %v3866
  %v3877 = vmul.f32 %v3747, %v3866
  %v3878 = vmul.f32 %v3748, %v3866
  %v3879 = vmul.f32 %v3750, %v3866
  %v3880 = vmul.f32 %v3751, %v3866
  %v3881 = vmul.f32 %v3752, %v3866
  %v3882 = vmul.f32 %v3754, %v3866
  %v3883 = vmul.f32 %v3755, %v3866
  %v3884 = vmul.f32 %v3756, %v3866
  %v3885 = vmul.f32 %v3758, %v3866
  %v3886 = vmul.f32 %v3759, %v3866
  %v3887 = vmul.f32 %v3760, %v3866
  %v3888 = vmul.f32 %v3762, %v3866
  %v3889 = vmul.f32 %v3763, %v3866
  %v3890 = vmul.f32 %v3764, %v3866
  %v3891 = vmul.f32 %v3766, %v3866
  %v3892 = vmul.f32 %v3767, %v3866
  %v3893 = vmul.f32 %v3768, %v3866
  %v3894 = vmul.f32 %v3770, %v3866
  %v3895 = vmul.f32 %v3771, %v3866
  %v3896 = vmul.f32 %v3772, %v3866
  %v3897 = vmul.f32 %v3774, %v3866
  %v3898 = vmul.f32 %v3775, %v3866
  %v3899 = vmul.f32 %v3776, %v3866
  %v3900 = vmul.f32 %v3778, %v3866
  %v3901 = vmul.f32 %v3779, %v3866
  %v3902 = vmul.f32 %v3780, %v3866
  %v3903 = vmul.f32 %v3782, %v3866
  %v3904 = vmul.f32 %v3783, %v3866
  %v3905 = vmul.f32 %v3784, %v3866
  %v3906 = vmul.f32 %v3786, %v3866
  %v3907 = vmul.f32 %v3787, %v3866
  %v3908 = vmul.f32 %v3788, %v3866
  %v3909 = vmul.f32 %v3790, %v3866
  %v3910 = vmul.f32 %v3791, %v3866
  %v3911 = vmul.f32 %v3792, %v3866
  %v3912 = vmul.f32 %v3794, %v3866
  %v3913 = vmul.f32 %v3795, %v3866
  %v3914 = vmul.f32 %v3796, %v3866
  %v3915 = vmul.f32 %v3798, %v3866
  %v3916 = vmul.f32 %v3799, %v3866
  %v3917 = vmul.f32 %v3800, %v3866
  %v3918 = vmul.f32 %v3802, %v3866
  %v3919 = vmul.f32 %v3803, %v3866
  %v3920 = vmul.f32 %v3804, %v3866
  %v3921 = vmul.f32 %v3806, %v3866
  %v3922 = vmul.f32 %v3807, %v3866
  %v3923 = vmul.f32 %v3808, %v3866
  %v3924 = vmul.f32 %v3810, %v3866
  %v3925 = vmul.f32 %v3811, %v3866
  %v3926 = vmul.f32 %v3812, %v3866
  %v3927 = vmul.f32 %v3814, %v3866
  %v3928 = vmul.f32 %v3815, %v3866
  %v3929 = vmul.f32 %v3816, %v3866
  %v3930 = vmul.f32 %v3818, %v3866
  %v3931 = vmul.f32 %v3819, %v3866
  %v3932 = vmul.f32 %v3820, %v3866
  %v3933 = vmul.f32 %v3822, %v3866
  %v3934 = vmul.f32 %v3823, %v3866
  %v3935 = vmul.f32 %v3824, %v3866
  %v3936 = vmul.f32 %v3826, %v3866
  %v3937 = vmul.f32 %v3827, %v3866
  %v3938 = vmul.f32 %v3828, %v3866
  %v3939 = vmul.f32 %v3830, %v3866
  %v3940 = vmul.f32 %v3831, %v3866
  %v3941 = vmul.f32 %v3832, %v3866
  %v3942 = vmul.f32 %v3834, %v3866
  %v3943 = vmul.f32 %v3835, %v3866
  %v3944 = vmul.f32 %v3836, %v3866
  %v3945 = vmul.f32 %v3838, %v3866
  %v3946 = vmul.f32 %v3839, %v3866
  %v3947 = vmul.f32 %v3840, %v3866
  %v3948 = vmul.f32 %v3842, %v3866
  %v3949 = vmul.f32 %v3843, %v3866
  %v3950 = vmul.f32 %v3844, %v3866
  %v3951 = vmul.f32 %v3846, %v3866
  %v3952 = vmul.f32 %v3847, %v3866
  %v3953 = vmul.f32 %v3848, %v3866
  %v3954 = vmul.f32 %v3850, %v3866
  %v3955 = vmul.f32 %v3851, %v3866
  %v3956 = vmul.f32 %v3852, %v3866
  %v3957 = vmul.f32 %v3854, %v3866
  %v3958 = vmul.f32 %v3855, %v3866
  %v3959 = vmul.f32 %v3856, %v3866
  %v3960 = vmul.f32 %v3858, %v3866
  %v3961 = vmul.f32 %v3859, %v3866
  %v3962 = vmul.f32 %v3860, %v3866
  %v3963 = vadd.f32 %v3637, %v3867
  %v3964 = vadd.f32 %v3638, %v3868
  %v3965 = vadd.f32 %v3639, %v3869
  %v3966 = vadd.f32 %v3640, %v3870
  %v3967 = vadd.f32 %v3641, %v3871
  %v3968 = vadd.f32 %v3642, %v3872
  %v3969 = vadd.f32 %v3643, %v3873
  %v3970 = vadd.f32 %v3644, %v3874
  %v3971 = vadd.f32 %v3645, %v3875
  %v3972 = vadd.f32 %v3646, %v3876
  %v3973 = vadd.f32 %v3647, %v3877
  %v3974 = vadd.f32 %v3648, %v3878
  %v3975 = vadd.f32 %v3649, %v3879
  %v3976 = vadd.f32 %v3650, %v3880
  %v3977 = vadd.f32 %v3651, %v3881
  %v3978 = vadd.f32 %v3652, %v3882
  %v3979 = vadd.f32 %v3653, %v3883
  %v3980 = vadd.f32 %v3654, %v3884
  %v3981 = vadd.f32 %v3655, %v3885
  %v3982 = vadd.f32 %v3656, %v3886
  %v3983 = vadd.f32 %v3657, %v3887
  %v3984 = vadd.f32 %v3658, %v3888
  %v3985 = vadd.f32 %v3659, %v3889
  %v3986 = vadd.f32 %v3660, %v3890
  %v3987 = vadd.f32 %v3661, %v3891
  %v3988 = vadd.f32 %v3662, %v3892
  %v3989 = vadd.f32 %v3663, %v3893
  %v3990 = vadd.f32 %v3664, %v3894
  %v3991 = vadd.f32 %v3665, %v3895
  %v3992 = vadd.f32 %v3666, %v3896
  %v3993 = vadd.f32 %v3667, %v3897
  %v3994 = vadd.f32 %v3668, %v3898
  %v3995 = vadd.f32 %v3669, %v3899
  %v3996 = vadd.f32 %v3670, %v3900
  %v3997 = vadd.f32 %v3671, %v3901
  %v3998 = vadd.f32 %v3672, %v3902
  %v3999 = vadd.f32 %v3673, %v3903
  %v4000 = vadd.f32 %v3674, %v3904
  %v4001 = vadd.f32 %v3675, %v3905
  %v4002 = vadd.f32 %v3676, %v3906
  %v4003 = vadd.f32 %v3677, %v3907
  %v4004 = vadd.f32 %v3678, %v3908
  %v4005 = vadd.f32 %v3679, %v3909
  %v4006 = vadd.f32 %v3680, %v3910
  %v4007 = vadd.f32 %v3681, %v3911
  %v4008 = vadd.f32 %v3682, %v3912
  %v4009 = vadd.f32 %v3683, %v3913
  %v4010 = vadd.f32 %v3684, %v3914
  %v4011 = vadd.f32 %v3685, %v3915
  %v4012 = vadd.f32 %v3686, %v3916
  %v4013 = vadd.f32 %v3687, %v3917
  %v4014 = vadd.f32 %v3688, %v3918
  %v4015 = vadd.f32 %v3689, %v3919
  %v4016 = vadd.f32 %v3690, %v3920
  %v4017 = vadd.f32 %v3691, %v3921
  %v4018 = vadd.f32 %v3692, %v3922
  %v4019 = vadd.f32 %v3693, %v3923
  %v4020 = vadd.f32 %v3694, %v3924
  %v4021 = vadd.f32 %v3695, %v3925
  %v4022 = vadd.f32 %v3696, %v3926
  %v4023 = vadd.f32 %v3697, %v3927
  %v4024 = vadd.f32 %v3698, %v3928
  %v4025 = vadd.f32 %v3699, %v3929
  %v4026 = vadd.f32 %v3700, %v3930
  %v4027 = vadd.f32 %v3701, %v3931
  %v4028 = vadd.f32 %v3702, %v3932
  %v4029 = vadd.f32 %v3703, %v3933
  %v4030 = vadd.f32 %v3704, %v3934
  %v4031 = vadd.f32 %v3705, %v3935
  %v4032 = vadd.f32 %v3706, %v3936
  %v4033 = vadd.f32 %v3707, %v3937
  %v4034 = vadd.f32 %v3708, %v3938
  %v4035 = vadd.f32 %v3709, %v3939
  %v4036 = vadd.f32 %v3710, %v3940
  %v4037 = vadd.f32 %v3711, %v3941
  %v4038 = vadd.f32 %v3712, %v3942
  %v4039 = vadd.f32 %v3713, %v3943
  %v4040 = vadd.f32 %v3714, %v3944
  %v4041 = vadd.f32 %v3715, %v3945
  %v4042 = vadd.f32 %v3716, %v3946
  %v4043 = vadd.f32 %v3717, %v3947
  %v4044 = vadd.f32 %v3718, %v3948
  %v4045 = vadd.f32 %v3719, %v3949
  %v4046 = vadd.f32 %v3720, %v3950
  %v4047 = vadd.f32 %v3721, %v3951
  %v4048 = vadd.f32 %v3722, %v3952
  %v4049 = vadd.f32 %v3723, %v3953
  %v4050 = vadd.f32 %v3724, %v3954
  %v4051 = vadd.f32 %v3725, %v3955
  %v4052 = vadd.f32 %v3726, %v3956
  %v4053 = vadd.f32 %v3727, %v3957
  %v4054 = vadd.f32 %v3728, %v3958
  %v4055 = vadd.f32 %v3729, %v3959
  %v4056 = vadd.f32 %v3730, %v3960
  %v4057 = vadd.f32 %v3731, %v3961
  %v4058 = vadd.f32 %v3732, %v3962
  %v4059 = vld [vmem:[%s2 + $0x7] sm:$0x1]
  %v4060 = vlaneseq
  %v4061 = vshrl.u32 %v4060, 7
  %v4062 = vsub.s32 0, %v4061
  %v4063 = vrot.slane %v4059, %v4062
  %v4064 = vmul.f32 %v3735, %v4063
  %v4065 = vmul.f32 %v3736, %v4063
  %v4066 = vmul.f32 %v3739, %v4063
  %v4067 = vmul.f32 %v3740, %v4063
  %v4068 = vmul.f32 %v3743, %v4063
  %v4069 = vmul.f32 %v3744, %v4063
  %v4070 = vmul.f32 %v3747, %v4063
  %v4071 = vmul.f32 %v3748, %v4063
  %v4072 = vmul.f32 %v3751, %v4063
  %v4073 = vmul.f32 %v3752, %v4063
  %v4074 = vmul.f32 %v3755, %v4063
  %v4075 = vmul.f32 %v3756, %v4063
  %v4076 = vmul.f32 %v3759, %v4063
  %v4077 = vmul.f32 %v3760, %v4063
  %v4078 = vmul.f32 %v3763, %v4063
  %v4079 = vmul.f32 %v3764, %v4063
  %v4080 = vmul.f32 %v3767, %v4063
  %v4081 = vmul.f32 %v3768, %v4063
  %v4082 = vmul.f32 %v3771, %v4063
  %v4083 = vmul.f32 %v3772, %v4063
  %v4084 = vmul.f32 %v3775, %v4063
  %v4085 = vmul.f32 %v3776, %v4063
  %v4086 = vmul.f32 %v3779, %v4063
  %v4087 = vmul.f32 %v3780, %v4063
  %v4088 = vmul.f32 %v3783, %v4063
  %v4089 = vmul.f32 %v3784, %v4063
  %v4090 = vmul.f32 %v3787, %v4063
  %v4091 = vmul.f32 %v3788, %v4063
  %v4092 = vmul.f32 %v3791, %v4063
  %v4093 = vmul.f32 %v3792, %v4063
  %v4094 = vmul.f32 %v3795, %v4063
  %v4095 = vmul.f32 %v3796, %v4063
  %v4096 = vmul.f32 %v3799, %v4063
  %v4097 = vmul.f32 %v3800, %v4063
  %v4098 = vmul.f32 %v3803, %v4063
  %v4099 = vmul.f32 %v3804, %v4063
  %v4100 = vmul.f32 %v3807, %v4063
  %v4101 = vmul.f32 %v3808, %v4063
  %v4102 = vmul.f32 %v3811, %v4063
  %v4103 = vmul.f32 %v3812, %v4063
  %v4104 = vmul.f32 %v3815, %v4063
  %v4105 = vmul.f32 %v3816, %v4063
  %v4106 = vmul.f32 %v3819, %v4063
  %v4107 = vmul.f32 %v3820, %v4063
  %v4108 = vmul.f32 %v3823, %v4063
  %v4109 = vmul.f32 %v3824, %v4063
  %v4110 = vmul.f32 %v3827, %v4063
  %v4111 = vmul.f32 %v3828, %v4063
  %v4112 = vmul.f32 %v3831, %v4063
  %v4113 = vmul.f32 %v3832, %v4063
  %v4114 = vmul.f32 %v3835, %v4063
  %v4115 = vmul.f32 %v3836, %v4063
  %v4116 = vmul.f32 %v3839, %v4063
  %v4117 = vmul.f32 %v3840, %v4063
  %v4118 = vmul.f32 %v3843, %v4063
  %v4119 = vmul.f32 %v3844, %v4063
  %v4120 = vmul.f32 %v3847, %v4063
  %v4121 = vmul.f32 %v3848, %v4063
  %v4122 = vmul.f32 %v3851, %v4063
  %v4123 = vmul.f32 %v3852, %v4063
  %v4124 = vmul.f32 %v3855, %v4063
  %v4125 = vmul.f32 %v3856, %v4063
  %v4126 = vmul.f32 %v3859, %v4063
  %v4127 = vmul.f32 %v3860, %v4063
  %v4192 = vrot.slane %v4064, 1
  %v4193 = vrot.slane %v4065, 1
  %v4194 = vsel %vm1599, %v4192, %v4193
  %v4195 = vrot.slane %v4066, 1
  %v4196 = vrot.slane %v4067, 1
  %v4197 = vsel %vm1599, %v4195, %v4196
  %v4198 = vrot.slane %v4068, 1
  %v4199 = vrot.slane %v4069, 1
  %v4200 = vsel %vm1599, %v4198, %v4199
  %v4201 = vrot.slane %v4070, 1
  %v4202 = vrot.slane %v4071, 1
  %v4203 = vsel %vm1599, %v4201, %v4202
  %v4204 = vrot.slane %v4072, 1
  %v4205 = vrot.slane %v4073, 1
  %v4206 = vsel %vm1599, %v4204, %v4205
  %v4207 = vrot.slane %v4074, 1
  %v4208 = vrot.slane %v4075, 1
  %v4209 = vsel %vm1599, %v4207, %v4208
  %v4210 = vrot.slane %v4076, 1
  %v4211 = vrot.slane %v4077, 1
  %v4212 = vsel %vm1599, %v4210, %v4211
  %v4213 = vrot.slane %v4078, 1
  %v4214 = vrot.slane %v4079, 1
  %v4215 = vsel %vm1599, %v4213, %v4214
  %v4216 = vrot.slane %v4080, 1
  %v4217 = vrot.slane %v4081, 1
  %v4218 = vsel %vm1599, %v4216, %v4217
  %v4219 = vrot.slane %v4082, 1
  %v4220 = vrot.slane %v4083, 1
  %v4221 = vsel %vm1599, %v4219, %v4220
  %v4222 = vrot.slane %v4084, 1
  %v4223 = vrot.slane %v4085, 1
  %v4224 = vsel %vm1599, %v4222, %v4223
  %v4225 = vrot.slane %v4086, 1
  %v4226 = vrot.slane %v4087, 1
  %v4227 = vsel %vm1599, %v4225, %v4226
  %v4228 = vrot.slane %v4088, 1
  %v4229 = vrot.slane %v4089, 1
  %v4230 = vsel %vm1599, %v4228, %v4229
  %v4231 = vrot.slane %v4090, 1
  %v4232 = vrot.slane %v4091, 1
  %v4233 = vsel %vm1599, %v4231, %v4232
  %v4234 = vrot.slane %v4092, 1
  %v4235 = vrot.slane %v4093, 1
  %v4236 = vsel %vm1599, %v4234, %v4235
  %v4237 = vrot.slane %v4094, 1
  %v4238 = vrot.slane %v4095, 1
  %v4239 = vsel %vm1599, %v4237, %v4238
  %v4240 = vrot.slane %v4096, 1
  %v4241 = vrot.slane %v4097, 1
  %v4242 = vsel %vm1599, %v4240, %v4241
  %v4243 = vrot.slane %v4098, 1
  %v4244 = vrot.slane %v4099, 1
  %v4245 = vsel %vm1599, %v4243, %v4244
  %v4246 = vrot.slane %v4100, 1
  %v4247 = vrot.slane %v4101, 1
  %v4248 = vsel %vm1599, %v4246, %v4247
  %v4249 = vrot.slane %v4102, 1
  %v4250 = vrot.slane %v4103, 1
  %v4251 = vsel %vm1599, %v4249, %v4250
  %v4252 = vrot.slane %v4104, 1
  %v4253 = vrot.slane %v4105, 1
  %v4254 = vsel %vm1599, %v4252, %v4253
  %v4255 = vrot.slane %v4106, 1
  %v4256 = vrot.slane %v4107, 1
  %v4257 = vsel %vm1599, %v4255, %v4256
  %v4258 = vrot.slane %v4108, 1
  %v4259 = vrot.slane %v4109, 1
  %v4260 = vsel %vm1599, %v4258, %v4259
  %v4261 = vrot.slane %v4110, 1
  %v4262 = vrot.slane %v4111, 1
  %v4263 = vsel %vm1599, %v4261, %v4262
  %v4264 = vrot.slane %v4112, 1
  %v4265 = vrot.slane %v4113, 1
  %v4266 = vsel %vm1599, %v4264, %v4265
  %v4267 = vrot.slane %v4114, 1
  %v4268 = vrot.slane %v4115, 1
  %v4269 = vsel %vm1599, %v4267, %v4268
  %v4270 = vrot.slane %v4116, 1
  %v4271 = vrot.slane %v4117, 1
  %v4272 = vsel %vm1599, %v4270, %v4271
  %v4273 = vrot.slane %v4118, 1
  %v4274 = vrot.slane %v4119, 1
  %v4275 = vsel %vm1599, %v4273, %v4274
  %v4276 = vrot.slane %v4120, 1
  %v4277 = vrot.slane %v4121, 1
  %v4278 = vsel %vm1599, %v4276, %v4277
  %v4279 = vrot.slane %v4122, 1
  %v4280 = vrot.slane %v4123, 1
  %v4281 = vsel %vm1599, %v4279, %v4280
  %v4282 = vrot.slane %v4124, 1
  %v4283 = vrot.slane %v4125, 1
  %v4284 = vsel %vm1599, %v4282, %v4283
  %v4285 = vrot.slane %v4126, 1
  %v4286 = vrot.slane %v4127, 1
  %v4287 = vsel %vm1599, %v4285, %v4286
  %v4384 = vadd.f32 %v3963, %v4192
  %v4385 = vadd.f32 %v3964, %v4194
  %v4386 = vadd.f32 %v3965, %v4193
  %v4387 = vadd.f32 %v3966, %v4195
  %v4388 = vadd.f32 %v3967, %v4197
  %v4389 = vadd.f32 %v3968, %v4196
  %v4390 = vadd.f32 %v3969, %v4198
  %v4391 = vadd.f32 %v3970, %v4200
  %v4392 = vadd.f32 %v3971, %v4199
  %v4393 = vadd.f32 %v3972, %v4201
  %v4394 = vadd.f32 %v3973, %v4203
  %v4395 = vadd.f32 %v3974, %v4202
  %v4396 = vadd.f32 %v3975, %v4204
  %v4397 = vadd.f32 %v3976, %v4206
  %v4398 = vadd.f32 %v3977, %v4205
  %v4399 = vadd.f32 %v3978, %v4207
  %v4400 = vadd.f32 %v3979, %v4209
  %v4401 = vadd.f32 %v3980, %v4208
  %v4402 = vadd.f32 %v3981, %v4210
  %v4403 = vadd.f32 %v3982, %v4212
  %v4404 = vadd.f32 %v3983, %v4211
  %v4405 = vadd.f32 %v3984, %v4213
  %v4406 = vadd.f32 %v3985, %v4215
  %v4407 = vadd.f32 %v3986, %v4214
  %v4408 = vadd.f32 %v3987, %v4216
  %v4409 = vadd.f32 %v3988, %v4218
  %v4410 = vadd.f32 %v3989, %v4217
  %v4411 = vadd.f32 %v3990, %v4219
  %v4412 = vadd.f32 %v3991, %v4221
  %v4413 = vadd.f32 %v3992, %v4220
  %v4414 = vadd.f32 %v3993, %v4222
  %v4415 = vadd.f32 %v3994, %v4224
  %v4416 = vadd.f32 %v3995, %v4223
  %v4417 = vadd.f32 %v3996, %v4225
  %v4418 = vadd.f32 %v3997, %v4227
  %v4419 = vadd.f32 %v3998, %v4226
  %v4420 = vadd.f32 %v3999, %v4228
  %v4421 = vadd.f32 %v4000, %v4230
  %v4422 = vadd.f32 %v4001, %v4229
  %v4423 = vadd.f32 %v4002, %v4231
  %v4424 = vadd.f32 %v4003, %v4233
  %v4425 = vadd.f32 %v4004, %v4232
  %v4426 = vadd.f32 %v4005, %v4234
  %v4427 = vadd.f32 %v4006, %v4236
  %v4428 = vadd.f32 %v4007, %v4235
  %v4429 = vadd.f32 %v4008, %v4237
  %v4430 = vadd.f32 %v4009, %v4239
  %v4431 = vadd.f32 %v4010, %v4238
  %v4432 = vadd.f32 %v4011, %v4240
  %v4433 = vadd.f32 %v4012, %v4242
  %v4434 = vadd.f32 %v4013, %v4241
  %v4435 = vadd.f32 %v4014, %v4243
  %v4436 = vadd.f32 %v4015, %v4245
  %v4437 = vadd.f32 %v4016, %v4244
  %v4438 = vadd.f32 %v4017, %v4246
  %v4439 = vadd.f32 %v4018, %v4248
  %v4440 = vadd.f32 %v4019, %v4247
  %v4441 = vadd.f32 %v4020, %v4249
  %v4442 = vadd.f32 %v4021, %v4251
  %v4443 = vadd.f32 %v4022, %v4250
  %v4444 = vadd.f32 %v4023, %v4252
  %v4445 = vadd.f32 %v4024, %v4254
  %v4446 = vadd.f32 %v4025, %v4253
  %v4447 = vadd.f32 %v4026, %v4255
  %v4448 = vadd.f32 %v4027, %v4257
  %v4449 = vadd.f32 %v4028, %v4256
  %v4450 = vadd.f32 %v4029, %v4258
  %v4451 = vadd.f32 %v4030, %v4260
  %v4452 = vadd.f32 %v4031, %v4259
  %v4453 = vadd.f32 %v4032, %v4261
  %v4454 = vadd.f32 %v4033, %v4263
  %v4455 = vadd.f32 %v4034, %v4262
  %v4456 = vadd.f32 %v4035, %v4264
  %v4457 = vadd.f32 %v4036, %v4266
  %v4458 = vadd.f32 %v4037, %v4265
  %v4459 = vadd.f32 %v4038, %v4267
  %v4460 = vadd.f32 %v4039, %v4269
  %v4461 = vadd.f32 %v4040, %v4268
  %v4462 = vadd.f32 %v4041, %v4270
  %v4463 = vadd.f32 %v4042, %v4272
  %v4464 = vadd.f32 %v4043, %v4271
  %v4465 = vadd.f32 %v4044, %v4273
  %v4466 = vadd.f32 %v4045, %v4275
  %v4467 = vadd.f32 %v4046, %v4274
  %v4468 = vadd.f32 %v4047, %v4276
  %v4469 = vadd.f32 %v4048, %v4278
  %v4470 = vadd.f32 %v4049, %v4277
  %v4471 = vadd.f32 %v4050, %v4279
  %v4472 = vadd.f32 %v4051, %v4281
  %v4473 = vadd.f32 %v4052, %v4280
  %v4474 = vadd.f32 %v4053, %v4282
  %v4475 = vadd.f32 %v4054, %v4284
  %v4476 = vadd.f32 %v4055, %v4283
  %v4477 = vadd.f32 %v4056, %v4285
  %v4478 = vadd.f32 %v4057, %v4287
  %v4479 = vadd.f32 %v4058, %v4286
  %v4480 = vld [vmem:[%s2 + $0x8] sm:$0x1]
  %v4481 = vlaneseq
  %v4482 = vshrl.u32 %v4481, 7
  %v4483 = vsub.s32 0, %v4482
  %v4484 = vrot.slane %v4480, %v4483
  %v4485 = vmul.f32 %v3735, %v4484
  %v4486 = vmul.f32 %v3736, %v4484
  %v4487 = vmul.f32 %v3737, %v4484
  %v4488 = vmul.f32 %v3739, %v4484
  %v4489 = vmul.f32 %v3740, %v4484
  %v4490 = vmul.f32 %v3741, %v4484
  %v4491 = vmul.f32 %v3743, %v4484
  %v4492 = vmul.f32 %v3744, %v4484
  %v4493 = vmul.f32 %v3745, %v4484
  %v4494 = vmul.f32 %v3747, %v4484
  %v4495 = vmul.f32 %v3748, %v4484
  %v4496 = vmul.f32 %v3749, %v4484
  %v4497 = vmul.f32 %v3751, %v4484
  %v4498 = vmul.f32 %v3752, %v4484
  %v4499 = vmul.f32 %v3753, %v4484
  %v4500 = vmul.f32 %v3755, %v4484
  %v4501 = vmul.f32 %v3756, %v4484
  %v4502 = vmul.f32 %v3757, %v4484
  %v4503 = vmul.f32 %v3759, %v4484
  %v4504 = vmul.f32 %v3760, %v4484
  %v4505 = vmul.f32 %v3761, %v4484
  %v4506 = vmul.f32 %v3763, %v4484
  %v4507 = vmul.f32 %v3764, %v4484
  %v4508 = vmul.f32 %v3765, %v4484
  %v4509 = vmul.f32 %v3767, %v4484
  %v4510 = vmul.f32 %v3768, %v4484
  %v4511 = vmul.f32 %v3769, %v4484
  %v4512 = vmul.f32 %v3771, %v4484
  %v4513 = vmul.f32 %v3772, %v4484
  %v4514 = vmul.f32 %v3773, %v4484
  %v4515 = vmul.f32 %v3775, %v4484
  %v4516 = vmul.f32 %v3776, %v4484
  %v4517 = vmul.f32 %v3777, %v4484
  %v4518 = vmul.f32 %v3779, %v4484
  %v4519 = vmul.f32 %v3780, %v4484
  %v4520 = vmul.f32 %v3781, %v4484
  %v4521 = vmul.f32 %v3783, %v4484
  %v4522 = vmul.f32 %v3784, %v4484
  %v4523 = vmul.f32 %v3785, %v4484
  %v4524 = vmul.f32 %v3787, %v4484
  %v4525 = vmul.f32 %v3788, %v4484
  %v4526 = vmul.f32 %v3789, %v4484
  %v4527 = vmul.f32 %v3791, %v4484
  %v4528 = vmul.f32 %v3792, %v4484
  %v4529 = vmul.f32 %v3793, %v4484
  %v4530 = vmul.f32 %v3795, %v4484
  %v4531 = vmul.f32 %v3796, %v4484
  %v4532 = vmul.f32 %v3797, %v4484
  %v4533 = vmul.f32 %v3799, %v4484
  %v4534 = vmul.f32 %v3800, %v4484
  %v4535 = vmul.f32 %v3801, %v4484
  %v4536 = vmul.f32 %v3803, %v4484
  %v4537 = vmul.f32 %v3804, %v4484
  %v4538 = vmul.f32 %v3805, %v4484
  %v4539 = vmul.f32 %v3807, %v4484
  %v4540 = vmul.f32 %v3808, %v4484
  %v4541 = vmul.f32 %v3809, %v4484
  %v4542 = vmul.f32 %v3811, %v4484
  %v4543 = vmul.f32 %v3812, %v4484
  %v4544 = vmul.f32 %v3813, %v4484
  %v4545 = vmul.f32 %v3815, %v4484
  %v4546 = vmul.f32 %v3816, %v4484
  %v4547 = vmul.f32 %v3817, %v4484
  %v4548 = vmul.f32 %v3819, %v4484
  %v4549 = vmul.f32 %v3820, %v4484
  %v4550 = vmul.f32 %v3821, %v4484
  %v4551 = vmul.f32 %v3823, %v4484
  %v4552 = vmul.f32 %v3824, %v4484
  %v4553 = vmul.f32 %v3825, %v4484
  %v4554 = vmul.f32 %v3827, %v4484
  %v4555 = vmul.f32 %v3828, %v4484
  %v4556 = vmul.f32 %v3829, %v4484
  %v4557 = vmul.f32 %v3831, %v4484
  %v4558 = vmul.f32 %v3832, %v4484
  %v4559 = vmul.f32 %v3833, %v4484
  %v4560 = vmul.f32 %v3835, %v4484
  %v4561 = vmul.f32 %v3836, %v4484
  %v4562 = vmul.f32 %v3837, %v4484
  %v4563 = vmul.f32 %v3839, %v4484
  %v4564 = vmul.f32 %v3840, %v4484
  %v4565 = vmul.f32 %v3841, %v4484
  %v4566 = vmul.f32 %v3843, %v4484
  %v4567 = vmul.f32 %v3844, %v4484
  %v4568 = vmul.f32 %v3845, %v4484
  %v4569 = vmul.f32 %v3847, %v4484
  %v4570 = vmul.f32 %v3848, %v4484
  %v4571 = vmul.f32 %v3849, %v4484
  %v4572 = vmul.f32 %v3851, %v4484
  %v4573 = vmul.f32 %v3852, %v4484
  %v4574 = vmul.f32 %v3853, %v4484
  %v4575 = vmul.f32 %v3855, %v4484
  %v4576 = vmul.f32 %v3856, %v4484
  %v4577 = vmul.f32 %v3857, %v4484
  %v4578 = vmul.f32 %v3859, %v4484
  %v4579 = vmul.f32 %v3860, %v4484
  %v4580 = vmul.f32 %v3861, %v4484
  %v4677 = vrot.slane %v4485, 2
  %v4678 = vrot.slane %v4486, 2
  %v4679 = vsel %vm2085, %v4677, %v4678
  %v4680 = vrot.slane %v4487, 2
  %v4681 = vsel %vm2085, %v4678, %v4680
  %v4682 = vrot.slane %v4488, 2
  %v4683 = vrot.slane %v4489, 2
  %v4684 = vsel %vm2085, %v4682, %v4683
  %v4685 = vrot.slane %v4490, 2
  %v4686 = vsel %vm2085, %v4683, %v4685
  %v4687 = vrot.slane %v4491, 2
  %v4688 = vrot.slane %v4492, 2
  %v4689 = vsel %vm2085, %v4687, %v4688
  %v4690 = vrot.slane %v4493, 2
  %v4691 = vsel %vm2085, %v4688, %v4690
  %v4692 = vrot.slane %v4494, 2
  %v4693 = vrot.slane %v4495, 2
  %v4694 = vsel %vm2085, %v4692, %v4693
  %v4695 = vrot.slane %v4496, 2
  %v4696 = vsel %vm2085, %v4693, %v4695
  %v4697 = vrot.slane %v4497, 2
  %v4698 = vrot.slane %v4498, 2
  %v4699 = vsel %vm2085, %v4697, %v4698
  %v4700 = vrot.slane %v4499, 2
  %v4701 = vsel %vm2085, %v4698, %v4700
  %v4702 = vrot.slane %v4500, 2
  %v4703 = vrot.slane %v4501, 2
  %v4704 = vsel %vm2085, %v4702, %v4703
  %v4705 = vrot.slane %v4502, 2
  %v4706 = vsel %vm2085, %v4703, %v4705
  %v4707 = vrot.slane %v4503, 2
  %v4708 = vrot.slane %v4504, 2
  %v4709 = vsel %vm2085, %v4707, %v4708
  %v4710 = vrot.slane %v4505, 2
  %v4711 = vsel %vm2085, %v4708, %v4710
  %v4712 = vrot.slane %v4506, 2
  %v4713 = vrot.slane %v4507, 2
  %v4714 = vsel %vm2085, %v4712, %v4713
  %v4715 = vrot.slane %v4508, 2
  %v4716 = vsel %vm2085, %v4713, %v4715
  %v4717 = vrot.slane %v4509, 2
  %v4718 = vrot.slane %v4510, 2
  %v4719 = vsel %vm2085, %v4717, %v4718
  %v4720 = vrot.slane %v4511, 2
  %v4721 = vsel %vm2085, %v4718, %v4720
  %v4722 = vrot.slane %v4512, 2
  %v4723 = vrot.slane %v4513, 2
  %v4724 = vsel %vm2085, %v4722, %v4723
  %v4725 = vrot.slane %v4514, 2
  %v4726 = vsel %vm2085, %v4723, %v4725
  %v4727 = vrot.slane %v4515, 2
  %v4728 = vrot.slane %v4516, 2
  %v4729 = vsel %vm2085, %v4727, %v4728
  %v4730 = vrot.slane %v4517, 2
  %v4731 = vsel %vm2085, %v4728, %v4730
  %v4732 = vrot.slane %v4518, 2
  %v4733 = vrot.slane %v4519, 2
  %v4734 = vsel %vm2085, %v4732, %v4733
  %v4735 = vrot.slane %v4520, 2
  %v4736 = vsel %vm2085, %v4733, %v4735
  %v4737 = vrot.slane %v4521, 2
  %v4738 = vrot.slane %v4522, 2
  %v4739 = vsel %vm2085, %v4737, %v4738
  %v4740 = vrot.slane %v4523, 2
  %v4741 = vsel %vm2085, %v4738, %v4740
  %v4742 = vrot.slane %v4524, 2
  %v4743 = vrot.slane %v4525, 2
  %v4744 = vsel %vm2085, %v4742, %v4743
  %v4745 = vrot.slane %v4526, 2
  %v4746 = vsel %vm2085, %v4743, %v4745
  %v4747 = vrot.slane %v4527, 2
  %v4748 = vrot.slane %v4528, 2
  %v4749 = vsel %vm2085, %v4747, %v4748
  %v4750 = vrot.slane %v4529, 2
  %v4751 = vsel %vm2085, %v4748, %v4750
  %v4752 = vrot.slane %v4530, 2
  %v4753 = vrot.slane %v4531, 2
  %v4754 = vsel %vm2085, %v4752, %v4753
  %v4755 = vrot.slane %v4532, 2
  %v4756 = vsel %vm2085, %v4753, %v4755
  %v4757 = vrot.slane %v4533, 2
  %v4758 = vrot.slane %v4534, 2
  %v4759 = vsel %vm2085, %v4757, %v4758
  %v4760 = vrot.slane %v4535, 2
  %v4761 = vsel %vm2085, %v4758, %v4760
  %v4762 = vrot.slane %v4536, 2
  %v4763 = vrot.slane %v4537, 2
  %v4764 = vsel %vm2085, %v4762, %v4763
  %v4765 = vrot.slane %v4538, 2
  %v4766 = vsel %vm2085, %v4763, %v4765
  %v4767 = vrot.slane %v4539, 2
  %v4768 = vrot.slane %v4540, 2
  %v4769 = vsel %vm2085, %v4767, %v4768
  %v4770 = vrot.slane %v4541, 2
  %v4771 = vsel %vm2085, %v4768, %v4770
  %v4772 = vrot.slane %v4542, 2
  %v4773 = vrot.slane %v4543, 2
  %v4774 = vsel %vm2085, %v4772, %v4773
  %v4775 = vrot.slane %v4544, 2
  %v4776 = vsel %vm2085, %v4773, %v4775
  %v4777 = vrot.slane %v4545, 2
  %v4778 = vrot.slane %v4546, 2
  %v4779 = vsel %vm2085, %v4777, %v4778
  %v4780 = vrot.slane %v4547, 2
  %v4781 = vsel %vm2085, %v4778, %v4780
  %v4782 = vrot.slane %v4548, 2
  %v4783 = vrot.slane %v4549, 2
  %v4784 = vsel %vm2085, %v4782, %v4783
  %v4785 = vrot.slane %v4550, 2
  %v4786 = vsel %vm2085, %v4783, %v4785
  %v4787 = vrot.slane %v4551, 2
  %v4788 = vrot.slane %v4552, 2
  %v4789 = vsel %vm2085, %v4787, %v4788
  %v4790 = vrot.slane %v4553, 2
  %v4791 = vsel %vm2085, %v4788, %v4790
  %v4792 = vrot.slane %v4554, 2
  %v4793 = vrot.slane %v4555, 2
  %v4794 = vsel %vm2085, %v4792, %v4793
  %v4795 = vrot.slane %v4556, 2
  %v4796 = vsel %vm2085, %v4793, %v4795
  %v4797 = vrot.slane %v4557, 2
  %v4798 = vrot.slane %v4558, 2
  %v4799 = vsel %vm2085, %v4797, %v4798
  %v4800 = vrot.slane %v4559, 2
  %v4801 = vsel %vm2085, %v4798, %v4800
  %v4802 = vrot.slane %v4560, 2
  %v4803 = vrot.slane %v4561, 2
  %v4804 = vsel %vm2085, %v4802, %v4803
  %v4805 = vrot.slane %v4562, 2
  %v4806 = vsel %vm2085, %v4803, %v4805
  %v4807 = vrot.slane %v4563, 2
  %v4808 = vrot.slane %v4564, 2
  %v4809 = vsel %vm2085, %v4807, %v4808
  %v4810 = vrot.slane %v4565, 2
  %v4811 = vsel %vm2085, %v4808, %v4810
  %v4812 = vrot.slane %v4566, 2
  %v4813 = vrot.slane %v4567, 2
  %v4814 = vsel %vm2085, %v4812, %v4813
  %v4815 = vrot.slane %v4568, 2
  %v4816 = vsel %vm2085, %v4813, %v4815
  %v4817 = vrot.slane %v4569, 2
  %v4818 = vrot.slane %v4570, 2
  %v4819 = vsel %vm2085, %v4817, %v4818
  %v4820 = vrot.slane %v4571, 2
  %v4821 = vsel %vm2085, %v4818, %v4820
  %v4822 = vrot.slane %v4572, 2
  %v4823 = vrot.slane %v4573, 2
  %v4824 = vsel %vm2085, %v4822, %v4823
  %v4825 = vrot.slane %v4574, 2
  %v4826 = vsel %vm2085, %v4823, %v4825
  %v4827 = vrot.slane %v4575, 2
  %v4828 = vrot.slane %v4576, 2
  %v4829 = vsel %vm2085, %v4827, %v4828
  %v4830 = vrot.slane %v4577, 2
  %v4831 = vsel %vm2085, %v4828, %v4830
  %v4832 = vrot.slane %v4578, 2
  %v4833 = vrot.slane %v4579, 2
  %v4834 = vsel %vm2085, %v4832, %v4833
  %v4835 = vrot.slane %v4580, 2
  %v4836 = vsel %vm2085, %v4833, %v4835
  %v4933 = vadd.f32 %v4384, %v4677
  %v4934 = vadd.f32 %v4385, %v4679
  %v4935 = vadd.f32 %v4386, %v4681
  %v4936 = vadd.f32 %v4387, %v4682
  %v4937 = vadd.f32 %v4388, %v4684
  %v4938 = vadd.f32 %v4389, %v4686
  %v4939 = vadd.f32 %v4390, %v4687
  %v4940 = vadd.f32 %v4391, %v4689
  %v4941 = vadd.f32 %v4392, %v4691
  %v4942 = vadd.f32 %v4393, %v4692
  %v4943 = vadd.f32 %v4394, %v4694
  %v4944 = vadd.f32 %v4395, %v4696
  %v4945 = vadd.f32 %v4396, %v4697
  %v4946 = vadd.f32 %v4397, %v4699
  %v4947 = vadd.f32 %v4398, %v4701
  %v4948 = vadd.f32 %v4399, %v4702
  %v4949 = vadd.f32 %v4400, %v4704
  %v4950 = vadd.f32 %v4401, %v4706
  %v4951 = vadd.f32 %v4402, %v4707
  %v4952 = vadd.f32 %v4403, %v4709
  %v4953 = vadd.f32 %v4404, %v4711
  %v4954 = vadd.f32 %v4405, %v4712
  %v4955 = vadd.f32 %v4406, %v4714
  %v4956 = vadd.f32 %v4407, %v4716
  %v4957 = vadd.f32 %v4408, %v4717
  %v4958 = vadd.f32 %v4409, %v4719
  %v4959 = vadd.f32 %v4410, %v4721
  %v4960 = vadd.f32 %v4411, %v4722
  %v4961 = vadd.f32 %v4412, %v4724
  %v4962 = vadd.f32 %v4413, %v4726
  %v4963 = vadd.f32 %v4414, %v4727
  %v4964 = vadd.f32 %v4415, %v4729
  %v4965 = vadd.f32 %v4416, %v4731
  %v4966 = vadd.f32 %v4417, %v4732
  %v4967 = vadd.f32 %v4418, %v4734
  %v4968 = vadd.f32 %v4419, %v4736
  %v4969 = vadd.f32 %v4420, %v4737
  %v4970 = vadd.f32 %v4421, %v4739
  %v4971 = vadd.f32 %v4422, %v4741
  %v4972 = vadd.f32 %v4423, %v4742
  %v4973 = vadd.f32 %v4424, %v4744
  %v4974 = vadd.f32 %v4425, %v4746
  %v4975 = vadd.f32 %v4426, %v4747
  %v4976 = vadd.f32 %v4427, %v4749
  %v4977 = vadd.f32 %v4428, %v4751
  %v4978 = vadd.f32 %v4429, %v4752
  %v4979 = vadd.f32 %v4430, %v4754
  %v4980 = vadd.f32 %v4431, %v4756
  %v4981 = vadd.f32 %v4432, %v4757
  %v4982 = vadd.f32 %v4433, %v4759
  %v4983 = vadd.f32 %v4434, %v4761
  %v4984 = vadd.f32 %v4435, %v4762
  %v4985 = vadd.f32 %v4436, %v4764
  %v4986 = vadd.f32 %v4437, %v4766
  %v4987 = vadd.f32 %v4438, %v4767
  %v4988 = vadd.f32 %v4439, %v4769
  %v4989 = vadd.f32 %v4440, %v4771
  %v4990 = vadd.f32 %v4441, %v4772
  %v4991 = vadd.f32 %v4442, %v4774
  %v4992 = vadd.f32 %v4443, %v4776
  %v4993 = vadd.f32 %v4444, %v4777
  %v4994 = vadd.f32 %v4445, %v4779
  %v4995 = vadd.f32 %v4446, %v4781
  %v4996 = vadd.f32 %v4447, %v4782
  %v4997 = vadd.f32 %v4448, %v4784
  %v4998 = vadd.f32 %v4449, %v4786
  %v4999 = vadd.f32 %v4450, %v4787
  %v5000 = vadd.f32 %v4451, %v4789
  %v5001 = vadd.f32 %v4452, %v4791
  %v5002 = vadd.f32 %v4453, %v4792
  %v5003 = vadd.f32 %v4454, %v4794
  %v5004 = vadd.f32 %v4455, %v4796
  %v5005 = vadd.f32 %v4456, %v4797
  %v5006 = vadd.f32 %v4457, %v4799
  %v5007 = vadd.f32 %v4458, %v4801
  %v5008 = vadd.f32 %v4459, %v4802
  %v5009 = vadd.f32 %v4460, %v4804
  %v5010 = vadd.f32 %v4461, %v4806
  %v5011 = vadd.f32 %v4462, %v4807
  %v5012 = vadd.f32 %v4463, %v4809
  %v5013 = vadd.f32 %v4464, %v4811
  %v5014 = vadd.f32 %v4465, %v4812
  %v5015 = vadd.f32 %v4466, %v4814
  %v5016 = vadd.f32 %v4467, %v4816
  %v5017 = vadd.f32 %v4468, %v4817
  %v5018 = vadd.f32 %v4469, %v4819
  %v5019 = vadd.f32 %v4470, %v4821
  %v5020 = vadd.f32 %v4471, %v4822
  %v5021 = vadd.f32 %v4472, %v4824
  %v5022 = vadd.f32 %v4473, %v4826
  %v5023 = vadd.f32 %v4474, %v4827
  %v5024 = vadd.f32 %v4475, %v4829
  %v5025 = vadd.f32 %v4476, %v4831
  %v5026 = vadd.f32 %v4477, %v4832
  %v5027 = vadd.f32 %v4478, %v4834
  %v5028 = vadd.f32 %v4479, %v4836
  %vm5125 = vcmask 1040384
  %v5126 = vrot.slane %v4933, 7
  %v5127 = vrot.slane %v4934, 7
  %v5128 = vsel %vm5125, %v5126, %v5127
  %v5129 = vrot.slane %v4935, 7
  %v5130 = vsel %vm5125, %v5127, %v5129
  %v5131 = vrot.slane %v4936, 7
  %v5132 = vrot.slane %v4937, 7
  %v5133 = vsel %vm5125, %v5131, %v5132
  %v5134 = vrot.slane %v4938, 7
  %v5135 = vsel %vm5125, %v5132, %v5134
  %v5136 = vrot.slane %v4939, 7
  %v5137 = vrot.slane %v4940, 7
  %v5138 = vsel %vm5125, %v5136, %v5137
  %v5139 = vrot.slane %v4941, 7
  %v5140 = vsel %vm5125, %v5137, %v5139
  %v5141 = vrot.slane %v4942, 7
  %v5142 = vrot.slane %v4943, 7
  %v5143 = vsel %vm5125, %v5141, %v5142
  %v5144 = vrot.slane %v4944, 7
  %v5145 = vsel %vm5125, %v5142, %v5144
  %v5146 = vrot.slane %v4945, 7
  %v5147 = vrot.slane %v4946, 7
  %v5148 = vsel %vm5125, %v5146, %v5147
  %v5149 = vrot.slane %v4947, 7
  %v5150 = vsel %vm5125, %v5147, %v5149
  %v5151 = vrot.slane %v4948, 7
  %v5152 = vrot.slane %v4949, 7
  %v5153 = vsel %vm5125, %v5151, %v5152
  %v5154 = vrot.slane %v4950, 7
  %v5155 = vsel %vm5125, %v5152, %v5154
  %v5156 = vrot.slane %v4951, 7
  %v5157 = vrot.slane %v4952, 7
  %v5158 = vsel %vm5125, %v5156, %v5157
  %v5159 = vrot.slane %v4953, 7
  %v5160 = vsel %vm5125, %v5157, %v5159
  %v5161 = vrot.slane %v4954, 7
  %v5162 = vrot.slane %v4955, 7
  %v5163 = vsel %vm5125, %v5161, %v5162
  %v5164 = vrot.slane %v4956, 7
  %v5165 = vsel %vm5125, %v5162, %v5164
  %v5166 = vrot.slane %v4957, 7
  %v5167 = vrot.slane %v4958, 7
  %v5168 = vsel %vm5125, %v5166, %v5167
  %v5169 = vrot.slane %v4959, 7
  %v5170 = vsel %vm5125, %v5167, %v5169
  %v5171 = vrot.slane %v4960, 7
  %v5172 = vrot.slane %v4961, 7
  %v5173 = vsel %vm5125, %v5171, %v5172
  %v5174 = vrot.slane %v4962, 7
  %v5175 = vsel %vm5125, %v5172, %v5174
  %v5176 = vrot.slane %v4963, 7
  %v5177 = vrot.slane %v4964, 7
  %v5178 = vsel %vm5125, %v5176, %v5177
  %v5179 = vrot.slane %v4965, 7
  %v5180 = vsel %vm5125, %v5177, %v5179
  %v5181 = vrot.slane %v4966, 7
  %v5182 = vrot.slane %v4967, 7
  %v5183 = vsel %vm5125, %v5181, %v5182
  %v5184 = vrot.slane %v4968, 7
  %v5185 = vsel %vm5125, %v5182, %v5184
  %v5186 = vrot.slane %v4969, 7
  %v5187 = vrot.slane %v4970, 7
  %v5188 = vsel %vm5125, %v5186, %v5187
  %v5189 = vrot.slane %v4971, 7
  %v5190 = vsel %vm5125, %v5187, %v5189
  %v5191 = vrot.slane %v4972, 7
  %v5192 = vrot.slane %v4973, 7
  %v5193 = vsel %vm5125, %v5191, %v5192
  %v5194 = vrot.slane %v4974, 7
  %v5195 = vsel %vm5125, %v5192, %v5194
  %v5196 = vrot.slane %v4975, 7
  %v5197 = vrot.slane %v4976, 7
  %v5198 = vsel %vm5125, %v5196, %v5197
  %v5199 = vrot.slane %v4977, 7
  %v5200 = vsel %vm5125, %v5197, %v5199
  %v5201 = vrot.slane %v4978, 7
  %v5202 = vrot.slane %v4979, 7
  %v5203 = vsel %vm5125, %v5201, %v5202
  %v5204 = vrot.slane %v4980, 7
  %v5205 = vsel %vm5125, %v5202, %v5204
  %v5206 = vrot.slane %v4981, 7
  %v5207 = vrot.slane %v4982, 7
  %v5208 = vsel %vm5125, %v5206, %v5207
  %v5209 = vrot.slane %v4983, 7
  %v5210 = vsel %vm5125, %v5207, %v5209
  %v5211 = vrot.slane %v4984, 7
  %v5212 = vrot.slane %v4985, 7
  %v5213 = vsel %vm5125, %v5211, %v5212
  %v5214 = vrot.slane %v4986, 7
  %v5215 = vsel %vm5125, %v5212, %v5214
  %v5216 = vrot.slane %v4987, 7
  %v5217 = vrot.slane %v4988, 7
  %v5218 = vsel %vm5125, %v5216, %v5217
  %v5219 = vrot.slane %v4989, 7
  %v5220 = vsel %vm5125, %v5217, %v5219
  %v5221 = vrot.slane %v4990, 7
  %v5222 = vrot.slane %v4991, 7
  %v5223 = vsel %vm5125, %v5221, %v5222
  %v5224 = vrot.slane %v4992, 7
  %v5225 = vsel %vm5125, %v5222, %v5224
  %v5226 = vrot.slane %v4993, 7
  %v5227 = vrot.slane %v4994, 7
  %v5228 = vsel %vm5125, %v5226, %v5227
  %v5229 = vrot.slane %v4995, 7
  %v5230 = vsel %vm5125, %v5227, %v5229
  %v5231 = vrot.slane %v4996, 7
  %v5232 = vrot.slane %v4997, 7
  %v5233 = vsel %vm5125, %v5231, %v5232
  %v5234 = vrot.slane %v4998, 7
  %v5235 = vsel %vm5125, %v5232, %v5234
  %v5236 = vrot.slane %v4999, 7
  %v5237 = vrot.slane %v5000, 7
  %v5238 = vsel %vm5125, %v5236, %v5237
  %v5239 = vrot.slane %v5001, 7
  %v5240 = vsel %vm5125, %v5237, %v5239
  %v5241 = vrot.slane %v5002, 7
  %v5242 = vrot.slane %v5003, 7
  %v5243 = vsel %vm5125, %v5241, %v5242
  %v5244 = vrot.slane %v5004, 7
  %v5245 = vsel %vm5125, %v5242, %v5244
  %v5246 = vrot.slane %v5005, 7
  %v5247 = vrot.slane %v5006, 7
  %v5248 = vsel %vm5125, %v5246, %v5247
  %v5249 = vrot.slane %v5007, 7
  %v5250 = vsel %vm5125, %v5247, %v5249
  %v5251 = vrot.slane %v5008, 7
  %v5252 = vrot.slane %v5009, 7
  %v5253 = vsel %vm5125, %v5251, %v5252
  %v5254 = vrot.slane %v5010, 7
  %v5255 = vsel %vm5125, %v5252, %v5254
  %v5256 = vrot.slane %v5011, 7
  %v5257 = vrot.slane %v5012, 7
  %v5258 = vsel %vm5125, %v5256, %v5257
  %v5259 = vrot.slane %v5013, 7
  %v5260 = vsel %vm5125, %v5257, %v5259
  %v5261 = vrot.slane %v5014, 7
  %v5262 = vrot.slane %v5015, 7
  %v5263 = vsel %vm5125, %v5261, %v5262
  %v5264 = vrot.slane %v5016, 7
  %v5265 = vsel %vm5125, %v5262, %v5264
  %v5266 = vrot.slane %v5017, 7
  %v5267 = vrot.slane %v5018, 7
  %v5268 = vsel %vm5125, %v5266, %v5267
  %v5269 = vrot.slane %v5019, 7
  %v5270 = vsel %vm5125, %v5267, %v5269
  %v5271 = vrot.slane %v5020, 7
  %v5272 = vrot.slane %v5021, 7
  %v5273 = vsel %vm5125, %v5271, %v5272
  %v5274 = vrot.slane %v5022, 7
  %v5275 = vsel %vm5125, %v5272, %v5274
  %v5276 = vrot.slane %v5023, 7
  %v5277 = vrot.slane %v5024, 7
  %v5278 = vsel %vm5125, %v5276, %v5277
  %v5279 = vrot.slane %v5025, 7
  %v5280 = vsel %vm5125, %v5277, %v5279
  %v5281 = vrot.slane %v5026, 7
  %v5282 = vrot.slane %v5027, 7
  %v5283 = vsel %vm5125, %v5281, %v5282
  %v5284 = vrot.slane %v5028, 7
  %v5285 = vsel %vm5125, %v5282, %v5284
  %v5350 = vadd.f32 %v5128, %v5130
  %v5351 = vadd.f32 %v5350, %v5133
  %v5352 = vadd.f32 %v5351, %v5135
  %v5353 = vadd.f32 %v5352, %v5138
  %v5354 = vadd.f32 %v5353, %v5140
  %v5355 = vadd.f32 %v5354, %v5143
  %v5356 = vadd.f32 %v5355, %v5145
  %v5357 = vadd.f32 %v5356, %v5148
  %v5358 = vadd.f32 %v5357, %v5150
  %v5359 = vadd.f32 %v5358, %v5153
  %v5360 = vadd.f32 %v5359, %v5155
  %v5361 = vadd.f32 %v5360, %v5158
  %v5362 = vadd.f32 %v5361, %v5160
  %v5363 = vadd.f32 %v5362, %v5163
  %v5364 = vadd.f32 %v5363, %v5165
  %v5365 = vadd.f32 %v5364, %v5168
  %v5366 = vadd.f32 %v5365, %v5170
  %v5367 = vadd.f32 %v5366, %v5173
  %v5368 = vadd.f32 %v5367, %v5175
  %v5369 = vadd.f32 %v5368, %v5178
  %v5370 = vadd.f32 %v5369, %v5180
  %v5371 = vadd.f32 %v5370, %v5183
  %v5372 = vadd.f32 %v5371, %v5185
  %v5373 = vadd.f32 %v5372, %v5188
  %v5374 = vadd.f32 %v5373, %v5190
  %v5375 = vadd.f32 %v5374, %v5193
  %v5376 = vadd.f32 %v5375, %v5195
  %v5377 = vadd.f32 %v5376, %v5198
  %v5378 = vadd.f32 %v5377, %v5200
  %v5379 = vadd.f32 %v5378, %v5203
  %v5380 = vadd.f32 %v5379, %v5205
  %v5381 = vadd.f32 %v5380, %v5208
  %v5382 = vadd.f32 %v5381, %v5210
  %v5383 = vadd.f32 %v5382, %v5213
  %v5384 = vadd.f32 %v5383, %v5215
  %v5385 = vadd.f32 %v5384, %v5218
  %v5386 = vadd.f32 %v5385, %v5220
  %v5387 = vadd.f32 %v5386, %v5223
  %v5388 = vadd.f32 %v5387, %v5225
  %v5389 = vadd.f32 %v5388, %v5228
  %v5390 = vadd.f32 %v5389, %v5230
  %v5391 = vadd.f32 %v5390, %v5233
  %v5392 = vadd.f32 %v5391, %v5235
  %v5393 = vadd.f32 %v5392, %v5238
  %v5394 = vadd.f32 %v5393, %v5240
  %v5395 = vadd.f32 %v5394, %v5243
  %v5396 = vadd.f32 %v5395, %v5245
  %v5397 = vadd.f32 %v5396, %v5248
  %v5398 = vadd.f32 %v5397, %v5250
  %v5399 = vadd.f32 %v5398, %v5253
  %v5400 = vadd.f32 %v5399, %v5255
  %v5401 = vadd.f32 %v5400, %v5258
  %v5402 = vadd.f32 %v5401, %v5260
  %v5403 = vadd.f32 %v5402, %v5263
  %v5404 = vadd.f32 %v5403, %v5265
  %v5405 = vadd.f32 %v5404, %v5268
  %v5406 = vadd.f32 %v5405, %v5270
  %v5407 = vadd.f32 %v5406, %v5273
  %v5408 = vadd.f32 %v5407, %v5275
  %v5409 = vadd.f32 %v5408, %v5278
  %v5410 = vadd.f32 %v5409, %v5280
  %v5411 = vadd.f32 %v5410, %v5283
  %v5412 = vadd.f32 %v5411, %v5285
  %v5413 = vrot.slane %v5412, 4
  %v5414 = vadd.f32 %v5412, %v5413
  %v5415 = vrot.slane %v5414, 2
  %v5416 = vadd.f32 %v5414, %v5415
  %v5417 = vrot.slane %v5416, 1
  %v5418 = vadd.f32 %v5416, %v5417
  %v5419 = vmul.f32 %v5418, 0.001953125
  %v5420 = vmul.f32 %v5128, %v5128
  %v5421 = vmul.f32 %v5130, %v5130
  %v5422 = vmul.f32 %v5133, %v5133
  %v5423 = vmul.f32 %v5135, %v5135
  %v5424 = vmul.f32 %v5138, %v5138
  %v5425 = vmul.f32 %v5140, %v5140
  %v5426 = vmul.f32 %v5143, %v5143
  %v5427 = vmul.f32 %v5145, %v5145
  %v5428 = vmul.f32 %v5148, %v5148
  %v5429 = vmul.f32 %v5150, %v5150
  %v5430 = vmul.f32 %v5153, %v5153
  %v5431 = vmul.f32 %v5155, %v5155
  %v5432 = vmul.f32 %v5158, %v5158
  %v5433 = vmul.f32 %v5160, %v5160
  %v5434 = vmul.f32 %v5163, %v5163
  %v5435 = vmul.f32 %v5165, %v5165
  %v5436 = vmul.f32 %v5168, %v5168
  %v5437 = vmul.f32 %v5170, %v5170
  %v5438 = vmul.f32 %v5173, %v5173
  %v5439 = vmul.f32 %v5175, %v5175
  %v5440 = vmul.f32 %v5178, %v5178
  %v5441 = vmul.f32 %v5180, %v5180
  %v5442 = vmul.f32 %v5183, %v5183
  %v5443 = vmul.f32 %v5185, %v5185
  %v5444 = vmul.f32 %v5188, %v5188
  %v5445 = vmul.f32 %v5190, %v5190
  %v5446 = vmul.f32 %v5193, %v5193
  %v5447 = vmul.f32 %v5195, %v5195
  %v5448 = vmul.f32 %v5198, %v5198
  %v5449 = vmul.f32 %v5200, %v5200
  %v5450 = vmul.f32 %v5203, %v5203
  %v5451 = vmul.f32 %v5205, %v5205
  %v5452 = vmul.f32 %v5208, %v5208
  %v5453 = vmul.f32 %v5210, %v5210
  %v5454 = vmul.f32 %v5213, %v5213
  %v5455 = vmul.f32 %v5215, %v5215
  %v5456 = vmul.f32 %v5218, %v5218
  %v5457 = vmul.f32 %v5220, %v5220
  %v5458 = vmul.f32 %v5223, %v5223
  %v5459 = vmul.f32 %v5225, %v5225
  %v5460 = vmul.f32 %v5228, %v5228
  %v5461 = vmul.f32 %v5230, %v5230
  %v5462 = vmul.f32 %v5233, %v5233
  %v5463 = vmul.f32 %v5235, %v5235
  %v5464 = vmul.f32 %v5238, %v5238
  %v5465 = vmul.f32 %v5240, %v5240
  %v5466 = vmul.f32 %v5243, %v5243
  %v5467 = vmul.f32 %v5245, %v5245
  %v5468 = vmul.f32 %v5248, %v5248
  %v5469 = vmul.f32 %v5250, %v5250
  %v5470 = vmul.f32 %v5253, %v5253
  %v5471 = vmul.f32 %v5255, %v5255
  %v5472 = vmul.f32 %v5258, %v5258
  %v5473 = vmul.f32 %v5260, %v5260
  %v5474 = vmul.f32 %v5263, %v5263
  %v5475 = vmul.f32 %v5265, %v5265
  %v5476 = vmul.f32 %v5268, %v5268
  %v5477 = vmul.f32 %v5270, %v5270
  %v5478 = vmul.f32 %v5273, %v5273
  %v5479 = vmul.f32 %v5275, %v5275
  %v5480 = vmul.f32 %v5278, %v5278
  %v5481 = vmul.f32 %v5280, %v5280
  %v5482 = vmul.f32 %v5283, %v5283
  %v5483 = vmul.f32 %v5285, %v5285
  %v5484 = vadd.f32 %v5420, %v5421
  %v5485 = vadd.f32 %v5484, %v5422
  %v5486 = vadd.f32 %v5485, %v5423
  %v5487 = vadd.f32 %v5486, %v5424
  %v5488 = vadd.f32 %v5487, %v5425
  %v5489 = vadd.f32 %v5488, %v5426
  %v5490 = vadd.f32 %v5489, %v5427
  %v5491 = vadd.f32 %v5490, %v5428
  %v5492 = vadd.f32 %v5491, %v5429
  %v5493 = vadd.f32 %v5492, %v5430
  %v5494 = vadd.f32 %v5493, %v5431
  %v5495 = vadd.f32 %v5494, %v5432
  %v5496 = vadd.f32 %v5495, %v5433
  %v5497 = vadd.f32 %v5496, %v5434
  %v5498 = vadd.f32 %v5497, %v5435
  %v5499 = vadd.f32 %v5498, %v5436
  %v5500 = vadd.f32 %v5499, %v5437
  %v5501 = vadd.f32 %v5500, %v5438
  %v5502 = vadd.f32 %v5501, %v5439
  %v5503 = vadd.f32 %v5502, %v5440
  %v5504 = vadd.f32 %v5503, %v5441
  %v5505 = vadd.f32 %v5504, %v5442
  %v5506 = vadd.f32 %v5505, %v5443
  %v5507 = vadd.f32 %v5506, %v5444
  %v5508 = vadd.f32 %v5507, %v5445
  %v5509 = vadd.f32 %v5508, %v5446
  %v5510 = vadd.f32 %v5509, %v5447
  %v5511 = vadd.f32 %v5510, %v5448
  %v5512 = vadd.f32 %v5511, %v5449
  %v5513 = vadd.f32 %v5512, %v5450
  %v5514 = vadd.f32 %v5513, %v5451
  %v5515 = vadd.f32 %v5514, %v5452
  %v5516 = vadd.f32 %v5515, %v5453
  %v5517 = vadd.f32 %v5516, %v5454
  %v5518 = vadd.f32 %v5517, %v5455
  %v5519 = vadd.f32 %v5518, %v5456
  %v5520 = vadd.f32 %v5519, %v5457
  %v5521 = vadd.f32 %v5520, %v5458
  %v5522 = vadd.f32 %v5521, %v5459
  %v5523 = vadd.f32 %v5522, %v5460
  %v5524 = vadd.f32 %v5523, %v5461
  %v5525 = vadd.f32 %v5524, %v5462
  %v5526 = vadd.f32 %v5525, %v5463
  %v5527 = vadd.f32 %v5526, %v5464
  %v5528 = vadd.f32 %v5527, %v5465
  %v5529 = vadd.f32 %v5528, %v5466
  %v5530 = vadd.f32 %v5529, %v5467
  %v5531 = vadd.f32 %v5530, %v5468
  %v5532 = vadd.f32 %v5531, %v5469
  %v5533 = vadd.f32 %v5532, %v5470
  %v5534 = vadd.f32 %v5533, %v5471
  %v5535 = vadd.f32 %v5534, %v5472
  %v5536 = vadd.f32 %v5535, %v5473
  %v5537 = vadd.f32 %v5536, %v5474
  %v5538 = vadd.f32 %v5537, %v5475
  %v5539 = vadd.f32 %v5538, %v5476
  %v5540 = vadd.f32 %v5539, %v5477
  %v5541 = vadd.f32 %v5540, %v5478
  %v5542 = vadd.f32 %v5541, %v5479
  %v5543 = vadd.f32 %v5542, %v5480
  %v5544 = vadd.f32 %v5543, %v5481
  %v5545 = vadd.f32 %v5544, %v5482
  %v5546 = vadd.f32 %v5545, %v5483
  %v5547 = vrot.slane %v5546, 4
  %v5548 = vadd.f32 %v5546, %v5547
  %v5549 = vrot.slane %v5548, 2
  %v5550 = vadd.f32 %v5548, %v5549
  %v5551 = vrot.slane %v5550, 1
  %v5552 = vadd.f32 %v5550, %v5551
  %v5553 = vmul.f32 %v5552, 0.001953125
  %v5554 = vmul.f32 %v5419, %v5419
  %v5555 = vsub.f32 %v5553, %v5554
  %v5556 = vmax.f32 %v5555, 0.0
  %v5557 = vsub.f32 %v5128, %v5419
  %v5558 = vsub.f32 %v5130, %v5419
  %v5559 = vsub.f32 %v5133, %v5419
  %v5560 = vsub.f32 %v5135, %v5419
  %v5561 = vsub.f32 %v5138, %v5419
  %v5562 = vsub.f32 %v5140, %v5419
  %v5563 = vsub.f32 %v5143, %v5419
  %v5564 = vsub.f32 %v5145, %v5419
  %v5565 = vsub.f32 %v5148, %v5419
  %v5566 = vsub.f32 %v5150, %v5419
  %v5567 = vsub.f32 %v5153, %v5419
  %v5568 = vsub.f32 %v5155, %v5419
  %v5569 = vsub.f32 %v5158, %v5419
  %v5570 = vsub.f32 %v5160, %v5419
  %v5571 = vsub.f32 %v5163, %v5419
  %v5572 = vsub.f32 %v5165, %v5419
  %v5573 = vsub.f32 %v5168, %v5419
  %v5574 = vsub.f32 %v5170, %v5419
  %v5575 = vsub.f32 %v5173, %v5419
  %v5576 = vsub.f32 %v5175, %v5419
  %v5577 = vsub.f32 %v5178, %v5419
  %v5578 = vsub.f32 %v5180, %v5419
  %v5579 = vsub.f32 %v5183, %v5419
  %v5580 = vsub.f32 %v5185, %v5419
  %v5581 = vsub.f32 %v5188, %v5419
  %v5582 = vsub.f32 %v5190, %v5419
  %v5583 = vsub.f32 %v5193, %v5419
  %v5584 = vsub.f32 %v5195, %v5419
  %v5585 = vsub.f32 %v5198, %v5419
  %v5586 = vsub.f32 %v5200, %v5419
  %v5587 = vsub.f32 %v5203, %v5419
  %v5588 = vsub.f32 %v5205, %v5419
  %v5589 = vsub.f32 %v5208, %v5419
  %v5590 = vsub.f32 %v5210, %v5419
  %v5591 = vsub.f32 %v5213, %v5419
  %v5592 = vsub.f32 %v5215, %v5419
  %v5593 = vsub.f32 %v5218, %v5419
  %v5594 = vsub.f32 %v5220, %v5419
  %v5595 = vsub.f32 %v5223, %v5419
  %v5596 = vsub.f32 %v5225, %v5419
  %v5597 = vsub.f32 %v5228, %v5419
  %v5598 = vsub.f32 %v5230, %v5419
  %v5599 = vsub.f32 %v5233, %v5419
  %v5600 = vsub.f32 %v5235, %v5419
  %v5601 = vsub.f32 %v5238, %v5419
  %v5602 = vsub.f32 %v5240, %v5419
  %v5603 = vsub.f32 %v5243, %v5419
  %v5604 = vsub.f32 %v5245, %v5419
  %v5605 = vsub.f32 %v5248, %v5419
  %v5606 = vsub.f32 %v5250, %v5419
  %v5607 = vsub.f32 %v5253, %v5419
  %v5608 = vsub.f32 %v5255, %v5419
  %v5609 = vsub.f32 %v5258, %v5419
  %v5610 = vsub.f32 %v5260, %v5419
  %v5611 = vsub.f32 %v5263, %v5419
  %v5612 = vsub.f32 %v5265, %v5419
  %v5613 = vsub.f32 %v5268, %v5419
  %v5614 = vsub.f32 %v5270, %v5419
  %v5615 = vsub.f32 %v5273, %v5419
  %v5616 = vsub.f32 %v5275, %v5419
  %v5617 = vsub.f32 %v5278, %v5419
  %v5618 = vsub.f32 %v5280, %v5419
  %v5619 = vsub.f32 %v5283, %v5419
  %v5620 = vsub.f32 %v5285, %v5419
  %v5621 = vadd.f32 %v5556, 1e-05
  %v5622 = vrsqrt.pop %v5621
  %v5623 = vmul.f32 %v5557, %v5622
  %v5624 = vmul.f32 %v5558, %v5622
  %v5625 = vmul.f32 %v5559, %v5622
  %v5626 = vmul.f32 %v5560, %v5622
  %v5627 = vmul.f32 %v5561, %v5622
  %v5628 = vmul.f32 %v5562, %v5622
  %v5629 = vmul.f32 %v5563, %v5622
  %v5630 = vmul.f32 %v5564, %v5622
  %v5631 = vmul.f32 %v5565, %v5622
  %v5632 = vmul.f32 %v5566, %v5622
  %v5633 = vmul.f32 %v5567, %v5622
  %v5634 = vmul.f32 %v5568, %v5622
  %v5635 = vmul.f32 %v5569, %v5622
  %v5636 = vmul.f32 %v5570, %v5622
  %v5637 = vmul.f32 %v5571, %v5622
  %v5638 = vmul.f32 %v5572, %v5622
  %v5639 = vmul.f32 %v5573, %v5622
  %v5640 = vmul.f32 %v5574, %v5622
  %v5641 = vmul.f32 %v5575, %v5622
  %v5642 = vmul.f32 %v5576, %v5622
  %v5643 = vmul.f32 %v5577, %v5622
  %v5644 = vmul.f32 %v5578, %v5622
  %v5645 = vmul.f32 %v5579, %v5622
  %v5646 = vmul.f32 %v5580, %v5622
  %v5647 = vmul.f32 %v5581, %v5622
  %v5648 = vmul.f32 %v5582, %v5622
  %v5649 = vmul.f32 %v5583, %v5622
  %v5650 = vmul.f32 %v5584, %v5622
  %v5651 = vmul.f32 %v5585, %v5622
  %v5652 = vmul.f32 %v5586, %v5622
  %v5653 = vmul.f32 %v5587, %v5622
  %v5654 = vmul.f32 %v5588, %v5622
  %v5655 = vmul.f32 %v5589, %v5622
  %v5656 = vmul.f32 %v5590, %v5622
  %v5657 = vmul.f32 %v5591, %v5622
  %v5658 = vmul.f32 %v5592, %v5622
  %v5659 = vmul.f32 %v5593, %v5622
  %v5660 = vmul.f32 %v5594, %v5622
  %v5661 = vmul.f32 %v5595, %v5622
  %v5662 = vmul.f32 %v5596, %v5622
  %v5663 = vmul.f32 %v5597, %v5622
  %v5664 = vmul.f32 %v5598, %v5622
  %v5665 = vmul.f32 %v5599, %v5622
  %v5666 = vmul.f32 %v5600, %v5622
  %v5667 = vmul.f32 %v5601, %v5622
  %v5668 = vmul.f32 %v5602, %v5622
  %v5669 = vmul.f32 %v5603, %v5622
  %v5670 = vmul.f32 %v5604, %v5622
  %v5671 = vmul.f32 %v5605, %v5622
  %v5672 = vmul.f32 %v5606, %v5622
  %v5673 = vmul.f32 %v5607, %v5622
  %v5674 = vmul.f32 %v5608, %v5622
  %v5675 = vmul.f32 %v5609, %v5622
  %v5676 = vmul.f32 %v5610, %v5622
  %v5677 = vmul.f32 %v5611, %v5622
  %v5678 = vmul.f32 %v5612, %v5622
  %v5679 = vmul.f32 %v5613, %v5622
  %v5680 = vmul.f32 %v5614, %v5622
  %v5681 = vmul.f32 %v5615, %v5622
  %v5682 = vmul.f32 %v5616, %v5622
  %v5683 = vmul.f32 %v5617, %v5622
  %v5684 = vmul.f32 %v5618, %v5622
  %v5685 = vmul.f32 %v5619, %v5622
  %v5686 = vmul.f32 %v5620, %v5622
  %v5687 = vmax.f32 %v5623, 0.0
  %v5688 = vmax.f32 %v5624, 0.0
  %v5689 = vmax.f32 %v5625, 0.0
  %v5690 = vmax.f32 %v5626, 0.0
  %v5691 = vmax.f32 %v5627, 0.0
  %v5692 = vmax.f32 %v5628, 0.0
  %v5693 = vmax.f32 %v5629, 0.0
  %v5694 = vmax.f32 %v5630, 0.0
  %v5695 = vmax.f32 %v5631, 0.0
  %v5696 = vmax.f32 %v5632, 0.0
  %v5697 = vmax.f32 %v5633, 0.0
  %v5698 = vmax.f32 %v5634, 0.0
  %v5699 = vmax.f32 %v5635, 0.0
  %v5700 = vmax.f32 %v5636, 0.0
  %v5701 = vmax.f32 %v5637, 0.0
  %v5702 = vmax.f32 %v5638, 0.0
  %v5703 = vmax.f32 %v5639, 0.0
  %v5704 = vmax.f32 %v5640, 0.0
  %v5705 = vmax.f32 %v5641, 0.0
  %v5706 = vmax.f32 %v5642, 0.0
  %v5707 = vmax.f32 %v5643, 0.0
  %v5708 = vmax.f32 %v5644, 0.0
  %v5709 = vmax.f32 %v5645, 0.0
  %v5710 = vmax.f32 %v5646, 0.0
  %v5711 = vmax.f32 %v5647, 0.0
  %v5712 = vmax.f32 %v5648, 0.0
  %v5713 = vmax.f32 %v5649, 0.0
  %v5714 = vmax.f32 %v5650, 0.0
  %v5715 = vmax.f32 %v5651, 0.0
  %v5716 = vmax.f32 %v5652, 0.0
  %v5717 = vmax.f32 %v5653, 0.0
  %v5718 = vmax.f32 %v5654, 0.0
  %v5719 = vmax.f32 %v5655, 0.0
  %v5720 = vmax.f32 %v5656, 0.0
  %v5721 = vmax.f32 %v5657, 0.0
  %v5722 = vmax.f32 %v5658, 0.0
  %v5723 = vmax.f32 %v5659, 0.0
  %v5724 = vmax.f32 %v5660, 0.0
  %v5725 = vmax.f32 %v5661, 0.0
  %v5726 = vmax.f32 %v5662, 0.0
  %v5727 = vmax.f32 %v5663, 0.0
  %v5728 = vmax.f32 %v5664, 0.0
  %v5729 = vmax.f32 %v5665, 0.0
  %v5730 = vmax.f32 %v5666, 0.0
  %v5731 = vmax.f32 %v5667, 0.0
  %v5732 = vmax.f32 %v5668, 0.0
  %v5733 = vmax.f32 %v5669, 0.0
  %v5734 = vmax.f32 %v5670, 0.0
  %v5735 = vmax.f32 %v5671, 0.0
  %v5736 = vmax.f32 %v5672, 0.0
  %v5737 = vmax.f32 %v5673, 0.0
  %v5738 = vmax.f32 %v5674, 0.0
  %v5739 = vmax.f32 %v5675, 0.0
  %v5740 = vmax.f32 %v5676, 0.0
  %v5741 = vmax.f32 %v5677, 0.0
  %v5742 = vmax.f32 %v5678, 0.0
  %v5743 = vmax.f32 %v5679, 0.0
  %v5744 = vmax.f32 %v5680, 0.0
  %v5745 = vmax.f32 %v5681, 0.0
  %v5746 = vmax.f32 %v5682, 0.0
  %v5747 = vmax.f32 %v5683, 0.0
  %v5748 = vmax.f32 %v5684, 0.0
  %v5749 = vmax.f32 %v5685, 0.0
  %v5750 = vmax.f32 %v5686, 0.0
  %v5751 = vmin.f32 %v5687, 6.0
  %v5752 = vmin.f32 %v5688, 6.0
  %v5753 = vmin.f32 %v5689, 6.0
  %v5754 = vmin.f32 %v5690, 6.0
  %v5755 = vmin.f32 %v5691, 6.0
  %v5756 = vmin.f32 %v5692, 6.0
  %v5757 = vmin.f32 %v5693, 6.0
  %v5758 = vmin.f32 %v5694, 6.0
  %v5759 = vmin.f32 %v5695, 6.0
  %v5760 = vmin.f32 %v5696, 6.0
  %v5761 = vmin.f32 %v5697, 6.0
  %v5762 = vmin.f32 %v5698, 6.0
  %v5763 = vmin.f32 %v5699, 6.0
  %v5764 = vmin.f32 %v5700, 6.0
  %v5765 = vmin.f32 %v5701, 6.0
  %v5766 = vmin.f32 %v5702, 6.0
  %v5767 = vmin.f32 %v5703, 6.0
  %v5768 = vmin.f32 %v5704, 6.0
  %v5769 = vmin.f32 %v5705, 6.0
  %v5770 = vmin.f32 %v5706, 6.0
  %v5771 = vmin.f32 %v5707, 6.0
  %v5772 = vmin.f32 %v5708, 6.0
  %v5773 = vmin.f32 %v5709, 6.0
  %v5774 = vmin.f32 %v5710, 6.0
  %v5775 = vmin.f32 %v5711, 6.0
  %v5776 = vmin.f32 %v5712, 6.0
  %v5777 = vmin.f32 %v5713, 6.0
  %v5778 = vmin.f32 %v5714, 6.0
  %v5779 = vmin.f32 %v5715, 6.0
  %v5780 = vmin.f32 %v5716, 6.0
  %v5781 = vmin.f32 %v5717, 6.0
  %v5782 = vmin.f32 %v5718, 6.0
  %v5783 = vmin.f32 %v5719, 6.0
  %v5784 = vmin.f32 %v5720, 6.0
  %v5785 = vmin.f32 %v5721, 6.0
  %v5786 = vmin.f32 %v5722, 6.0
  %v5787 = vmin.f32 %v5723, 6.0
  %v5788 = vmin.f32 %v5724, 6.0
  %v5789 = vmin.f32 %v5725, 6.0
  %v5790 = vmin.f32 %v5726, 6.0
  %v5791 = vmin.f32 %v5727, 6.0
  %v5792 = vmin.f32 %v5728, 6.0
  %v5793 = vmin.f32 %v5729, 6.0
  %v5794 = vmin.f32 %v5730, 6.0
  %v5795 = vmin.f32 %v5731, 6.0
  %v5796 = vmin.f32 %v5732, 6.0
  %v5797 = vmin.f32 %v5733, 6.0
  %v5798 = vmin.f32 %v5734, 6.0
  %v5799 = vmin.f32 %v5735, 6.0
  %v5800 = vmin.f32 %v5736, 6.0
  %v5801 = vmin.f32 %v5737, 6.0
  %v5802 = vmin.f32 %v5738, 6.0
  %v5803 = vmin.f32 %v5739, 6.0
  %v5804 = vmin.f32 %v5740, 6.0
  %v5805 = vmin.f32 %v5741, 6.0
  %v5806 = vmin.f32 %v5742, 6.0
  %v5807 = vmin.f32 %v5743, 6.0
  %v5808 = vmin.f32 %v5744, 6.0
  %v5809 = vmin.f32 %v5745, 6.0
  %v5810 = vmin.f32 %v5746, 6.0
  %v5811 = vmin.f32 %v5747, 6.0
  %v5812 = vmin.f32 %v5748, 6.0
  %v5813 = vmin.f32 %v5749, 6.0
  %v5814 = vmin.f32 %v5750, 6.0
  %v5815 = vpack.c.bf16 %v5752, %v5751
  %v5816 = vpack.c.bf16 %v5754, %v5753
  %v5817 = vpack.c.bf16 %v5756, %v5755
  %v5818 = vpack.c.bf16 %v5758, %v5757
  %v5819 = vpack.c.bf16 %v5760, %v5759
  %v5820 = vpack.c.bf16 %v5762, %v5761
  %v5821 = vpack.c.bf16 %v5764, %v5763
  %v5822 = vpack.c.bf16 %v5766, %v5765
  %v5823 = vpack.c.bf16 %v5768, %v5767
  %v5824 = vpack.c.bf16 %v5770, %v5769
  %v5825 = vpack.c.bf16 %v5772, %v5771
  %v5826 = vpack.c.bf16 %v5774, %v5773
  %v5827 = vpack.c.bf16 %v5776, %v5775
  %v5828 = vpack.c.bf16 %v5778, %v5777
  %v5829 = vpack.c.bf16 %v5780, %v5779
  %v5830 = vpack.c.bf16 %v5782, %v5781
  %v5831 = vpack.c.bf16 %v5784, %v5783
  %v5832 = vpack.c.bf16 %v5786, %v5785
  %v5833 = vpack.c.bf16 %v5788, %v5787
  %v5834 = vpack.c.bf16 %v5790, %v5789
  %v5835 = vpack.c.bf16 %v5792, %v5791
  %v5836 = vpack.c.bf16 %v5794, %v5793
  %v5837 = vpack.c.bf16 %v5796, %v5795
  %v5838 = vpack.c.bf16 %v5798, %v5797
  %v5839 = vpack.c.bf16 %v5800, %v5799
  %v5840 = vpack.c.bf16 %v5802, %v5801
  %v5841 = vpack.c.bf16 %v5804, %v5803
  %v5842 = vpack.c.bf16 %v5806, %v5805
  %v5843 = vpack.c.bf16 %v5808, %v5807
  %v5844 = vpack.c.bf16 %v5810, %v5809
  %v5845 = vpack.c.bf16 %v5812, %v5811
  %v5846 = vpack.c.bf16 %v5814, %v5813
  %v5847 = vld [vmem:[%s3] sm:$0xf]
  %v5848 = vld [vmem:[%s3 + $0x4] sm:$0xf]
  %v5849 = vld [vmem:[%s3 + $0x8] sm:$0xf]
  %v5850 = vld [vmem:[%s3 + $0xc] sm:$0xf]
  %v5851 = vld [vmem:[%s3 + $0x10] sm:$0xf]
  %v5852 = vld [vmem:[%s3 + $0x14] sm:$0xf]
  %v5853 = vld [vmem:[%s3 + $0x18] sm:$0xf]
  %v5854 = vld [vmem:[%s3 + $0x1c] sm:$0xf]
  %v5855 = vld [vmem:[%s3 + $0x20] sm:$0xf]
  %v5856 = vld [vmem:[%s3 + $0x24] sm:$0xf]
  %v5857 = vld [vmem:[%s3 + $0x28] sm:$0xf]
  %v5858 = vld [vmem:[%s3 + $0x2c] sm:$0xf]
  %v5859 = vld [vmem:[%s3 + $0x30] sm:$0xf]
  %v5860 = vld [vmem:[%s3 + $0x34] sm:$0xf]
  %v5861 = vld [vmem:[%s3 + $0x38] sm:$0xf]
  %v5862 = vld [vmem:[%s3 + $0x3c] sm:$0xf]
  %v5879 = vunpack.c.l.b16 %v5847
  %v5880 = vunpack.c.l.b16 %v5848
  %v5881 = vunpack.c.l.b16 %v5849
  %v5882 = vunpack.c.l.b16 %v5850
  %v5883 = vunpack.c.l.b16 %v5851
  %v5884 = vunpack.c.l.b16 %v5852
  %v5885 = vunpack.c.l.b16 %v5853
  %v5886 = vunpack.c.l.b16 %v5854
  %v5887 = vunpack.c.l.b16 %v5855
  %v5888 = vunpack.c.l.b16 %v5856
  %v5889 = vunpack.c.l.b16 %v5857
  %v5890 = vunpack.c.l.b16 %v5858
  %v5891 = vunpack.c.l.b16 %v5859
  %v5892 = vunpack.c.l.b16 %v5860
  %v5893 = vunpack.c.l.b16 %v5861
  %v5894 = vunpack.c.l.b16 %v5862
  %v5895 = vpack.c.b16 %v5880, %v5879
  %v5896 = vpack.c.b16 %v5882, %v5881
  %v5897 = vpack.c.b16 %v5884, %v5883
  %v5898 = vpack.c.b16 %v5886, %v5885
  %v5899 = vpack.c.b16 %v5888, %v5887
  %v5900 = vpack.c.b16 %v5890, %v5889
  %v5901 = vpack.c.b16 %v5892, %v5891
  %v5902 = vpack.c.b16 %v5894, %v5893
  %5911 = vmatprep.subr.bf16.mxu0 0
  %5912 = vmatpush1.bf16.msra.mxu0 %v5895
  %5913 = vmatprep.subr.bf16.mxu0 0
  %5914 = vmatpush1.bf16.msra.mxu0 %v5896
  %5915 = vmatprep.subr.bf16.mxu0 0
  %5916 = vmatpush1.bf16.msra.mxu0 %v5897
  %5917 = vmatprep.subr.bf16.mxu0 0
  %5918 = vmatpush1.bf16.msra.mxu0 %v5898
  %5919 = vmatprep.subr.bf16.mxu0 0
  %5920 = vmatpush1.bf16.msra.mxu0 %v5899
  %5921 = vmatprep.subr.bf16.mxu0 0
  %5922 = vmatpush1.bf16.msra.mxu0 %v5900
  %5923 = vmatprep.subr.bf16.mxu0 0
  %5924 = vmatpush1.bf16.msra.mxu0 %v5901
  %5925 = vmatprep.subr.bf16.mxu0 0
  %5926 = vmatpush1.bf16.msra.mxu0 %v5902
  %5927 = vmatprep.subr.bf16.mxu0 0
  %5928 = vmatpush1.bf16.msra.mxu0 0
  %5929 = vmatprep.subr.bf16.mxu0 0
  %5930 = vmatpush1.bf16.msra.mxu0 0
  %5931 = vmatprep.subr.bf16.mxu0 0
  %5932 = vmatpush1.bf16.msra.mxu0 0
  %5933 = vmatprep.subr.bf16.mxu0 0
  %5934 = vmatpush1.bf16.msra.mxu0 0
  %5935 = vmatprep.subr.bf16.mxu0 0
  %5936 = vmatpush1.bf16.msra.mxu0 0
  %5937 = vmatprep.subr.bf16.mxu0 0
  %5938 = vmatpush1.bf16.msra.mxu0 0
  %5939 = vmatprep.subr.bf16.mxu0 0
  %5940 = vmatpush1.bf16.msra.mxu0 0
  %5941 = vmatprep.subr.bf16.mxu0 0
  %5942 = vmatpush1.bf16.msra.mxu0 0
  %5943 = vmatprep.mubr.bf16.mxu0 0
  %5944 = vmatmul.mubr.bf16.gmra.mrb[0].mxu0 %v5815
  %v5945 = vpop.f32.mrb[0].mxu0
  %v5946 = vadd.f32 0.0, %v5945
  %v5947 = vpop.f32.mrb[0].mxu0
  %v5948 = vpop.f32.mrb[0].mxu0
  %v5949 = vadd.f32 0.0, %v5948
  %v5950 = vpop.f32.mrb[0].mxu0
  %5951 = vmatprep.mubr.bf16.mxu0 0
  %5952 = vmatmul.mubr.bf16.gmra.mrb[0].mxu0 %v5816
  %v5953 = vpop.f32.mrb[0].mxu0
  %v5954 = vadd.f32 0.0, %v5953
  %v5955 = vpop.f32.mrb[0].mxu0
  %v5956 = vpop.f32.mrb[0].mxu0
  %v5957 = vadd.f32 0.0, %v5956
  %v5958 = vpop.f32.mrb[0].mxu0
  %5959 = vmatprep.mubr.bf16.mxu0 0
  %5960 = vmatmul.mubr.bf16.gmra.mrb[0].mxu0 %v5817
  %v5961 = vpop.f32.mrb[0].mxu0
  %v5962 = vadd.f32 0.0, %v5961
  %v5963 = vpop.f32.mrb[0].mxu0
  %v5964 = vpop.f32.mrb[0].mxu0
  %v5965 = vadd.f32 0.0, %v5964
  %v5966 = vpop.f32.mrb[0].mxu0
  %5967 = vmatprep.mubr.bf16.mxu0 0
  %5968 = vmatmul.mubr.bf16.gmra.mrb[0].mxu0 %v5818
  %v5969 = vpop.f32.mrb[0].mxu0
  %v5970 = vadd.f32 0.0, %v5969
  %v5971 = vpop.f32.mrb[0].mxu0
  %v5972 = vpop.f32.mrb[0].mxu0
  %v5973 = vadd.f32 0.0, %v5972
  %v5974 = vpop.f32.mrb[0].mxu0
  %5975 = vmatprep.mubr.bf16.mxu0 0
  %5976 = vmatmul.mubr.bf16.gmra.mrb[0].mxu0 %v5819
  %v5977 = vpop.f32.mrb[0].mxu0
  %v5978 = vadd.f32 0.0, %v5977
  %v5979 = vpop.f32.mrb[0].mxu0
  %v5980 = vpop.f32.mrb[0].mxu0
  %v5981 = vadd.f32 0.0, %v5980
  %v5982 = vpop.f32.mrb[0].mxu0
  %5983 = vmatprep.mubr.bf16.mxu0 0
  %5984 = vmatmul.mubr.bf16.gmra.mrb[0].mxu0 %v5820
  %v5985 = vpop.f32.mrb[0].mxu0
  %v5986 = vadd.f32 0.0, %v5985
  %v5987 = vpop.f32.mrb[0].mxu0
  %v5988 = vpop.f32.mrb[0].mxu0
  %v5989 = vadd.f32 0.0, %v5988
  %v5990 = vpop.f32.mrb[0].mxu0
  %5991 = vmatprep.mubr.bf16.mxu0 0
  %5992 = vmatmul.mubr.bf16.gmra.mrb[0].mxu0 %v5821
  %v5993 = vpop.f32.mrb[0].mxu0
  %v5994 = vadd.f32 0.0, %v5993
  %v5995 = vpop.f32.mrb[0].mxu0
  %v5996 = vpop.f32.mrb[0].mxu0
  %v5997 = vadd.f32 0.0, %v5996
  %v5998 = vpop.f32.mrb[0].mxu0
  %5999 = vmatprep.mubr.bf16.mxu0 0
  %6000 = vmatmul.mubr.bf16.gmra.mrb[0].mxu0 %v5822
  %v6001 = vpop.f32.mrb[0].mxu0
  %v6002 = vadd.f32 0.0, %v6001
  %v6003 = vpop.f32.mrb[0].mxu0
  %v6004 = vpop.f32.mrb[0].mxu0
  %v6005 = vadd.f32 0.0, %v6004
  %v6006 = vpop.f32.mrb[0].mxu0
  %6007 = vmatprep.mubr.bf16.mxu0 0
  %6008 = vmatmul.mubr.bf16.gmra.mrb[0].mxu0 %v5823
  %v6009 = vpop.f32.mrb[0].mxu0
  %v6010 = vadd.f32 0.0, %v6009
  %v6011 = vpop.f32.mrb[0].mxu0
  %v6012 = vpop.f32.mrb[0].mxu0
  %v6013 = vadd.f32 0.0, %v6012
  %v6014 = vpop.f32.mrb[0].mxu0
  %6015 = vmatprep.mubr.bf16.mxu0 0
  %6016 = vmatmul.mubr.bf16.gmra.mrb[0].mxu0 %v5824
  %v6017 = vpop.f32.mrb[0].mxu0
  %v6018 = vadd.f32 0.0, %v6017
  %v6019 = vpop.f32.mrb[0].mxu0
  %v6020 = vpop.f32.mrb[0].mxu0
  %v6021 = vadd.f32 0.0, %v6020
  %v6022 = vpop.f32.mrb[0].mxu0
  %6023 = vmatprep.mubr.bf16.mxu0 0
  %6024 = vmatmul.mubr.bf16.gmra.mrb[0].mxu0 %v5825
  %v6025 = vpop.f32.mrb[0].mxu0
  %v6026 = vadd.f32 0.0, %v6025
  %v6027 = vpop.f32.mrb[0].mxu0
  %v6028 = vpop.f32.mrb[0].mxu0
  %v6029 = vadd.f32 0.0, %v6028
  %v6030 = vpop.f32.mrb[0].mxu0
  %6031 = vmatprep.mubr.bf16.mxu0 0
  %6032 = vmatmul.mubr.bf16.gmra.mrb[0].mxu0 %v5826
  %v6033 = vpop.f32.mrb[0].mxu0
  %v6034 = vadd.f32 0.0, %v6033
  %v6035 = vpop.f32.mrb[0].mxu0
  %v6036 = vpop.f32.mrb[0].mxu0
  %v6037 = vadd.f32 0.0, %v6036
  %v6038 = vpop.f32.mrb[0].mxu0
  %6039 = vmatprep.mubr.bf16.mxu0 0
  %6040 = vmatmul.mubr.bf16.gmra.mrb[0].mxu0 %v5827
  %v6041 = vpop.f32.mrb[0].mxu0
  %v6042 = vadd.f32 0.0, %v6041
  %v6043 = vpop.f32.mrb[0].mxu0
  %v6044 = vpop.f32.mrb[0].mxu0
  %v6045 = vadd.f32 0.0, %v6044
  %v6046 = vpop.f32.mrb[0].mxu0
  %6047 = vmatprep.mubr.bf16.mxu0 0
  %6048 = vmatmul.mubr.bf16.gmra.mrb[0].mxu0 %v5828
  %v6049 = vpop.f32.mrb[0].mxu0
  %v6050 = vadd.f32 0.0, %v6049
  %v6051 = vpop.f32.mrb[0].mxu0
  %v6052 = vpop.f32.mrb[0].mxu0
  %v6053 = vadd.f32 0.0, %v6052
  %v6054 = vpop.f32.mrb[0].mxu0
  %6055 = vmatprep.mubr.bf16.mxu0 0
  %6056 = vmatmul.mubr.bf16.gmra.mrb[0].mxu0 %v5829
  %v6057 = vpop.f32.mrb[0].mxu0
  %v6058 = vadd.f32 0.0, %v6057
  %v6059 = vpop.f32.mrb[0].mxu0
  %v6060 = vpop.f32.mrb[0].mxu0
  %v6061 = vadd.f32 0.0, %v6060
  %v6062 = vpop.f32.mrb[0].mxu0
  %6063 = vmatprep.mubr.bf16.mxu0 0
  %6064 = vmatmul.mubr.bf16.gmra.mrb[0].mxu0 %v5830
  %v6065 = vpop.f32.mrb[0].mxu0
  %v6066 = vadd.f32 0.0, %v6065
  %v6067 = vpop.f32.mrb[0].mxu0
  %v6068 = vpop.f32.mrb[0].mxu0
  %v6069 = vadd.f32 0.0, %v6068
  %v6070 = vpop.f32.mrb[0].mxu0
  %6071 = vmatprep.mubr.bf16.mxu0 0
  %6072 = vmatmul.mubr.bf16.gmra.mrb[0].mxu0 %v5831
  %v6073 = vpop.f32.mrb[0].mxu0
  %v6074 = vadd.f32 0.0, %v6073
  %v6075 = vpop.f32.mrb[0].mxu0
  %v6076 = vpop.f32.mrb[0].mxu0
  %v6077 = vadd.f32 0.0, %v6076
  %v6078 = vpop.f32.mrb[0].mxu0
  %6079 = vmatprep.mubr.bf16.mxu0 0
  %6080 = vmatmul.mubr.bf16.gmra.mrb[0].mxu0 %v5832
  %v6081 = vpop.f32.mrb[0].mxu0
  %v6082 = vadd.f32 0.0, %v6081
  %v6083 = vpop.f32.mrb[0].mxu0
  %v6084 = vpop.f32.mrb[0].mxu0
  %v6085 = vadd.f32 0.0, %v6084
  %v6086 = vpop.f32.mrb[0].mxu0
  %6087 = vmatprep.mubr.bf16.mxu0 0
  %6088 = vmatmul.mubr.bf16.gmra.mrb[0].mxu0 %v5833
  %v6089 = vpop.f32.mrb[0].mxu0
  %v6090 = vadd.f32 0.0, %v6089
  %v6091 = vpop.f32.mrb[0].mxu0
  %v6092 = vpop.f32.mrb[0].mxu0
  %v6093 = vadd.f32 0.0, %v6092
  %v6094 = vpop.f32.mrb[0].mxu0
  %6095 = vmatprep.mubr.bf16.mxu0 0
  %6096 = vmatmul.mubr.bf16.gmra.mrb[0].mxu0 %v5834
  %v6097 = vpop.f32.mrb[0].mxu0
  %v6098 = vadd.f32 0.0, %v6097
  %v6099 = vpop.f32.mrb[0].mxu0
  %v6100 = vpop.f32.mrb[0].mxu0
  %v6101 = vadd.f32 0.0, %v6100
  %v6102 = vpop.f32.mrb[0].mxu0
  %6103 = vmatprep.mubr.bf16.mxu0 0
  %6104 = vmatmul.mubr.bf16.gmra.mrb[0].mxu0 %v5835
  %v6105 = vpop.f32.mrb[0].mxu0
  %v6106 = vadd.f32 0.0, %v6105
  %v6107 = vpop.f32.mrb[0].mxu0
  %v6108 = vpop.f32.mrb[0].mxu0
  %v6109 = vadd.f32 0.0, %v6108
  %v6110 = vpop.f32.mrb[0].mxu0
  %6111 = vmatprep.mubr.bf16.mxu0 0
  %6112 = vmatmul.mubr.bf16.gmra.mrb[0].mxu0 %v5836
  %v6113 = vpop.f32.mrb[0].mxu0
  %v6114 = vadd.f32 0.0, %v6113
  %v6115 = vpop.f32.mrb[0].mxu0
  %v6116 = vpop.f32.mrb[0].mxu0
  %v6117 = vadd.f32 0.0, %v6116
  %v6118 = vpop.f32.mrb[0].mxu0
  %6119 = vmatprep.mubr.bf16.mxu0 0
  %6120 = vmatmul.mubr.bf16.gmra.mrb[0].mxu0 %v5837
  %v6121 = vpop.f32.mrb[0].mxu0
  %v6122 = vadd.f32 0.0, %v6121
  %v6123 = vpop.f32.mrb[0].mxu0
  %v6124 = vpop.f32.mrb[0].mxu0
  %v6125 = vadd.f32 0.0, %v6124
  %v6126 = vpop.f32.mrb[0].mxu0
  %6127 = vmatprep.mubr.bf16.mxu0 0
  %6128 = vmatmul.mubr.bf16.gmra.mrb[0].mxu0 %v5838
  %v6129 = vpop.f32.mrb[0].mxu0
  %v6130 = vadd.f32 0.0, %v6129
  %v6131 = vpop.f32.mrb[0].mxu0
  %v6132 = vpop.f32.mrb[0].mxu0
  %v6133 = vadd.f32 0.0, %v6132
  %v6134 = vpop.f32.mrb[0].mxu0
  %6135 = vmatprep.mubr.bf16.mxu0 0
  %6136 = vmatmul.mubr.bf16.gmra.mrb[0].mxu0 %v5839
  %v6137 = vpop.f32.mrb[0].mxu0
  %v6138 = vadd.f32 0.0, %v6137
  %v6139 = vpop.f32.mrb[0].mxu0
  %v6140 = vpop.f32.mrb[0].mxu0
  %v6141 = vadd.f32 0.0, %v6140
  %v6142 = vpop.f32.mrb[0].mxu0
  %6143 = vmatprep.mubr.bf16.mxu0 0
  %6144 = vmatmul.mubr.bf16.gmra.mrb[0].mxu0 %v5840
  %v6145 = vpop.f32.mrb[0].mxu0
  %v6146 = vadd.f32 0.0, %v6145
  %v6147 = vpop.f32.mrb[0].mxu0
  %v6148 = vpop.f32.mrb[0].mxu0
  %v6149 = vadd.f32 0.0, %v6148
  %v6150 = vpop.f32.mrb[0].mxu0
  %6151 = vmatprep.mubr.bf16.mxu0 0
  %6152 = vmatmul.mubr.bf16.gmra.mrb[0].mxu0 %v5841
  %v6153 = vpop.f32.mrb[0].mxu0
  %v6154 = vadd.f32 0.0, %v6153
  %v6155 = vpop.f32.mrb[0].mxu0
  %v6156 = vpop.f32.mrb[0].mxu0
  %v6157 = vadd.f32 0.0, %v6156
  %v6158 = vpop.f32.mrb[0].mxu0
  %6159 = vmatprep.mubr.bf16.mxu0 0
  %6160 = vmatmul.mubr.bf16.gmra.mrb[0].mxu0 %v5842
  %v6161 = vpop.f32.mrb[0].mxu0
  %v6162 = vadd.f32 0.0, %v6161
  %v6163 = vpop.f32.mrb[0].mxu0
  %v6164 = vpop.f32.mrb[0].mxu0
  %v6165 = vadd.f32 0.0, %v6164
  %v6166 = vpop.f32.mrb[0].mxu0
  %6167 = vmatprep.mubr.bf16.mxu0 0
  %6168 = vmatmul.mubr.bf16.gmra.mrb[0].mxu0 %v5843
  %v6169 = vpop.f32.mrb[0].mxu0
  %v6170 = vadd.f32 0.0, %v6169
  %v6171 = vpop.f32.mrb[0].mxu0
  %v6172 = vpop.f32.mrb[0].mxu0
  %v6173 = vadd.f32 0.0, %v6172
  %v6174 = vpop.f32.mrb[0].mxu0
  %6175 = vmatprep.mubr.bf16.mxu0 0
  %6176 = vmatmul.mubr.bf16.gmra.mrb[0].mxu0 %v5844
  %v6177 = vpop.f32.mrb[0].mxu0
  %v6178 = vadd.f32 0.0, %v6177
  %v6179 = vpop.f32.mrb[0].mxu0
  %v6180 = vpop.f32.mrb[0].mxu0
  %v6181 = vadd.f32 0.0, %v6180
  %v6182 = vpop.f32.mrb[0].mxu0
  %6183 = vmatprep.mubr.bf16.mxu0 0
  %6184 = vmatmul.mubr.bf16.gmra.mrb[0].mxu0 %v5845
  %v6185 = vpop.f32.mrb[0].mxu0
  %v6186 = vadd.f32 0.0, %v6185
  %v6187 = vpop.f32.mrb[0].mxu0
  %v6188 = vpop.f32.mrb[0].mxu0
  %v6189 = vadd.f32 0.0, %v6188
  %v6190 = vpop.f32.mrb[0].mxu0
  %6191 = vmatprep.mubr.bf16.mxu0 0
  %6192 = vmatmul.mubr.bf16.gmra.mrb[0].mxu0 %v5846
  %v6193 = vpop.f32.mrb[0].mxu0
  %v6194 = vadd.f32 0.0, %v6193
  %v6195 = vpop.f32.mrb[0].mxu0
  %v6196 = vpop.f32.mrb[0].mxu0
  %v6197 = vadd.f32 0.0, %v6196
  %v6198 = vpop.f32.mrb[0].mxu0
  %6199 = vdwg.mxu0
  %v6200 = vadd.f32 %v5946, %v5949
  %v6201 = vadd.f32 %v6200, %v5954
  %v6202 = vadd.f32 %v6201, %v5957
  %v6203 = vadd.f32 %v6202, %v5962
  %v6204 = vadd.f32 %v6203, %v5965
  %v6205 = vadd.f32 %v6204, %v5970
  %v6206 = vadd.f32 %v6205, %v5973
  %v6207 = vadd.f32 %v6206, %v5978
  %v6208 = vadd.f32 %v6207, %v5981
  %v6209 = vadd.f32 %v6208, %v5986
  %v6210 = vadd.f32 %v6209, %v5989
  %v6211 = vadd.f32 %v6210, %v5994
  %v6212 = vadd.f32 %v6211, %v5997
  %v6213 = vadd.f32 %v6212, %v6002
  %v6214 = vadd.f32 %v6213, %v6005
  %v6215 = vadd.f32 %v6214, %v6010
  %v6216 = vadd.f32 %v6215, %v6013
  %v6217 = vadd.f32 %v6216, %v6018
  %v6218 = vadd.f32 %v6217, %v6021
  %v6219 = vadd.f32 %v6218, %v6026
  %v6220 = vadd.f32 %v6219, %v6029
  %v6221 = vadd.f32 %v6220, %v6034
  %v6222 = vadd.f32 %v6221, %v6037
  %v6223 = vadd.f32 %v6222, %v6042
  %v6224 = vadd.f32 %v6223, %v6045
  %v6225 = vadd.f32 %v6224, %v6050
  %v6226 = vadd.f32 %v6225, %v6053
  %v6227 = vadd.f32 %v6226, %v6058
  %v6228 = vadd.f32 %v6227, %v6061
  %v6229 = vadd.f32 %v6228, %v6066
  %v6230 = vadd.f32 %v6229, %v6069
  %v6231 = vadd.f32 %v6230, %v6074
  %v6232 = vadd.f32 %v6231, %v6077
  %v6233 = vadd.f32 %v6232, %v6082
  %v6234 = vadd.f32 %v6233, %v6085
  %v6235 = vadd.f32 %v6234, %v6090
  %v6236 = vadd.f32 %v6235, %v6093
  %v6237 = vadd.f32 %v6236, %v6098
  %v6238 = vadd.f32 %v6237, %v6101
  %v6239 = vadd.f32 %v6238, %v6106
  %v6240 = vadd.f32 %v6239, %v6109
  %v6241 = vadd.f32 %v6240, %v6114
  %v6242 = vadd.f32 %v6241, %v6117
  %v6243 = vadd.f32 %v6242, %v6122
  %v6244 = vadd.f32 %v6243, %v6125
  %v6245 = vadd.f32 %v6244, %v6130
  %v6246 = vadd.f32 %v6245, %v6133
  %v6247 = vadd.f32 %v6246, %v6138
  %v6248 = vadd.f32 %v6247, %v6141
  %v6249 = vadd.f32 %v6248, %v6146
  %v6250 = vadd.f32 %v6249, %v6149
  %v6251 = vadd.f32 %v6250, %v6154
  %v6252 = vadd.f32 %v6251, %v6157
  %v6253 = vadd.f32 %v6252, %v6162
  %v6254 = vadd.f32 %v6253, %v6165
  %v6255 = vadd.f32 %v6254, %v6170
  %v6256 = vadd.f32 %v6255, %v6173
  %v6257 = vadd.f32 %v6256, %v6178
  %v6258 = vadd.f32 %v6257, %v6181
  %v6259 = vadd.f32 %v6258, %v6186
  %v6260 = vadd.f32 %v6259, %v6189
  %v6261 = vadd.f32 %v6260, %v6194
  %v6262 = vadd.f32 %v6261, %v6197
  %v6263 = vrot.slane %v6262, 4
  %v6264 = vadd.f32 %v6262, %v6263
  %v6265 = vrot.slane %v6264, 2
  %v6266 = vadd.f32 %v6264, %v6265
  %v6267 = vrot.slane %v6266, 1
  %v6268 = vadd.f32 %v6266, %v6267
  %v6269 = vmul.f32 %v6268, 0.001953125
  %v6270 = vmul.f32 %v5946, %v5946
  %v6271 = vmul.f32 %v5949, %v5949
  %v6272 = vmul.f32 %v5954, %v5954
  %v6273 = vmul.f32 %v5957, %v5957
  %v6274 = vmul.f32 %v5962, %v5962
  %v6275 = vmul.f32 %v5965, %v5965
  %v6276 = vmul.f32 %v5970, %v5970
  %v6277 = vmul.f32 %v5973, %v5973
  %v6278 = vmul.f32 %v5978, %v5978
  %v6279 = vmul.f32 %v5981, %v5981
  %v6280 = vmul.f32 %v5986, %v5986
  %v6281 = vmul.f32 %v5989, %v5989
  %v6282 = vmul.f32 %v5994, %v5994
  %v6283 = vmul.f32 %v5997, %v5997
  %v6284 = vmul.f32 %v6002, %v6002
  %v6285 = vmul.f32 %v6005, %v6005
  %v6286 = vmul.f32 %v6010, %v6010
  %v6287 = vmul.f32 %v6013, %v6013
  %v6288 = vmul.f32 %v6018, %v6018
  %v6289 = vmul.f32 %v6021, %v6021
  %v6290 = vmul.f32 %v6026, %v6026
  %v6291 = vmul.f32 %v6029, %v6029
  %v6292 = vmul.f32 %v6034, %v6034
  %v6293 = vmul.f32 %v6037, %v6037
  %v6294 = vmul.f32 %v6042, %v6042
  %v6295 = vmul.f32 %v6045, %v6045
  %v6296 = vmul.f32 %v6050, %v6050
  %v6297 = vmul.f32 %v6053, %v6053
  %v6298 = vmul.f32 %v6058, %v6058
  %v6299 = vmul.f32 %v6061, %v6061
  %v6300 = vmul.f32 %v6066, %v6066
  %v6301 = vmul.f32 %v6069, %v6069
  %v6302 = vmul.f32 %v6074, %v6074
  %v6303 = vmul.f32 %v6077, %v6077
  %v6304 = vmul.f32 %v6082, %v6082
  %v6305 = vmul.f32 %v6085, %v6085
  %v6306 = vmul.f32 %v6090, %v6090
  %v6307 = vmul.f32 %v6093, %v6093
  %v6308 = vmul.f32 %v6098, %v6098
  %v6309 = vmul.f32 %v6101, %v6101
  %v6310 = vmul.f32 %v6106, %v6106
  %v6311 = vmul.f32 %v6109, %v6109
  %v6312 = vmul.f32 %v6114, %v6114
  %v6313 = vmul.f32 %v6117, %v6117
  %v6314 = vmul.f32 %v6122, %v6122
  %v6315 = vmul.f32 %v6125, %v6125
  %v6316 = vmul.f32 %v6130, %v6130
  %v6317 = vmul.f32 %v6133, %v6133
  %v6318 = vmul.f32 %v6138, %v6138
  %v6319 = vmul.f32 %v6141, %v6141
  %v6320 = vmul.f32 %v6146, %v6146
  %v6321 = vmul.f32 %v6149, %v6149
  %v6322 = vmul.f32 %v6154, %v6154
  %v6323 = vmul.f32 %v6157, %v6157
  %v6324 = vmul.f32 %v6162, %v6162
  %v6325 = vmul.f32 %v6165, %v6165
  %v6326 = vmul.f32 %v6170, %v6170
  %v6327 = vmul.f32 %v6173, %v6173
  %v6328 = vmul.f32 %v6178, %v6178
  %v6329 = vmul.f32 %v6181, %v6181
  %v6330 = vmul.f32 %v6186, %v6186
  %v6331 = vmul.f32 %v6189, %v6189
  %v6332 = vmul.f32 %v6194, %v6194
  %v6333 = vmul.f32 %v6197, %v6197
  %v6334 = vadd.f32 %v6270, %v6271
  %v6335 = vadd.f32 %v6334, %v6272
  %v6336 = vadd.f32 %v6335, %v6273
  %v6337 = vadd.f32 %v6336, %v6274
  %v6338 = vadd.f32 %v6337, %v6275
  %v6339 = vadd.f32 %v6338, %v6276
  %v6340 = vadd.f32 %v6339, %v6277
  %v6341 = vadd.f32 %v6340, %v6278
  %v6342 = vadd.f32 %v6341, %v6279
  %v6343 = vadd.f32 %v6342, %v6280
  %v6344 = vadd.f32 %v6343, %v6281
  %v6345 = vadd.f32 %v6344, %v6282
  %v6346 = vadd.f32 %v6345, %v6283
  %v6347 = vadd.f32 %v6346, %v6284
  %v6348 = vadd.f32 %v6347, %v6285
  %v6349 = vadd.f32 %v6348, %v6286
  %v6350 = vadd.f32 %v6349, %v6287
  %v6351 = vadd.f32 %v6350, %v6288
  %v6352 = vadd.f32 %v6351, %v6289
  %v6353 = vadd.f32 %v6352, %v6290
  %v6354 = vadd.f32 %v6353, %v6291
  %v6355 = vadd.f32 %v6354, %v6292
  %v6356 = vadd.f32 %v6355, %v6293
  %v6357 = vadd.f32 %v6356, %v6294
  %v6358 = vadd.f32 %v6357, %v6295
  %v6359 = vadd.f32 %v6358, %v6296
  %v6360 = vadd.f32 %v6359, %v6297
  %v6361 = vadd.f32 %v6360, %v6298
  %v6362 = vadd.f32 %v6361, %v6299
  %v6363 = vadd.f32 %v6362, %v6300
  %v6364 = vadd.f32 %v6363, %v6301
  %v6365 = vadd.f32 %v6364, %v6302
  %v6366 = vadd.f32 %v6365, %v6303
  %v6367 = vadd.f32 %v6366, %v6304
  %v6368 = vadd.f32 %v6367, %v6305
  %v6369 = vadd.f32 %v6368, %v6306
  %v6370 = vadd.f32 %v6369, %v6307
  %v6371 = vadd.f32 %v6370, %v6308
  %v6372 = vadd.f32 %v6371, %v6309
  %v6373 = vadd.f32 %v6372, %v6310
  %v6374 = vadd.f32 %v6373, %v6311
  %v6375 = vadd.f32 %v6374, %v6312
  %v6376 = vadd.f32 %v6375, %v6313
  %v6377 = vadd.f32 %v6376, %v6314
  %v6378 = vadd.f32 %v6377, %v6315
  %v6379 = vadd.f32 %v6378, %v6316
  %v6380 = vadd.f32 %v6379, %v6317
  %v6381 = vadd.f32 %v6380, %v6318
  %v6382 = vadd.f32 %v6381, %v6319
  %v6383 = vadd.f32 %v6382, %v6320
  %v6384 = vadd.f32 %v6383, %v6321
  %v6385 = vadd.f32 %v6384, %v6322
  %v6386 = vadd.f32 %v6385, %v6323
  %v6387 = vadd.f32 %v6386, %v6324
  %v6388 = vadd.f32 %v6387, %v6325
  %v6389 = vadd.f32 %v6388, %v6326
  %v6390 = vadd.f32 %v6389, %v6327
  %v6391 = vadd.f32 %v6390, %v6328
  %v6392 = vadd.f32 %v6391, %v6329
  %v6393 = vadd.f32 %v6392, %v6330
  %v6394 = vadd.f32 %v6393, %v6331
  %v6395 = vadd.f32 %v6394, %v6332
  %v6396 = vadd.f32 %v6395, %v6333
  %v6397 = vrot.slane %v6396, 4
  %v6398 = vadd.f32 %v6396, %v6397
  %v6399 = vrot.slane %v6398, 2
  %v6400 = vadd.f32 %v6398, %v6399
  %v6401 = vrot.slane %v6400, 1
  %v6402 = vadd.f32 %v6400, %v6401
  %v6403 = vmul.f32 %v6402, 0.001953125
  %v6404 = vmul.f32 %v6269, %v6269
  %v6405 = vsub.f32 %v6403, %v6404
  %v6406 = vmax.f32 %v6405, 0.0
  %v6407 = vsub.f32 %v5946, %v6269
  %v6408 = vsub.f32 %v5949, %v6269
  %v6409 = vsub.f32 %v5954, %v6269
  %v6410 = vsub.f32 %v5957, %v6269
  %v6411 = vsub.f32 %v5962, %v6269
  %v6412 = vsub.f32 %v5965, %v6269
  %v6413 = vsub.f32 %v5970, %v6269
  %v6414 = vsub.f32 %v5973, %v6269
  %v6415 = vsub.f32 %v5978, %v6269
  %v6416 = vsub.f32 %v5981, %v6269
  %v6417 = vsub.f32 %v5986, %v6269
  %v6418 = vsub.f32 %v5989, %v6269
  %v6419 = vsub.f32 %v5994, %v6269
  %v6420 = vsub.f32 %v5997, %v6269
  %v6421 = vsub.f32 %v6002, %v6269
  %v6422 = vsub.f32 %v6005, %v6269
  %v6423 = vsub.f32 %v6010, %v6269
  %v6424 = vsub.f32 %v6013, %v6269
  %v6425 = vsub.f32 %v6018, %v6269
  %v6426 = vsub.f32 %v6021, %v6269
  %v6427 = vsub.f32 %v6026, %v6269
  %v6428 = vsub.f32 %v6029, %v6269
  %v6429 = vsub.f32 %v6034, %v6269
  %v6430 = vsub.f32 %v6037, %v6269
  %v6431 = vsub.f32 %v6042, %v6269
  %v6432 = vsub.f32 %v6045, %v6269
  %v6433 = vsub.f32 %v6050, %v6269
  %v6434 = vsub.f32 %v6053, %v6269
  %v6435 = vsub.f32 %v6058, %v6269
  %v6436 = vsub.f32 %v6061, %v6269
  %v6437 = vsub.f32 %v6066, %v6269
  %v6438 = vsub.f32 %v6069, %v6269
  %v6439 = vsub.f32 %v6074, %v6269
  %v6440 = vsub.f32 %v6077, %v6269
  %v6441 = vsub.f32 %v6082, %v6269
  %v6442 = vsub.f32 %v6085, %v6269
  %v6443 = vsub.f32 %v6090, %v6269
  %v6444 = vsub.f32 %v6093, %v6269
  %v6445 = vsub.f32 %v6098, %v6269
  %v6446 = vsub.f32 %v6101, %v6269
  %v6447 = vsub.f32 %v6106, %v6269
  %v6448 = vsub.f32 %v6109, %v6269
  %v6449 = vsub.f32 %v6114, %v6269
  %v6450 = vsub.f32 %v6117, %v6269
  %v6451 = vsub.f32 %v6122, %v6269
  %v6452 = vsub.f32 %v6125, %v6269
  %v6453 = vsub.f32 %v6130, %v6269
  %v6454 = vsub.f32 %v6133, %v6269
  %v6455 = vsub.f32 %v6138, %v6269
  %v6456 = vsub.f32 %v6141, %v6269
  %v6457 = vsub.f32 %v6146, %v6269
  %v6458 = vsub.f32 %v6149, %v6269
  %v6459 = vsub.f32 %v6154, %v6269
  %v6460 = vsub.f32 %v6157, %v6269
  %v6461 = vsub.f32 %v6162, %v6269
  %v6462 = vsub.f32 %v6165, %v6269
  %v6463 = vsub.f32 %v6170, %v6269
  %v6464 = vsub.f32 %v6173, %v6269
  %v6465 = vsub.f32 %v6178, %v6269
  %v6466 = vsub.f32 %v6181, %v6269
  %v6467 = vsub.f32 %v6186, %v6269
  %v6468 = vsub.f32 %v6189, %v6269
  %v6469 = vsub.f32 %v6194, %v6269
  %v6470 = vsub.f32 %v6197, %v6269
  %v6471 = vadd.f32 %v6406, 1e-05
  %v6472 = vrsqrt.pop %v6471
  %v6473 = vmul.f32 %v6407, %v6472
  %v6474 = vmul.f32 %v6408, %v6472
  %v6475 = vmul.f32 %v6409, %v6472
  %v6476 = vmul.f32 %v6410, %v6472
  %v6477 = vmul.f32 %v6411, %v6472
  %v6478 = vmul.f32 %v6412, %v6472
  %v6479 = vmul.f32 %v6413, %v6472
  %v6480 = vmul.f32 %v6414, %v6472
  %v6481 = vmul.f32 %v6415, %v6472
  %v6482 = vmul.f32 %v6416, %v6472
  %v6483 = vmul.f32 %v6417, %v6472
  %v6484 = vmul.f32 %v6418, %v6472
  %v6485 = vmul.f32 %v6419, %v6472
  %v6486 = vmul.f32 %v6420, %v6472
  %v6487 = vmul.f32 %v6421, %v6472
  %v6488 = vmul.f32 %v6422, %v6472
  %v6489 = vmul.f32 %v6423, %v6472
  %v6490 = vmul.f32 %v6424, %v6472
  %v6491 = vmul.f32 %v6425, %v6472
  %v6492 = vmul.f32 %v6426, %v6472
  %v6493 = vmul.f32 %v6427, %v6472
  %v6494 = vmul.f32 %v6428, %v6472
  %v6495 = vmul.f32 %v6429, %v6472
  %v6496 = vmul.f32 %v6430, %v6472
  %v6497 = vmul.f32 %v6431, %v6472
  %v6498 = vmul.f32 %v6432, %v6472
  %v6499 = vmul.f32 %v6433, %v6472
  %v6500 = vmul.f32 %v6434, %v6472
  %v6501 = vmul.f32 %v6435, %v6472
  %v6502 = vmul.f32 %v6436, %v6472
  %v6503 = vmul.f32 %v6437, %v6472
  %v6504 = vmul.f32 %v6438, %v6472
  %v6505 = vmul.f32 %v6439, %v6472
  %v6506 = vmul.f32 %v6440, %v6472
  %v6507 = vmul.f32 %v6441, %v6472
  %v6508 = vmul.f32 %v6442, %v6472
  %v6509 = vmul.f32 %v6443, %v6472
  %v6510 = vmul.f32 %v6444, %v6472
  %v6511 = vmul.f32 %v6445, %v6472
  %v6512 = vmul.f32 %v6446, %v6472
  %v6513 = vmul.f32 %v6447, %v6472
  %v6514 = vmul.f32 %v6448, %v6472
  %v6515 = vmul.f32 %v6449, %v6472
  %v6516 = vmul.f32 %v6450, %v6472
  %v6517 = vmul.f32 %v6451, %v6472
  %v6518 = vmul.f32 %v6452, %v6472
  %v6519 = vmul.f32 %v6453, %v6472
  %v6520 = vmul.f32 %v6454, %v6472
  %v6521 = vmul.f32 %v6455, %v6472
  %v6522 = vmul.f32 %v6456, %v6472
  %v6523 = vmul.f32 %v6457, %v6472
  %v6524 = vmul.f32 %v6458, %v6472
  %v6525 = vmul.f32 %v6459, %v6472
  %v6526 = vmul.f32 %v6460, %v6472
  %v6527 = vmul.f32 %v6461, %v6472
  %v6528 = vmul.f32 %v6462, %v6472
  %v6529 = vmul.f32 %v6463, %v6472
  %v6530 = vmul.f32 %v6464, %v6472
  %v6531 = vmul.f32 %v6465, %v6472
  %v6532 = vmul.f32 %v6466, %v6472
  %v6533 = vmul.f32 %v6467, %v6472
  %v6534 = vmul.f32 %v6468, %v6472
  %v6535 = vmul.f32 %v6469, %v6472
  %v6536 = vmul.f32 %v6470, %v6472
  %v6537 = vadd.f32 %v6473, %v18
  %v6538 = vadd.f32 %v6474, %v19
  %v6539 = vadd.f32 %v6475, %v20
  %v6540 = vadd.f32 %v6476, %v21
  %v6541 = vadd.f32 %v6477, %v22
  %v6542 = vadd.f32 %v6478, %v23
  %v6543 = vadd.f32 %v6479, %v24
  %v6544 = vadd.f32 %v6480, %v25
  %v6545 = vadd.f32 %v6481, %v26
  %v6546 = vadd.f32 %v6482, %v27
  %v6547 = vadd.f32 %v6483, %v28
  %v6548 = vadd.f32 %v6484, %v29
  %v6549 = vadd.f32 %v6485, %v30
  %v6550 = vadd.f32 %v6486, %v31
  %v6551 = vadd.f32 %v6487, %v32
  %v6552 = vadd.f32 %v6488, %v33
  %v6553 = vadd.f32 %v6489, %v34
  %v6554 = vadd.f32 %v6490, %v35
  %v6555 = vadd.f32 %v6491, %v36
  %v6556 = vadd.f32 %v6492, %v37
  %v6557 = vadd.f32 %v6493, %v38
  %v6558 = vadd.f32 %v6494, %v39
  %v6559 = vadd.f32 %v6495, %v40
  %v6560 = vadd.f32 %v6496, %v41
  %v6561 = vadd.f32 %v6497, %v42
  %v6562 = vadd.f32 %v6498, %v43
  %v6563 = vadd.f32 %v6499, %v44
  %v6564 = vadd.f32 %v6500, %v45
  %v6565 = vadd.f32 %v6501, %v46
  %v6566 = vadd.f32 %v6502, %v47
  %v6567 = vadd.f32 %v6503, %v48
  %v6568 = vadd.f32 %v6504, %v49
  %v6569 = vadd.f32 %v6505, %v50
  %v6570 = vadd.f32 %v6506, %v51
  %v6571 = vadd.f32 %v6507, %v52
  %v6572 = vadd.f32 %v6508, %v53
  %v6573 = vadd.f32 %v6509, %v54
  %v6574 = vadd.f32 %v6510, %v55
  %v6575 = vadd.f32 %v6511, %v56
  %v6576 = vadd.f32 %v6512, %v57
  %v6577 = vadd.f32 %v6513, %v58
  %v6578 = vadd.f32 %v6514, %v59
  %v6579 = vadd.f32 %v6515, %v60
  %v6580 = vadd.f32 %v6516, %v61
  %v6581 = vadd.f32 %v6517, %v62
  %v6582 = vadd.f32 %v6518, %v63
  %v6583 = vadd.f32 %v6519, %v64
  %v6584 = vadd.f32 %v6520, %v65
  %v6585 = vadd.f32 %v6521, %v66
  %v6586 = vadd.f32 %v6522, %v67
  %v6587 = vadd.f32 %v6523, %v68
  %v6588 = vadd.f32 %v6524, %v69
  %v6589 = vadd.f32 %v6525, %v70
  %v6590 = vadd.f32 %v6526, %v71
  %v6591 = vadd.f32 %v6527, %v72
  %v6592 = vadd.f32 %v6528, %v73
  %v6593 = vadd.f32 %v6529, %v74
  %v6594 = vadd.f32 %v6530, %v75
  %v6595 = vadd.f32 %v6531, %v76
  %v6596 = vadd.f32 %v6532, %v77
  %v6597 = vadd.f32 %v6533, %v78
  %v6598 = vadd.f32 %v6534, %v79
  %v6599 = vadd.f32 %v6535, %v80
  %v6600 = vadd.f32 %v6536, %v81
  %6601 = vst [vmem:[%s4] sm:$0xff] %v6537
  %6602 = vst [vmem:[%s4 + $0x8] sm:$0xff] %v6538
  %6603 = vst [vmem:[%s4 + $0x10] sm:$0xff] %v6539
  %6604 = vst [vmem:[%s4 + $0x18] sm:$0xff] %v6540
  %6605 = vst [vmem:[%s4 + $0x20] sm:$0xff] %v6541
  %6606 = vst [vmem:[%s4 + $0x28] sm:$0xff] %v6542
  %6607 = vst [vmem:[%s4 + $0x30] sm:$0xff] %v6543
  %6608 = vst [vmem:[%s4 + $0x38] sm:$0xff] %v6544
  %6609 = vst [vmem:[%s4 + $0x40] sm:$0xff] %v6545
  %6610 = vst [vmem:[%s4 + $0x48] sm:$0xff] %v6546
  %6611 = vst [vmem:[%s4 + $0x50] sm:$0xff] %v6547
  %6612 = vst [vmem:[%s4 + $0x58] sm:$0xff] %v6548
  %6613 = vst [vmem:[%s4 + $0x60] sm:$0xff] %v6549
  %6614 = vst [vmem:[%s4 + $0x68] sm:$0xff] %v6550
  %6615 = vst [vmem:[%s4 + $0x70] sm:$0xff] %v6551
  %6616 = vst [vmem:[%s4 + $0x78] sm:$0xff] %v6552
  %6617 = vst [vmem:[%s4 + $0x80] sm:$0xff] %v6553
  %6618 = vst [vmem:[%s4 + $0x88] sm:$0xff] %v6554
  %6619 = vst [vmem:[%s4 + $0x90] sm:$0xff] %v6555
  %6620 = vst [vmem:[%s4 + $0x98] sm:$0xff] %v6556
  %6621 = vst [vmem:[%s4 + $0xa0] sm:$0xff] %v6557
  %6622 = vst [vmem:[%s4 + $0xa8] sm:$0xff] %v6558
  %6623 = vst [vmem:[%s4 + $0xb0] sm:$0xff] %v6559
  %6624 = vst [vmem:[%s4 + $0xb8] sm:$0xff] %v6560
  %6625 = vst [vmem:[%s4 + $0xc0] sm:$0xff] %v6561
  %6626 = vst [vmem:[%s4 + $0xc8] sm:$0xff] %v6562
  %6627 = vst [vmem:[%s4 + $0xd0] sm:$0xff] %v6563
  %6628 = vst [vmem:[%s4 + $0xd8] sm:$0xff] %v6564
  %6629 = vst [vmem:[%s4 + $0xe0] sm:$0xff] %v6565
  %6630 = vst [vmem:[%s4 + $0xe8] sm:$0xff] %v6566
  %6631 = vst [vmem:[%s4 + $0xf0] sm:$0xff] %v6567
  %6632 = vst [vmem:[%s4 + $0xf8] sm:$0xff] %v6568
  %6633 = vst [vmem:[%s4 + $0x100] sm:$0xff] %v6569
  %6634 = vst [vmem:[%s4 + $0x108] sm:$0xff] %v6570
  %6635 = vst [vmem:[%s4 + $0x110] sm:$0xff] %v6571
  %6636 = vst [vmem:[%s4 + $0x118] sm:$0xff] %v6572
  %6637 = vst [vmem:[%s4 + $0x120] sm:$0xff] %v6573
  %6638 = vst [vmem:[%s4 + $0x128] sm:$0xff] %v6574
  %6639 = vst [vmem:[%s4 + $0x130] sm:$0xff] %v6575
  %6640 = vst [vmem:[%s4 + $0x138] sm:$0xff] %v6576
  %6641 = vst [vmem:[%s4 + $0x140] sm:$0xff] %v6577
  %6642 = vst [vmem:[%s4 + $0x148] sm:$0xff] %v6578
  %6643 = vst [vmem:[%s4 + $0x150] sm:$0xff] %v6579
  %6644 = vst [vmem:[%s4 + $0x158] sm:$0xff] %v6580
  %6645 = vst [vmem:[%s4 + $0x160] sm:$0xff] %v6581
  %6646 = vst [vmem:[%s4 + $0x168] sm:$0xff] %v6582
  %6647 = vst [vmem:[%s4 + $0x170] sm:$0xff] %v6583
  %6648 = vst [vmem:[%s4 + $0x178] sm:$0xff] %v6584
  %6649 = vst [vmem:[%s4 + $0x180] sm:$0xff] %v6585
  %6650 = vst [vmem:[%s4 + $0x188] sm:$0xff] %v6586
  %6651 = vst [vmem:[%s4 + $0x190] sm:$0xff] %v6587
  %6652 = vst [vmem:[%s4 + $0x198] sm:$0xff] %v6588
  %6653 = vst [vmem:[%s4 + $0x1a0] sm:$0xff] %v6589
  %6654 = vst [vmem:[%s4 + $0x1a8] sm:$0xff] %v6590
  %6655 = vst [vmem:[%s4 + $0x1b0] sm:$0xff] %v6591
  %6656 = vst [vmem:[%s4 + $0x1b8] sm:$0xff] %v6592
  %6657 = vst [vmem:[%s4 + $0x1c0] sm:$0xff] %v6593
  %6658 = vst [vmem:[%s4 + $0x1c8] sm:$0xff] %v6594
  %6659 = vst [vmem:[%s4 + $0x1d0] sm:$0xff] %v6595
  %6660 = vst [vmem:[%s4 + $0x1d8] sm:$0xff] %v6596
  %6661 = vst [vmem:[%s4 + $0x1e0] sm:$0xff] %v6597
  %6662 = vst [vmem:[%s4 + $0x1e8] sm:$0xff] %v6598
  %6663 = vst [vmem:[%s4 + $0x1f0] sm:$0xff] %v6599
  %6664 = vst [vmem:[%s4 + $0x1f8] sm:$0xff] %v6600
  // Predicated region
  $region18: #{inverted_residual_uni.3} parent=0 // pred_check
    _
  $region19: #{inverted_residual_uni.3} parent=0 // pred_check_branch
    %6666 = sbr.rel (0) target = $region21
  $region20: #{inverted_residual_uni.3} parent=0 // pred_region
    _
  $region21: #{inverted_residual_uni.3} parent=0 // pred_fallthru
    _
  // Predicated region
  $region22: #{inverted_residual_uni.3} parent=0 // pred_check
    _
  $region23: #{inverted_residual_uni.3} parent=0 // pred_check_branch
    %6668 = sbr.rel (0) target = $region25
  $region24: #{inverted_residual_uni.3} parent=0 // pred_region
    _
  $region25: #{inverted_residual_uni.3} parent=0 // pred_fallthru
    _

</llo_original>
